<compile_context>
chip_gen: v6e
topology: v6e:2x2x1
jax: 0.10.0
libtpu: 0.0.40
codegen_flags: <defaults>
</compile_context>

<pallas_src>
import jax
import jax.numpy as jnp
from jax.experimental import pallas as pl
from jax.experimental.pallas import tpu as pltpu

SEQ = 1000            # CNNYSJ.padding_len (conv "H" axis)
EMB = 25
EMB_USED = 24         # conv1's kw=0 multiplies the W zero-pad column
DUO_TAPS = 6          # E[2r-2 .. 2r+3] packed along lanes for one pair-row
LANE = 128
RUSE = SEQ // 2       # 500 used pair-rows per sample
RPAD = 512            # pair-rows padded (power of two, bf16 sublane multiple)
POOL = 100
PPOOL = POOL // 2     # 50 pair-rows per pooling window
NPOOL = SEQ // POOL   # 10
TMAX = 8              # samples per grid step (output tile = (8,128) f32)
NCLASS = 10
EPS = 1e-5


# ----------------------------------------------------------------------------
# Pallas kernel: one grid step == T (<= 8, even) samples
# ----------------------------------------------------------------------------
def cnn_ysj_kernel(emb_ref, w1_ref, t1_ref, w2_ref, t2_ref,
                   wfc1_ref, bfc1_ref, wfc2_ref, bfc2_ref,
                   out_ref, pool_ref):
    T = emb_ref.shape[0]                       # samples in this grid step

    # --- invariants hoisted out of the per-pair loop --------------------------
    w1 = w1_ref[...]                           # (256,128) bf16, BN1 folded in
    w2 = w2_ref[...]                           # (128,128) bf16, BN2 folded in
    t1 = t1_ref[...]                           # (1,128) f32 fused bias+BN shift
    t2 = t2_ref[...]                           # (1,128) f32

    # conv2 H zero-padding fixup: pair-row 0 lane-group 0 holds "c1[-1]" and
    # pair-row RUSE-1 lane-group 3 holds "c1[SEQ]"; both must be zero.  Two
    # samples are stacked along rows, so the pattern repeats with period RPAD.
    rows = 2 * RPAD
    ridx = jnp.bitwise_and(
        jax.lax.broadcasted_iota(jnp.int32, (rows, LANE), 0), RPAD - 1)
    lidx = jax.lax.broadcasted_iota(jnp.int32, (rows, LANE), 1)
    kill = ((ridx == 0) & (lidx < 32)) | ((ridx == RUSE - 1) & (lidx >= 96))
    keep = jnp.where(kill, 0.0, 1.0).astype(jnp.bfloat16)

    if T < TMAX:                               # keep unused pooled rows finite
        pool_ref[...] = jnp.zeros_like(pool_ref)

    @pl.loop(0, T // 2)
    def _(i):
        t0 = 2 * i
        # Two samples stacked along M -> one (1024,256)x(256,128) conv1 matmul.
        x = jnp.concatenate([emb_ref[t0], emb_ref[t0 + 1]], axis=0)
        y = jnp.dot(x, w1, preferred_element_type=jnp.float32)
        # conv1 bias + BN1 (scale already in w1) + ReLU, bf16 cast, 2-row fixup.
        yb = jnp.maximum(y + t1, 0.0).astype(jnp.bfloat16) * keep
        # conv2 + bias + BN2 + ReLU: lanes 0:64 -> c2[2r], lanes 64:128 -> c2[2r+1].
        z = jnp.dot(yb, w2, preferred_element_type=jnp.float32)
        z = jnp.maximum(z + t2, 0.0)

        # MaxPool2d((100,1)) + ReLU (identity, z >= 0): 50 pair-rows per window,
        # then merge the even/odd lane halves.  Channel-major Flatten is folded
        # into the fc1 weight packing (pooled lane index = w*64 + c).
        # TODO(synk): pooling windows (50 pair-rows) are not 8-row aligned; an
        # aligned relayout would need duplicate rows (+12% conv work), skipped.
        for s in range(2):
            base = s * RPAD
            for w in range(NPOOL):
                blk = z[base + PPOOL * w: base + PPOOL * (w + 1), :]
                m = jnp.max(blk, axis=0, keepdims=True)          # (1,128)
                piece = jnp.maximum(m[:, 0:64], m[:, 64:128])    # (1,64)
                pool_ref[pl.ds(t0 + s, 1), pl.ds(w * 64, 64)] = piece

    # Batched fc1 + (eval-mode) dropout + fc2 across the whole tile, and one
    # dense, unmasked (8,128) store of the logits.
    feats = pool_ref[...].astype(jnp.bfloat16)                   # (8, 640)
    h1 = jnp.dot(feats, wfc1_ref[...],
                 preferred_element_type=jnp.float32) + bfc1_ref[...]
    logits = jnp.dot(h1.astype(jnp.bfloat16), wfc2_ref[...],
                     preferred_element_type=jnp.float32) + bfc2_ref[...]
    out_ref[...] = logits


# ----------------------------------------------------------------------------
# Parameter init (deterministic, shapes from the nn.Module __init__)
# ----------------------------------------------------------------------------
def init_params(key, nclass):
    ks = jax.random.split(key, 20)
    p = {}
    p['emb'] = jax.random.normal(ks[0], (256, EMB), jnp.float32)
    p['conv1_w'] = jax.random.normal(ks[1], (32, 1, 3, EMB), jnp.float32) * 0.1
    p['conv1_b'] = jax.random.normal(ks[2], (32,), jnp.float32) * 0.1
    p['bn1_g'] = 1.0 + 0.1 * jax.random.normal(ks[3], (32,), jnp.float32)
    p['bn1_b'] = 0.1 * jax.random.normal(ks[4], (32,), jnp.float32)
    p['bn1_m'] = 0.1 * jax.random.normal(ks[5], (32,), jnp.float32)
    p['bn1_v'] = 0.5 + jnp.abs(jax.random.normal(ks[6], (32,), jnp.float32))
    p['conv2_w'] = jax.random.normal(ks[7], (64, 32, 3, 1), jnp.float32) * 0.05
    p['conv2_b'] = jax.random.normal(ks[8], (64,), jnp.float32) * 0.1
    p['bn2_g'] = 1.0 + 0.1 * jax.random.normal(ks[9], (64,), jnp.float32)
    p['bn2_b'] = 0.1 * jax.random.normal(ks[10], (64,), jnp.float32)
    p['bn2_m'] = 0.1 * jax.random.normal(ks[11], (64,), jnp.float32)
    p['bn2_v'] = 0.5 + jnp.abs(jax.random.normal(ks[12], (64,), jnp.float32))
    p['fc1_w'] = jax.random.normal(ks[13], (128, 640), jnp.float32) * 0.04
    p['fc1_b'] = jax.random.normal(ks[14], (128,), jnp.float32) * 0.05
    p['fc2_w'] = jax.random.normal(ks[15], (nclass, 128), jnp.float32) * 0.08
    p['fc2_b'] = jax.random.normal(ks[16], (nclass,), jnp.float32) * 0.05
    return p


# ----------------------------------------------------------------------------
# Glue: pad/truncate bytes (CNNYSJ._pad_fixed), embedding lookup, duo packing
# ----------------------------------------------------------------------------
def preprocess(x_bytes, emb_table, batch_pad):
    B, L = x_bytes.shape
    if L >= SEQ:
        xb = x_bytes[:, :SEQ]
    else:
        xb = jnp.pad(x_bytes, ((0, 0), (0, SEQ - L)))            # pad with byte 0
    e = jnp.maximum(jnp.take(emb_table, xb, axis=0), 0.0)[:, :, :EMB_USED]
    ep = jnp.pad(e, ((0, 0), (2, 3), (0, 0)))                    # ep[:, h+2] = E[h]
    # Pair-row r holds taps E[2r-2+j] at lanes j*24..(j+1)*24 for j = 0..5.
    # TODO(synk): on v5e this 3x tap replication keeps the kernel near the HBM
    # roofline; synthesizing taps in-kernel with pltpu.roll would cut input
    # bytes ~3x but is not implemented here.
    taps = [ep[:, j:j + 2 * RUSE:2, :] for j in range(DUO_TAPS)]  # (B,500,24) each
    x6 = jnp.concatenate(taps, axis=-1)                           # (B,500,144)
    x6 = jnp.pad(x6, ((0, batch_pad - B), (0, RPAD - RUSE),
                      (0, 2 * LANE - DUO_TAPS * EMB_USED)))
    return x6.astype(jnp.bfloat16)


def pack_params(p, nclass):
    f32, bf16 = jnp.float32, jnp.bfloat16

    # conv1 (+bias, BN1 scale folded into the weight): kw=0 of the (3,25)
    # kernel multiplies the W zero-pad column, so only emb dims 0..23 matter.
    # Output lane group g=0..3 of pair-row r is BN1(conv1) at seq row 2r-1+g.
    w1e = p['conv1_w'][:, 0, :, 1:1 + EMB_USED]                  # (32,3,24)=[c,kh,d]
    s1v = p['bn1_g'] / jnp.sqrt(p['bn1_v'] + EPS)
    sh1 = p['conv1_b'] * s1v + (p['bn1_b'] - p['bn1_m'] * s1v)
    w1e = w1e * s1v[:, None, None]
    w1 = jnp.zeros((2 * LANE, LANE), f32)
    t1 = jnp.zeros((1, LANE), f32)
    for g in range(4):
        for kh in range(3):
            j = g + kh                                           # packed tap index
            w1 = w1.at[j * EMB_USED:(j + 1) * EMB_USED,
                       g * 32:(g + 1) * 32].set(w1e[:, kh, :].T)
        t1 = t1.at[0, g * 32:(g + 1) * 32].set(sh1)

    # conv2 (+bias, BN2 scale folded): taps are the 4 conv1 lane groups;
    # output lanes 0:64 -> seq row 2r, lanes 64:128 -> seq row 2r+1.
    w2e = p['conv2_w'][:, :, :, 0]                               # (64,32,3)=[d,c,kh]
    s2v = p['bn2_g'] / jnp.sqrt(p['bn2_v'] + EPS)
    sh2 = p['conv2_b'] * s2v + (p['bn2_b'] - p['bn2_m'] * s2v)
    w2e = w2e * s2v[:, None, None]
    w2 = jnp.zeros((LANE, LANE), f32)
    for g in range(3):
        w2 = w2.at[g * 32:(g + 1) * 32, 0:64].set(w2e[:, :, g].T)
    for g in range(1, 4):
        w2 = w2.at[g * 32:(g + 1) * 32, 64:128].set(w2e[:, :, g - 1].T)
    t2 = jnp.zeros((1, LANE), f32)
    t2 = t2.at[0, 0:64].set(sh2).at[0, 64:128].set(sh2)

    # fc1: PyTorch flatten index j = c*10 + w; pooled feature lane = w*64 + c.
    wfc1 = jnp.transpose(p['fc1_w'].reshape(LANE, 64, NPOOL),
                         (2, 1, 0)).reshape(NPOOL * 64, LANE)
    bfc1 = p['fc1_b'].reshape(1, LANE)
    wfc2 = jnp.zeros((LANE, LANE), f32).at[:, :nclass].set(p['fc2_w'].T)
    bfc2 = jnp.zeros((1, LANE), f32).at[0, :nclass].set(p['fc2_b'])

    return (w1.astype(bf16), t1, w2.astype(bf16), t2,
            wfc1.astype(bf16), bfc1, wfc2.astype(bf16), bfc2)


def cnn_ysj_forward(x_bytes, params, nclass):
    B = x_bytes.shape[0]
    # Samples per grid step: amortize per-step pipeline overhead, keep >= 2
    # grid steps whenever the batch allows (v7x megacore), and keep T even so
    # the in-kernel loop always processes sample pairs.
    T = TMAX
    while T > 2 and B < 2 * T:
        T //= 2
    G = pl.cdiv(B, T)
    Bp = G * T

    emb_in = preprocess(x_bytes, params['emb'], Bp)
    packed = pack_params(params, nclass)

    vec_spec = pl.BlockSpec((1, LANE), lambda b: (0, 0))
    grid_spec = pltpu.PrefetchScalarGridSpec(
        num_scalar_prefetch=0,
        grid=(G,),
        in_specs=[
            pl.BlockSpec((T, RPAD, 2 * LANE), lambda b: (b, 0, 0)),  # packed emb
            pl.BlockSpec((2 * LANE, LANE), lambda b: (0, 0)),        # w1
            vec_spec,                                                # t1
            pl.BlockSpec((LANE, LANE), lambda b: (0, 0)),            # w2
            vec_spec,                                                # t2
            pl.BlockSpec((NPOOL * 64, LANE), lambda b: (0, 0)),      # wfc1
            vec_spec,                                                # bfc1
            pl.BlockSpec((LANE, LANE), lambda b: (0, 0)),            # wfc2
            vec_spec,                                                # bfc2
        ],
        out_specs=pl.BlockSpec((TMAX, LANE), lambda b: (b, 0)),
        scratch_shapes=[pltpu.VMEM((TMAX, NPOOL * 64), jnp.float32)],
    )
    out = pl.pallas_call(
        cnn_ysj_kernel,
        out_shape=jax.ShapeDtypeStruct((G * TMAX, LANE), jnp.float32),
        grid_spec=grid_spec,
        compiler_params=pltpu.CompilerParams(
            dimension_semantics=("parallel",)),
    )(emb_in, *packed)

    logits = out.reshape(G, TMAX, LANE)[:, :T, :].reshape(G * T, LANE)
    return logits[:B, :nclass]


# ----------------------------------------------------------------------------
# Pure-JAX f32 reference (PyTorch eval-mode semantics) for validation
# ----------------------------------------------------------------------------
def reference_forward(x_bytes, p, nclass):
    hi = jax.lax.Precision.HIGHEST
    B, L = x_bytes.shape
    xb = x_bytes[:, :SEQ] if L >= SEQ else jnp.pad(x_bytes, ((0, 0), (0, SEQ - L)))
    e = jnp.maximum(jnp.take(p['emb'], xb, axis=0), 0.0)           # (B,1000,25)
    w1e = p['conv1_w'][:, 0, :, 1:25]                              # (32,3,24)
    ep = jnp.pad(e[:, :, 0:24], ((0, 0), (1, 1), (0, 0)))
    st = jnp.stack([ep[:, 0:SEQ], ep[:, 1:SEQ + 1], ep[:, 2:SEQ + 2]], axis=2)
    c1 = jnp.einsum('bhkd,ckd->bhc', st, w1e, precision=hi) + p['conv1_b']
    s1 = p['bn1_g'] / jnp.sqrt(p['bn1_v'] + EPS)
    c1 = jnp.maximum((c1 - p['bn1_m']) * s1 + p['bn1_b'], 0.0)
    w2e = p['conv2_w'][:, :, :, 0]                                 # (64,32,3)
    cp = jnp.pad(c1, ((0, 0), (1, 1), (0, 0)))
    st2 = jnp.stack([cp[:, 0:SEQ], cp[:, 1:SEQ + 1], cp[:, 2:SEQ + 2]], axis=2)
    c2 = jnp.einsum('bhkc,dck->bhd', st2, w2e, precision=hi) + p['conv2_b']
    s2 = p['bn2_g'] / jnp.sqrt(p['bn2_v'] + EPS)
    c2 = jnp.maximum((c2 - p['bn2_m']) * s2 + p['bn2_b'], 0.0)
    pooled = jnp.maximum(jnp.max(c2.reshape(B, NPOOL, POOL, 64), axis=2), 0.0)
    feat = jnp.transpose(pooled, (0, 2, 1)).reshape(B, 640)        # c-major flatten
    h1 = jnp.dot(feat, p['fc1_w'].T, precision=hi) + p['fc1_b']
    return jnp.dot(h1, p['fc2_w'].T, precision=hi) + p['fc2_b']


if __name__ == "__main__":
    key = jax.random.PRNGKey(0)
    kx, kp = jax.random.split(key)
    B, L = 2, 300   # batch of 2 byte sequences, each of length 300 (padded to 1000)
    x_bytes = jax.random.randint(kx, (B, L), 0, 256, dtype=jnp.int32)
    params = init_params(kp, NCLASS)

    out = cnn_ysj_forward(x_bytes, params, NCLASS)
    out = jax.block_until_ready(out)
    assert out.shape == (B, NCLASS), out.shape

    ref = reference_forward(x_bytes, params, NCLASS)
    # bf16 matmul inputs with f32 accumulation: allow ~5% of the logit scale.
    tol = 5e-2 * float(jnp.maximum(1.0, jnp.max(jnp.abs(ref))))
    err = float(jnp.max(jnp.abs(out - ref)))
    if err > tol:
        raise AssertionError(
            f"Pallas kernel mismatch vs reference: max |diff| = {err} (tol {tol})")
    print("KERNEL_OK")
</pallas_src>

<mosaic_0001>
module attributes {stable_mosaic.version = 11 : i64} {
  func.func @cnn_ysj_kernel(%arg0: i32, %arg1: memref<2x512x256xbf16, #tpu.memory_space<vmem>>, %arg2: memref<256x128xbf16, #tpu.memory_space<vmem>>, %arg3: memref<1x128xf32, #tpu.memory_space<vmem>>, %arg4: memref<128x128xbf16, #tpu.memory_space<vmem>>, %arg5: memref<1x128xf32, #tpu.memory_space<vmem>>, %arg6: memref<640x128xbf16, #tpu.memory_space<vmem>>, %arg7: memref<1x128xf32, #tpu.memory_space<vmem>>, %arg8: memref<128x128xbf16, #tpu.memory_space<vmem>>, %arg9: memref<1x128xf32, #tpu.memory_space<vmem>>, %arg10: memref<8x128xf32, #tpu.memory_space<vmem>>, %arg11: memref<8x640xf32, #tpu.memory_space<vmem>>) attributes {dimension_semantics = [#tpu.dimension_semantics<parallel>], iteration_bounds = array<i64: 1>, scalar_prefetch = 0 : i64, scratch_operands = 1 : i64, tpu.core_type = #tpu.core_type<tc>, window_params = [{transform_indices = @transform_0, window_bounds = array<i64: 2, 512, 256>}, {pipeline_mode = #tpu.pipeline_mode<synchronous>, transform_indices = @transform_1, window_bounds = array<i64: 256, 128>}, {pipeline_mode = #tpu.pipeline_mode<synchronous>, transform_indices = @transform_2, window_bounds = array<i64: 1, 128>}, {pipeline_mode = #tpu.pipeline_mode<synchronous>, transform_indices = @transform_3, window_bounds = array<i64: 128, 128>}, {pipeline_mode = #tpu.pipeline_mode<synchronous>, transform_indices = @transform_4, window_bounds = array<i64: 1, 128>}, {pipeline_mode = #tpu.pipeline_mode<synchronous>, transform_indices = @transform_5, window_bounds = array<i64: 640, 128>}, {pipeline_mode = #tpu.pipeline_mode<synchronous>, transform_indices = @transform_6, window_bounds = array<i64: 1, 128>}, {pipeline_mode = #tpu.pipeline_mode<synchronous>, transform_indices = @transform_7, window_bounds = array<i64: 128, 128>}, {pipeline_mode = #tpu.pipeline_mode<synchronous>, transform_indices = @transform_8, window_bounds = array<i64: 1, 128>}, {transform_indices = @transform_9, window_bounds = array<i64: 8, 128>}]} {
    %c0 = arith.constant 0 : index
    %c0_0 = arith.constant 0 : index
    %0 = vector.load %arg2[%c0, %c0_0] : memref<256x128xbf16, #tpu.memory_space<vmem>>, vector<256x128xbf16>
    %c0_1 = arith.constant 0 : index
    %c0_2 = arith.constant 0 : index
    %1 = vector.load %arg4[%c0_1, %c0_2] : memref<128x128xbf16, #tpu.memory_space<vmem>>, vector<128x128xbf16>
    %c0_3 = arith.constant 0 : index
    %c0_4 = arith.constant 0 : index
    %2 = vector.load %arg3[%c0_3, %c0_4] : memref<1x128xf32, #tpu.memory_space<vmem>>, vector<1x128xf32>
    %c0_5 = arith.constant 0 : index
    %c0_6 = arith.constant 0 : index
    %3 = vector.load %arg5[%c0_5, %c0_6] : memref<1x128xf32, #tpu.memory_space<vmem>>, vector<1x128xf32>
    %4 = tpu.iota {dimensions = array<i32: 0>} : vector<1024x128xi32>
    %c511_i32 = arith.constant 511 : i32
    %5 = vector.broadcast %c511_i32 : i32 to vector<1024x128xi32>
    %6 = arith.andi %4, %5 : vector<1024x128xi32>
    %7 = tpu.iota {dimensions = array<i32: 1>} : vector<1024x128xi32>
    %c0_i32 = arith.constant 0 : i32
    %8 = vector.broadcast %c0_i32 : i32 to vector<1024x128xi32>
    %9 = arith.cmpi eq, %6, %8 : vector<1024x128xi32>
    %c32_i32 = arith.constant 32 : i32
    %10 = vector.broadcast %c32_i32 : i32 to vector<1024x128xi32>
    %11 = arith.cmpi slt, %7, %10 : vector<1024x128xi32>
    %12 = arith.andi %9, %11 : vector<1024x128xi1>
    %c499_i32 = arith.constant 499 : i32
    %13 = vector.broadcast %c499_i32 : i32 to vector<1024x128xi32>
    %14 = arith.cmpi eq, %6, %13 : vector<1024x128xi32>
    %c96_i32 = arith.constant 96 : i32
    %15 = vector.broadcast %c96_i32 : i32 to vector<1024x128xi32>
    %16 = arith.cmpi sge, %7, %15 : vector<1024x128xi32>
    %17 = arith.andi %14, %16 : vector<1024x128xi1>
    %18 = arith.ori %12, %17 : vector<1024x128xi1>
    %cst = arith.constant 0.000000e+00 : f32
    %cst_7 = arith.constant 1.000000e+00 : f32
    %19 = vector.broadcast %cst : f32 to vector<1024x128xf32>
    %20 = vector.broadcast %cst_7 : f32 to vector<1024x128xf32>
    %21 = arith.select %18, %19, %20 : vector<1024x128xi1>, vector<1024x128xf32>
    %22 = arith.truncf %21 : vector<1024x128xf32> to vector<1024x128xbf16>
    %cst_8 = arith.constant 0.000000e+00 : f32
    %23 = vector.broadcast %cst_8 : f32 to vector<8x640xf32>
    %c0_9 = arith.constant 0 : index
    %c0_10 = arith.constant 0 : index
    %24 = vector.load %arg11[%c0_9, %c0_10] : memref<8x640xf32, #tpu.memory_space<vmem>>, vector<8x640xf32>
    tpu.vector_store %arg11[%c0_9, %c0_10], %23 {strides = array<i32>} : memref<8x640xf32, #tpu.memory_space<vmem>>, vector<8x640xf32>,
    %c0_i32_11 = arith.constant 0 : i32
    %c1_i32 = arith.constant 1 : i32
    %25 = arith.muli %c0_i32_11, %c1_i32 : i32
    %c0_i32_12 = arith.constant 0 : i32
    %26 = arith.addi %c0_i32_12, %25 : i32
    %c2_i32 = arith.constant 2 : i32
    %27 = arith.muli %c2_i32, %26 : i32
    %28 = arith.index_cast %27 : i32 to index
    %c0_13 = arith.constant 0 : index
    %c0_14 = arith.constant 0 : index
    %29 = vector.load %arg1[%28, %c0_13, %c0_14] : memref<2x512x256xbf16, #tpu.memory_space<vmem>>, vector<1x512x256xbf16>
    %30 = vector.shape_cast %29 : vector<1x512x256xbf16> to vector<512x256xbf16>
    %c1_i32_15 = arith.constant 1 : i32
    %31 = arith.addi %27, %c1_i32_15 : i32
    %32 = arith.index_cast %31 : i32 to index
    %c0_16 = arith.constant 0 : index
    %c0_17 = arith.constant 0 : index
    %33 = vector.load %arg1[%32, %c0_16, %c0_17] : memref<2x512x256xbf16, #tpu.memory_space<vmem>>, vector<1x512x256xbf16>
    %34 = vector.shape_cast %33 : vector<1x512x256xbf16> to vector<512x256xbf16>
    %35 = tpu.concatenate %30, %34 in 0 : vector<512x256xbf16>, vector<512x256xbf16> -> vector<1024x256xbf16>
    %cst_18 = arith.constant dense<0.000000e+00> : vector<1024x128xf32>
    %36 = tpu.matmul %35, %0, %cst_18 {dimension_numbers = #tpu.dot_dimension_numbers<[1], [0], [0], [1], [0, 0, 1, 1], [], []>} : vector<1024x256xbf16>, vector<256x128xbf16>, vector<1024x128xf32> -> vector<1024x128xf32>
    %37 = vector.broadcast %2 : vector<1x128xf32> to vector<1024x128xf32>
    %38 = arith.addf %36, %37 : vector<1024x128xf32>
    %cst_19 = arith.constant 0.000000e+00 : f32
    %39 = vector.broadcast %cst_19 : f32 to vector<1024x128xf32>
    %40 = arith.maximumf %38, %39 : vector<1024x128xf32>
    %41 = arith.truncf %40 : vector<1024x128xf32> to vector<1024x128xbf16>
    %42 = arith.mulf %41, %22 : vector<1024x128xbf16>
    %cst_20 = arith.constant dense<0.000000e+00> : vector<1024x128xf32>
    %43 = tpu.matmul %42, %1, %cst_20 {dimension_numbers = #tpu.dot_dimension_numbers<[1], [0], [0], [1], [0, 0, 1, 1], [], []>} : vector<1024x128xbf16>, vector<128x128xbf16>, vector<1024x128xf32> -> vector<1024x128xf32>
    %44 = vector.broadcast %3 : vector<1x128xf32> to vector<1024x128xf32>
    %45 = arith.addf %43, %44 : vector<1024x128xf32>
    %cst_21 = arith.constant 0.000000e+00 : f32
    %46 = vector.broadcast %cst_21 : f32 to vector<1024x128xf32>
    %47 = arith.maximumf %45, %46 : vector<1024x128xf32>
    %48 = vector.extract_strided_slice %47 {offsets = [0, 0], sizes = [50, 128], strides = [1, 1]} : vector<1024x128xf32> to vector<50x128xf32>
    %cst_22 = arith.constant dense<0xFF800000> : vector<128xf32>
    %49 = vector.multi_reduction <maximumf>, %48, %cst_22 [0] : vector<50x128xf32> to vector<128xf32>
    %50 = vector.shape_cast %49 : vector<128xf32> to vector<1x128xf32>
    %51 = vector.extract_strided_slice %50 {offsets = [0, 0], sizes = [1, 64], strides = [1, 1]} : vector<1x128xf32> to vector<1x64xf32>
    %52 = vector.extract_strided_slice %50 {offsets = [0, 64], sizes = [1, 64], strides = [1, 1]} : vector<1x128xf32> to vector<1x64xf32>
    %53 = arith.maximumf %51, %52 : vector<1x64xf32>
    %c0_i32_23 = arith.constant 0 : i32
    %54 = arith.addi %27, %c0_i32_23 : i32
    %55 = arith.index_cast %54 : i32 to index
    %c0_24 = arith.constant 0 : index
    %56 = vector.load %arg11[%55, %c0_24] : memref<8x640xf32, #tpu.memory_space<vmem>>, vector<1x64xf32>
    tpu.vector_store %arg11[%55, %c0_24], %53 {strides = array<i32>} : memref<8x640xf32, #tpu.memory_space<vmem>>, vector<1x64xf32>,
    %57 = vector.extract_strided_slice %47 {offsets = [50, 0], sizes = [50, 128], strides = [1, 1]} : vector<1024x128xf32> to vector<50x128xf32>
    %cst_25 = arith.constant dense<0xFF800000> : vector<128xf32>
    %58 = vector.multi_reduction <maximumf>, %57, %cst_25 [0] : vector<50x128xf32> to vector<128xf32>
    %59 = vector.shape_cast %58 : vector<128xf32> to vector<1x128xf32>
    %60 = vector.extract_strided_slice %59 {offsets = [0, 0], sizes = [1, 64], strides = [1, 1]} : vector<1x128xf32> to vector<1x64xf32>
    %61 = vector.extract_strided_slice %59 {offsets = [0, 64], sizes = [1, 64], strides = [1, 1]} : vector<1x128xf32> to vector<1x64xf32>
    %62 = arith.maximumf %60, %61 : vector<1x64xf32>
    %c0_i32_26 = arith.constant 0 : i32
    %63 = arith.addi %27, %c0_i32_26 : i32
    %64 = arith.index_cast %63 : i32 to index
    %c64 = arith.constant 64 : index
    %65 = vector.load %arg11[%64, %c64] : memref<8x640xf32, #tpu.memory_space<vmem>>, vector<1x64xf32>
    tpu.vector_store %arg11[%64, %c64], %62 {strides = array<i32>} : memref<8x640xf32, #tpu.memory_space<vmem>>, vector<1x64xf32>,
    %66 = vector.extract_strided_slice %47 {offsets = [100, 0], sizes = [50, 128], strides = [1, 1]} : vector<1024x128xf32> to vector<50x128xf32>
    %cst_27 = arith.constant dense<0xFF800000> : vector<128xf32>
    %67 = vector.multi_reduction <maximumf>, %66, %cst_27 [0] : vector<50x128xf32> to vector<128xf32>
    %68 = vector.shape_cast %67 : vector<128xf32> to vector<1x128xf32>
    %69 = vector.extract_strided_slice %68 {offsets = [0, 0], sizes = [1, 64], strides = [1, 1]} : vector<1x128xf32> to vector<1x64xf32>
    %70 = vector.extract_strided_slice %68 {offsets = [0, 64], sizes = [1, 64], strides = [1, 1]} : vector<1x128xf32> to vector<1x64xf32>
    %71 = arith.maximumf %69, %70 : vector<1x64xf32>
    %c0_i32_28 = arith.constant 0 : i32
    %72 = arith.addi %27, %c0_i32_28 : i32
    %73 = arith.index_cast %72 : i32 to index
    %c128 = arith.constant 128 : index
    %74 = vector.load %arg11[%73, %c128] : memref<8x640xf32, #tpu.memory_space<vmem>>, vector<1x64xf32>
    tpu.vector_store %arg11[%73, %c128], %71 {strides = array<i32>} : memref<8x640xf32, #tpu.memory_space<vmem>>, vector<1x64xf32>,
    %75 = vector.extract_strided_slice %47 {offsets = [150, 0], sizes = [50, 128], strides = [1, 1]} : vector<1024x128xf32> to vector<50x128xf32>
    %cst_29 = arith.constant dense<0xFF800000> : vector<128xf32>
    %76 = vector.multi_reduction <maximumf>, %75, %cst_29 [0] : vector<50x128xf32> to vector<128xf32>
    %77 = vector.shape_cast %76 : vector<128xf32> to vector<1x128xf32>
    %78 = vector.extract_strided_slice %77 {offsets = [0, 0], sizes = [1, 64], strides = [1, 1]} : vector<1x128xf32> to vector<1x64xf32>
    %79 = vector.extract_strided_slice %77 {offsets = [0, 64], sizes = [1, 64], strides = [1, 1]} : vector<1x128xf32> to vector<1x64xf32>
    %80 = arith.maximumf %78, %79 : vector<1x64xf32>
    %c0_i32_30 = arith.constant 0 : i32
    %81 = arith.addi %27, %c0_i32_30 : i32
    %82 = arith.index_cast %81 : i32 to index
    %c192 = arith.constant 192 : index
    %83 = vector.load %arg11[%82, %c192] : memref<8x640xf32, #tpu.memory_space<vmem>>, vector<1x64xf32>
    tpu.vector_store %arg11[%82, %c192], %80 {strides = array<i32>} : memref<8x640xf32, #tpu.memory_space<vmem>>, vector<1x64xf32>,
    %84 = vector.extract_strided_slice %47 {offsets = [200, 0], sizes = [50, 128], strides = [1, 1]} : vector<1024x128xf32> to vector<50x128xf32>
    %cst_31 = arith.constant dense<0xFF800000> : vector<128xf32>
    %85 = vector.multi_reduction <maximumf>, %84, %cst_31 [0] : vector<50x128xf32> to vector<128xf32>
    %86 = vector.shape_cast %85 : vector<128xf32> to vector<1x128xf32>
    %87 = vector.extract_strided_slice %86 {offsets = [0, 0], sizes = [1, 64], strides = [1, 1]} : vector<1x128xf32> to vector<1x64xf32>
    %88 = vector.extract_strided_slice %86 {offsets = [0, 64], sizes = [1, 64], strides = [1, 1]} : vector<1x128xf32> to vector<1x64xf32>
    %89 = arith.maximumf %87, %88 : vector<1x64xf32>
    %c0_i32_32 = arith.constant 0 : i32
    %90 = arith.addi %27, %c0_i32_32 : i32
    %91 = arith.index_cast %90 : i32 to index
    %c256 = arith.constant 256 : index
    %92 = vector.load %arg11[%91, %c256] : memref<8x640xf32, #tpu.memory_space<vmem>>, vector<1x64xf32>
    tpu.vector_store %arg11[%91, %c256], %89 {strides = array<i32>} : memref<8x640xf32, #tpu.memory_space<vmem>>, vector<1x64xf32>,
    %93 = vector.extract_strided_slice %47 {offsets = [250, 0], sizes = [50, 128], strides = [1, 1]} : vector<1024x128xf32> to vector<50x128xf32>
    %cst_33 = arith.constant dense<0xFF800000> : vector<128xf32>
    %94 = vector.multi_reduction <maximumf>, %93, %cst_33 [0] : vector<50x128xf32> to vector<128xf32>
    %95 = vector.shape_cast %94 : vector<128xf32> to vector<1x128xf32>
    %96 = vector.extract_strided_slice %95 {offsets = [0, 0], sizes = [1, 64], strides = [1, 1]} : vector<1x128xf32> to vector<1x64xf32>
    %97 = vector.extract_strided_slice %95 {offsets = [0, 64], sizes = [1, 64], strides = [1, 1]} : vector<1x128xf32> to vector<1x64xf32>
    %98 = arith.maximumf %96, %97 : vector<1x64xf32>
    %c0_i32_34 = arith.constant 0 : i32
    %99 = arith.addi %27, %c0_i32_34 : i32
    %100 = arith.index_cast %99 : i32 to index
    %c320 = arith.constant 320 : index
    %101 = vector.load %arg11[%100, %c320] : memref<8x640xf32, #tpu.memory_space<vmem>>, vector<1x64xf32>
    tpu.vector_store %arg11[%100, %c320], %98 {strides = array<i32>} : memref<8x640xf32, #tpu.memory_space<vmem>>, vector<1x64xf32>,
    %102 = vector.extract_strided_slice %47 {offsets = [300, 0], sizes = [50, 128], strides = [1, 1]} : vector<1024x128xf32> to vector<50x128xf32>
    %cst_35 = arith.constant dense<0xFF800000> : vector<128xf32>
    %103 = vector.multi_reduction <maximumf>, %102, %cst_35 [0] : vector<50x128xf32> to vector<128xf32>
    %104 = vector.shape_cast %103 : vector<128xf32> to vector<1x128xf32>
    %105 = vector.extract_strided_slice %104 {offsets = [0, 0], sizes = [1, 64], strides = [1, 1]} : vector<1x128xf32> to vector<1x64xf32>
    %106 = vector.extract_strided_slice %104 {offsets = [0, 64], sizes = [1, 64], strides = [1, 1]} : vector<1x128xf32> to vector<1x64xf32>
    %107 = arith.maximumf %105, %106 : vector<1x64xf32>
    %c0_i32_36 = arith.constant 0 : i32
    %108 = arith.addi %27, %c0_i32_36 : i32
    %109 = arith.index_cast %108 : i32 to index
    %c384 = arith.constant 384 : index
    %110 = vector.load %arg11[%109, %c384] : memref<8x640xf32, #tpu.memory_space<vmem>>, vector<1x64xf32>
    tpu.vector_store %arg11[%109, %c384], %107 {strides = array<i32>} : memref<8x640xf32, #tpu.memory_space<vmem>>, vector<1x64xf32>,
    %111 = vector.extract_strided_slice %47 {offsets = [350, 0], sizes = [50, 128], strides = [1, 1]} : vector<1024x128xf32> to vector<50x128xf32>
    %cst_37 = arith.constant dense<0xFF800000> : vector<128xf32>
    %112 = vector.multi_reduction <maximumf>, %111, %cst_37 [0] : vector<50x128xf32> to vector<128xf32>
    %113 = vector.shape_cast %112 : vector<128xf32> to vector<1x128xf32>
    %114 = vector.extract_strided_slice %113 {offsets = [0, 0], sizes = [1, 64], strides = [1, 1]} : vector<1x128xf32> to vector<1x64xf32>
    %115 = vector.extract_strided_slice %113 {offsets = [0, 64], sizes = [1, 64], strides = [1, 1]} : vector<1x128xf32> to vector<1x64xf32>
    %116 = arith.maximumf %114, %115 : vector<1x64xf32>
    %c0_i32_38 = arith.constant 0 : i32
    %117 = arith.addi %27, %c0_i32_38 : i32
    %118 = arith.index_cast %117 : i32 to index
    %c448 = arith.constant 448 : index
    %119 = vector.load %arg11[%118, %c448] : memref<8x640xf32, #tpu.memory_space<vmem>>, vector<1x64xf32>
    tpu.vector_store %arg11[%118, %c448], %116 {strides = array<i32>} : memref<8x640xf32, #tpu.memory_space<vmem>>, vector<1x64xf32>,
    %120 = vector.extract_strided_slice %47 {offsets = [400, 0], sizes = [50, 128], strides = [1, 1]} : vector<1024x128xf32> to vector<50x128xf32>
    %cst_39 = arith.constant dense<0xFF800000> : vector<128xf32>
    %121 = vector.multi_reduction <maximumf>, %120, %cst_39 [0] : vector<50x128xf32> to vector<128xf32>
    %122 = vector.shape_cast %121 : vector<128xf32> to vector<1x128xf32>
    %123 = vector.extract_strided_slice %122 {offsets = [0, 0], sizes = [1, 64], strides = [1, 1]} : vector<1x128xf32> to vector<1x64xf32>
    %124 = vector.extract_strided_slice %122 {offsets = [0, 64], sizes = [1, 64], strides = [1, 1]} : vector<1x128xf32> to vector<1x64xf32>
    %125 = arith.maximumf %123, %124 : vector<1x64xf32>
    %c0_i32_40 = arith.constant 0 : i32
    %126 = arith.addi %27, %c0_i32_40 : i32
    %127 = arith.index_cast %126 : i32 to index
    %c512 = arith.constant 512 : index
    %128 = vector.load %arg11[%127, %c512] : memref<8x640xf32, #tpu.memory_space<vmem>>, vector<1x64xf32>
    tpu.vector_store %arg11[%127, %c512], %125 {strides = array<i32>} : memref<8x640xf32, #tpu.memory_space<vmem>>, vector<1x64xf32>,
    %129 = vector.extract_strided_slice %47 {offsets = [450, 0], sizes = [50, 128], strides = [1, 1]} : vector<1024x128xf32> to vector<50x128xf32>
    %cst_41 = arith.constant dense<0xFF800000> : vector<128xf32>
    %130 = vector.multi_reduction <maximumf>, %129, %cst_41 [0] : vector<50x128xf32> to vector<128xf32>
    %131 = vector.shape_cast %130 : vector<128xf32> to vector<1x128xf32>
    %132 = vector.extract_strided_slice %131 {offsets = [0, 0], sizes = [1, 64], strides = [1, 1]} : vector<1x128xf32> to vector<1x64xf32>
    %133 = vector.extract_strided_slice %131 {offsets = [0, 64], sizes = [1, 64], strides = [1, 1]} : vector<1x128xf32> to vector<1x64xf32>
    %134 = arith.maximumf %132, %133 : vector<1x64xf32>
    %c0_i32_42 = arith.constant 0 : i32
    %135 = arith.addi %27, %c0_i32_42 : i32
    %136 = arith.index_cast %135 : i32 to index
    %c576 = arith.constant 576 : index
    %137 = vector.load %arg11[%136, %c576] : memref<8x640xf32, #tpu.memory_space<vmem>>, vector<1x64xf32>
    tpu.vector_store %arg11[%136, %c576], %134 {strides = array<i32>} : memref<8x640xf32, #tpu.memory_space<vmem>>, vector<1x64xf32>,
    %138 = vector.extract_strided_slice %47 {offsets = [512, 0], sizes = [50, 128], strides = [1, 1]} : vector<1024x128xf32> to vector<50x128xf32>
    %cst_43 = arith.constant dense<0xFF800000> : vector<128xf32>
    %139 = vector.multi_reduction <maximumf>, %138, %cst_43 [0] : vector<50x128xf32> to vector<128xf32>
    %140 = vector.shape_cast %139 : vector<128xf32> to vector<1x128xf32>
    %141 = vector.extract_strided_slice %140 {offsets = [0, 0], sizes = [1, 64], strides = [1, 1]} : vector<1x128xf32> to vector<1x64xf32>
    %142 = vector.extract_strided_slice %140 {offsets = [0, 64], sizes = [1, 64], strides = [1, 1]} : vector<1x128xf32> to vector<1x64xf32>
    %143 = arith.maximumf %141, %142 : vector<1x64xf32>
    %c1_i32_44 = arith.constant 1 : i32
    %144 = arith.addi %27, %c1_i32_44 : i32
    %145 = arith.index_cast %144 : i32 to index
    %c0_45 = arith.constant 0 : index
    %146 = vector.load %arg11[%145, %c0_45] : memref<8x640xf32, #tpu.memory_space<vmem>>, vector<1x64xf32>
    tpu.vector_store %arg11[%145, %c0_45], %143 {strides = array<i32>} : memref<8x640xf32, #tpu.memory_space<vmem>>, vector<1x64xf32>,
    %147 = vector.extract_strided_slice %47 {offsets = [562, 0], sizes = [50, 128], strides = [1, 1]} : vector<1024x128xf32> to vector<50x128xf32>
    %cst_46 = arith.constant dense<0xFF800000> : vector<128xf32>
    %148 = vector.multi_reduction <maximumf>, %147, %cst_46 [0] : vector<50x128xf32> to vector<128xf32>
    %149 = vector.shape_cast %148 : vector<128xf32> to vector<1x128xf32>
    %150 = vector.extract_strided_slice %149 {offsets = [0, 0], sizes = [1, 64], strides = [1, 1]} : vector<1x128xf32> to vector<1x64xf32>
    %151 = vector.extract_strided_slice %149 {offsets = [0, 64], sizes = [1, 64], strides = [1, 1]} : vector<1x128xf32> to vector<1x64xf32>
    %152 = arith.maximumf %150, %151 : vector<1x64xf32>
    %c1_i32_47 = arith.constant 1 : i32
    %153 = arith.addi %27, %c1_i32_47 : i32
    %154 = arith.index_cast %153 : i32 to index
    %c64_48 = arith.constant 64 : index
    %155 = vector.load %arg11[%154, %c64_48] : memref<8x640xf32, #tpu.memory_space<vmem>>, vector<1x64xf32>
    tpu.vector_store %arg11[%154, %c64_48], %152 {strides = array<i32>} : memref<8x640xf32, #tpu.memory_space<vmem>>, vector<1x64xf32>,
    %156 = vector.extract_strided_slice %47 {offsets = [612, 0], sizes = [50, 128], strides = [1, 1]} : vector<1024x128xf32> to vector<50x128xf32>
    %cst_49 = arith.constant dense<0xFF800000> : vector<128xf32>
    %157 = vector.multi_reduction <maximumf>, %156, %cst_49 [0] : vector<50x128xf32> to vector<128xf32>
    %158 = vector.shape_cast %157 : vector<128xf32> to vector<1x128xf32>
    %159 = vector.extract_strided_slice %158 {offsets = [0, 0], sizes = [1, 64], strides = [1, 1]} : vector<1x128xf32> to vector<1x64xf32>
    %160 = vector.extract_strided_slice %158 {offsets = [0, 64], sizes = [1, 64], strides = [1, 1]} : vector<1x128xf32> to vector<1x64xf32>
    %161 = arith.maximumf %159, %160 : vector<1x64xf32>
    %c1_i32_50 = arith.constant 1 : i32
    %162 = arith.addi %27, %c1_i32_50 : i32
    %163 = arith.index_cast %162 : i32 to index
    %c128_51 = arith.constant 128 : index
    %164 = vector.load %arg11[%163, %c128_51] : memref<8x640xf32, #tpu.memory_space<vmem>>, vector<1x64xf32>
    tpu.vector_store %arg11[%163, %c128_51], %161 {strides = array<i32>} : memref<8x640xf32, #tpu.memory_space<vmem>>, vector<1x64xf32>,
    %165 = vector.extract_strided_slice %47 {offsets = [662, 0], sizes = [50, 128], strides = [1, 1]} : vector<1024x128xf32> to vector<50x128xf32>
    %cst_52 = arith.constant dense<0xFF800000> : vector<128xf32>
    %166 = vector.multi_reduction <maximumf>, %165, %cst_52 [0] : vector<50x128xf32> to vector<128xf32>
    %167 = vector.shape_cast %166 : vector<128xf32> to vector<1x128xf32>
    %168 = vector.extract_strided_slice %167 {offsets = [0, 0], sizes = [1, 64], strides = [1, 1]} : vector<1x128xf32> to vector<1x64xf32>
    %169 = vector.extract_strided_slice %167 {offsets = [0, 64], sizes = [1, 64], strides = [1, 1]} : vector<1x128xf32> to vector<1x64xf32>
    %170 = arith.maximumf %168, %169 : vector<1x64xf32>
    %c1_i32_53 = arith.constant 1 : i32
    %171 = arith.addi %27, %c1_i32_53 : i32
    %172 = arith.index_cast %171 : i32 to index
    %c192_54 = arith.constant 192 : index
    %173 = vector.load %arg11[%172, %c192_54] : memref<8x640xf32, #tpu.memory_space<vmem>>, vector<1x64xf32>
    tpu.vector_store %arg11[%172, %c192_54], %170 {strides = array<i32>} : memref<8x640xf32, #tpu.memory_space<vmem>>, vector<1x64xf32>,
    %174 = vector.extract_strided_slice %47 {offsets = [712, 0], sizes = [50, 128], strides = [1, 1]} : vector<1024x128xf32> to vector<50x128xf32>
    %cst_55 = arith.constant dense<0xFF800000> : vector<128xf32>
    %175 = vector.multi_reduction <maximumf>, %174, %cst_55 [0] : vector<50x128xf32> to vector<128xf32>
    %176 = vector.shape_cast %175 : vector<128xf32> to vector<1x128xf32>
    %177 = vector.extract_strided_slice %176 {offsets = [0, 0], sizes = [1, 64], strides = [1, 1]} : vector<1x128xf32> to vector<1x64xf32>
    %178 = vector.extract_strided_slice %176 {offsets = [0, 64], sizes = [1, 64], strides = [1, 1]} : vector<1x128xf32> to vector<1x64xf32>
    %179 = arith.maximumf %177, %178 : vector<1x64xf32>
    %c1_i32_56 = arith.constant 1 : i32
    %180 = arith.addi %27, %c1_i32_56 : i32
    %181 = arith.index_cast %180 : i32 to index
    %c256_57 = arith.constant 256 : index
    %182 = vector.load %arg11[%181, %c256_57] : memref<8x640xf32, #tpu.memory_space<vmem>>, vector<1x64xf32>
    tpu.vector_store %arg11[%181, %c256_57], %179 {strides = array<i32>} : memref<8x640xf32, #tpu.memory_space<vmem>>, vector<1x64xf32>,
    %183 = vector.extract_strided_slice %47 {offsets = [762, 0], sizes = [50, 128], strides = [1, 1]} : vector<1024x128xf32> to vector<50x128xf32>
    %cst_58 = arith.constant dense<0xFF800000> : vector<128xf32>
    %184 = vector.multi_reduction <maximumf>, %183, %cst_58 [0] : vector<50x128xf32> to vector<128xf32>
    %185 = vector.shape_cast %184 : vector<128xf32> to vector<1x128xf32>
    %186 = vector.extract_strided_slice %185 {offsets = [0, 0], sizes = [1, 64], strides = [1, 1]} : vector<1x128xf32> to vector<1x64xf32>
    %187 = vector.extract_strided_slice %185 {offsets = [0, 64], sizes = [1, 64], strides = [1, 1]} : vector<1x128xf32> to vector<1x64xf32>
    %188 = arith.maximumf %186, %187 : vector<1x64xf32>
    %c1_i32_59 = arith.constant 1 : i32
    %189 = arith.addi %27, %c1_i32_59 : i32
    %190 = arith.index_cast %189 : i32 to index
    %c320_60 = arith.constant 320 : index
    %191 = vector.load %arg11[%190, %c320_60] : memref<8x640xf32, #tpu.memory_space<vmem>>, vector<1x64xf32>
    tpu.vector_store %arg11[%190, %c320_60], %188 {strides = array<i32>} : memref<8x640xf32, #tpu.memory_space<vmem>>, vector<1x64xf32>,
    %192 = vector.extract_strided_slice %47 {offsets = [812, 0], sizes = [50, 128], strides = [1, 1]} : vector<1024x128xf32> to vector<50x128xf32>
    %cst_61 = arith.constant dense<0xFF800000> : vector<128xf32>
    %193 = vector.multi_reduction <maximumf>, %192, %cst_61 [0] : vector<50x128xf32> to vector<128xf32>
    %194 = vector.shape_cast %193 : vector<128xf32> to vector<1x128xf32>
    %195 = vector.extract_strided_slice %194 {offsets = [0, 0], sizes = [1, 64], strides = [1, 1]} : vector<1x128xf32> to vector<1x64xf32>
    %196 = vector.extract_strided_slice %194 {offsets = [0, 64], sizes = [1, 64], strides = [1, 1]} : vector<1x128xf32> to vector<1x64xf32>
    %197 = arith.maximumf %195, %196 : vector<1x64xf32>
    %c1_i32_62 = arith.constant 1 : i32
    %198 = arith.addi %27, %c1_i32_62 : i32
    %199 = arith.index_cast %198 : i32 to index
    %c384_63 = arith.constant 384 : index
    %200 = vector.load %arg11[%199, %c384_63] : memref<8x640xf32, #tpu.memory_space<vmem>>, vector<1x64xf32>
    tpu.vector_store %arg11[%199, %c384_63], %197 {strides = array<i32>} : memref<8x640xf32, #tpu.memory_space<vmem>>, vector<1x64xf32>,
    %201 = vector.extract_strided_slice %47 {offsets = [862, 0], sizes = [50, 128], strides = [1, 1]} : vector<1024x128xf32> to vector<50x128xf32>
    %cst_64 = arith.constant dense<0xFF800000> : vector<128xf32>
    %202 = vector.multi_reduction <maximumf>, %201, %cst_64 [0] : vector<50x128xf32> to vector<128xf32>
    %203 = vector.shape_cast %202 : vector<128xf32> to vector<1x128xf32>
    %204 = vector.extract_strided_slice %203 {offsets = [0, 0], sizes = [1, 64], strides = [1, 1]} : vector<1x128xf32> to vector<1x64xf32>
    %205 = vector.extract_strided_slice %203 {offsets = [0, 64], sizes = [1, 64], strides = [1, 1]} : vector<1x128xf32> to vector<1x64xf32>
    %206 = arith.maximumf %204, %205 : vector<1x64xf32>
    %c1_i32_65 = arith.constant 1 : i32
    %207 = arith.addi %27, %c1_i32_65 : i32
    %208 = arith.index_cast %207 : i32 to index
    %c448_66 = arith.constant 448 : index
    %209 = vector.load %arg11[%208, %c448_66] : memref<8x640xf32, #tpu.memory_space<vmem>>, vector<1x64xf32>
    tpu.vector_store %arg11[%208, %c448_66], %206 {strides = array<i32>} : memref<8x640xf32, #tpu.memory_space<vmem>>, vector<1x64xf32>,
    %210 = vector.extract_strided_slice %47 {offsets = [912, 0], sizes = [50, 128], strides = [1, 1]} : vector<1024x128xf32> to vector<50x128xf32>
    %cst_67 = arith.constant dense<0xFF800000> : vector<128xf32>
    %211 = vector.multi_reduction <maximumf>, %210, %cst_67 [0] : vector<50x128xf32> to vector<128xf32>
    %212 = vector.shape_cast %211 : vector<128xf32> to vector<1x128xf32>
    %213 = vector.extract_strided_slice %212 {offsets = [0, 0], sizes = [1, 64], strides = [1, 1]} : vector<1x128xf32> to vector<1x64xf32>
    %214 = vector.extract_strided_slice %212 {offsets = [0, 64], sizes = [1, 64], strides = [1, 1]} : vector<1x128xf32> to vector<1x64xf32>
    %215 = arith.maximumf %213, %214 : vector<1x64xf32>
    %c1_i32_68 = arith.constant 1 : i32
    %216 = arith.addi %27, %c1_i32_68 : i32
    %217 = arith.index_cast %216 : i32 to index
    %c512_69 = arith.constant 512 : index
    %218 = vector.load %arg11[%217, %c512_69] : memref<8x640xf32, #tpu.memory_space<vmem>>, vector<1x64xf32>
    tpu.vector_store %arg11[%217, %c512_69], %215 {strides = array<i32>} : memref<8x640xf32, #tpu.memory_space<vmem>>, vector<1x64xf32>,
    %219 = vector.extract_strided_slice %47 {offsets = [962, 0], sizes = [50, 128], strides = [1, 1]} : vector<1024x128xf32> to vector<50x128xf32>
    %cst_70 = arith.constant dense<0xFF800000> : vector<128xf32>
    %220 = vector.multi_reduction <maximumf>, %219, %cst_70 [0] : vector<50x128xf32> to vector<128xf32>
    %221 = vector.shape_cast %220 : vector<128xf32> to vector<1x128xf32>
    %222 = vector.extract_strided_slice %221 {offsets = [0, 0], sizes = [1, 64], strides = [1, 1]} : vector<1x128xf32> to vector<1x64xf32>
    %223 = vector.extract_strided_slice %221 {offsets = [0, 64], sizes = [1, 64], strides = [1, 1]} : vector<1x128xf32> to vector<1x64xf32>
    %224 = arith.maximumf %222, %223 : vector<1x64xf32>
    %c1_i32_71 = arith.constant 1 : i32
    %225 = arith.addi %27, %c1_i32_71 : i32
    %226 = arith.index_cast %225 : i32 to index
    %c576_72 = arith.constant 576 : index
    %227 = vector.load %arg11[%226, %c576_72] : memref<8x640xf32, #tpu.memory_space<vmem>>, vector<1x64xf32>
    tpu.vector_store %arg11[%226, %c576_72], %224 {strides = array<i32>} : memref<8x640xf32, #tpu.memory_space<vmem>>, vector<1x64xf32>,
    %c1_i32_73 = arith.constant 1 : i32
    %c0_74 = arith.constant 0 : index
    %c0_75 = arith.constant 0 : index
    %228 = vector.load %arg11[%c0_74, %c0_75] : memref<8x640xf32, #tpu.memory_space<vmem>>, vector<8x640xf32>
    %229 = arith.truncf %228 : vector<8x640xf32> to vector<8x640xbf16>
    %c0_76 = arith.constant 0 : index
    %c0_77 = arith.constant 0 : index
    %230 = vector.load %arg6[%c0_76, %c0_77] : memref<640x128xbf16, #tpu.memory_space<vmem>>, vector<640x128xbf16>
    %cst_78 = arith.constant dense<0.000000e+00> : vector<8x128xf32>
    %231 = tpu.matmul %229, %230, %cst_78 {dimension_numbers = #tpu.dot_dimension_numbers<[1], [0], [0], [1], [0, 0, 1, 1], [], []>} : vector<8x640xbf16>, vector<640x128xbf16>, vector<8x128xf32> -> vector<8x128xf32>
    %c0_79 = arith.constant 0 : index
    %c0_80 = arith.constant 0 : index
    %232 = vector.load %arg7[%c0_79, %c0_80] : memref<1x128xf32, #tpu.memory_space<vmem>>, vector<1x128xf32>
    %233 = vector.broadcast %232 : vector<1x128xf32> to vector<8x128xf32>
    %234 = arith.addf %231, %233 : vector<8x128xf32>
    %235 = arith.truncf %234 : vector<8x128xf32> to vector<8x128xbf16>
    %c0_81 = arith.constant 0 : index
    %c0_82 = arith.constant 0 : index
    %236 = vector.load %arg8[%c0_81, %c0_82] : memref<128x128xbf16, #tpu.memory_space<vmem>>, vector<128x128xbf16>
    %cst_83 = arith.constant dense<0.000000e+00> : vector<8x128xf32>
    %237 = tpu.matmul %235, %236, %cst_83 {dimension_numbers = #tpu.dot_dimension_numbers<[1], [0], [0], [1], [0, 0, 1, 1], [], []>} : vector<8x128xbf16>, vector<128x128xbf16>, vector<8x128xf32> -> vector<8x128xf32>
    %c0_84 = arith.constant 0 : index
    %c0_85 = arith.constant 0 : index
    %238 = vector.load %arg9[%c0_84, %c0_85] : memref<1x128xf32, #tpu.memory_space<vmem>>, vector<1x128xf32>
    %239 = vector.broadcast %238 : vector<1x128xf32> to vector<8x128xf32>
    %240 = arith.addf %237, %239 : vector<8x128xf32>
    %c0_86 = arith.constant 0 : index
    %c0_87 = arith.constant 0 : index
    %241 = vector.load %arg10[%c0_86, %c0_87] : memref<8x128xf32, #tpu.memory_space<vmem>>, vector<8x128xf32>
    tpu.vector_store %arg10[%c0_86, %c0_87], %240 {strides = array<i32>} : memref<8x128xf32, #tpu.memory_space<vmem>>, vector<8x128xf32>,
    return
  }
  func.func @transform_0(%arg0: i32) -> (i32, i32, i32) {
    %c0_i32 = arith.constant 0 : i32
    %c0_i32_0 = arith.constant 0 : i32
    %c0_i32_1 = arith.constant 0 : i32
    return %arg0, %c0_i32, %c0_i32_0 : i32, i32, i32
  }
  func.func @transform_1(%arg0: i32) -> (i32, i32) {
    %c0_i32 = arith.constant 0 : i32
    %c0_i32_0 = arith.constant 0 : i32
    %c0_i32_1 = arith.constant 0 : i32
    return %c0_i32, %c0_i32_0 : i32, i32
  }
  func.func @transform_2(%arg0: i32) -> (i32, i32) {
    %c0_i32 = arith.constant 0 : i32
    %c0_i32_0 = arith.constant 0 : i32
    %c0_i32_1 = arith.constant 0 : i32
    return %c0_i32, %c0_i32_0 : i32, i32
  }
  func.func @transform_3(%arg0: i32) -> (i32, i32) {
    %c0_i32 = arith.constant 0 : i32
    %c0_i32_0 = arith.constant 0 : i32
    %c0_i32_1 = arith.constant 0 : i32
    return %c0_i32, %c0_i32_0 : i32, i32
  }
  func.func @transform_4(%arg0: i32) -> (i32, i32) {
    %c0_i32 = arith.constant 0 : i32
    %c0_i32_0 = arith.constant 0 : i32
    %c0_i32_1 = arith.constant 0 : i32
    return %c0_i32, %c0_i32_0 : i32, i32
  }
  func.func @transform_5(%arg0: i32) -> (i32, i32) {
    %c0_i32 = arith.constant 0 : i32
    %c0_i32_0 = arith.constant 0 : i32
    %c0_i32_1 = arith.constant 0 : i32
    return %c0_i32, %c0_i32_0 : i32, i32
  }
  func.func @transform_6(%arg0: i32) -> (i32, i32) {
    %c0_i32 = arith.constant 0 : i32
    %c0_i32_0 = arith.constant 0 : i32
    %c0_i32_1 = arith.constant 0 : i32
    return %c0_i32, %c0_i32_0 : i32, i32
  }
  func.func @transform_7(%arg0: i32) -> (i32, i32) {
    %c0_i32 = arith.constant 0 : i32
    %c0_i32_0 = arith.constant 0 : i32
    %c0_i32_1 = arith.constant 0 : i32
    return %c0_i32, %c0_i32_0 : i32, i32
  }
  func.func @transform_8(%arg0: i32) -> (i32, i32) {
    %c0_i32 = arith.constant 0 : i32
    %c0_i32_0 = arith.constant 0 : i32
    %c0_i32_1 = arith.constant 0 : i32
    return %c0_i32, %c0_i32_0 : i32, i32
  }
  func.func @transform_9(%arg0: i32) -> (i32, i32) {
    %c0_i32 = arith.constant 0 : i32
    %c0_i32_0 = arith.constant 0 : i32
    return %arg0, %c0_i32 : i32, i32
  }
}

</mosaic_0001>

<llo_original>
// kernel: tpu_custom_call.1
$region0: #{tpu_custom_call.1}
  #allocation0 [shape = 'u32[]', space=smem, size = 0x4, offset = 0x4, fixed_abs, tag = 'smem constant byte address 0x4 - core index']
  #allocation1 [shape = 'u32[144,128]{1,0:T(1,128)}', space=vmem, size = 0x12000, scoped, tag = 'internal scratch']
  #allocation2 [shape = 'f32[8,640]{1,0:T(8,128)}', space=vmem, size = 0x5000, scoped, tag = 'scratch operand']
  %s0 = inlined_call_operand.hbm [shape: bf16[2,512,256], index: 0, kind: input, shape index: {}]
  %s1 = inlined_call_operand.hbm [shape: bf16[256,128], index: 1, kind: input, shape index: {}]
  %s2 = inlined_call_operand.vmem [shape: f32[1,128], index: 2, kind: input, shape index: {}]
  %s3 = inlined_call_operand.hbm [shape: bf16[128,128], index: 3, kind: input, shape index: {}]
  %s4 = inlined_call_operand.vmem [shape: f32[1,128], index: 4, kind: input, shape index: {}]
  %s5 = inlined_call_operand.hbm [shape: bf16[640,128], index: 5, kind: input, shape index: {}]
  %s6 = inlined_call_operand.vmem [shape: f32[1,128], index: 6, kind: input, shape index: {}]
  %s7 = inlined_call_operand.hbm [shape: bf16[128,128], index: 7, kind: input, shape index: {}]
  %s8 = inlined_call_operand.vmem [shape: f32[1,128], index: 8, kind: input, shape index: {}]
  %s9 = inlined_call_operand.hbm [shape: f32[8,128], index: 9, kind: output, shape index: {}]
  %s10 = sld [smem:[#allocation0]]
  $region66: #{tpu_custom_call.1} parent=0
    _
  %s12 = ssub.s32 1, %s10
  %s13 = scalar_select 0, %s12, %s10
  $region1: #{tpu_custom_call.1} parent=0
    #allocation3 [shape = 'u8[524288]{0}', space=vmem, size = 0x80000, scoped, tag = 'input window, operand 0, single buffered']
    #allocation4 [shape = 's32[1]{0}', space=sflag, size = 0x4, scoped, tag = 'scoped memory for tpu_custom_call.1']
    #allocation5 [shape = 's32[1]{0}', space=sflag, size = 0x4, scoped, tag = 'scoped memory for tpu_custom_call.1']
    #allocation6 [shape = 'u8[65536]{0}', space=vmem, size = 0x10000, scoped, tag = 'input window, operand 1, single buffered']
    #allocation7 [shape = 's32[1]{0}', space=sflag, size = 0x4, scoped, tag = 'scoped memory for tpu_custom_call.1']
    #allocation8 [shape = 'u8[32768]{0}', space=vmem, size = 0x8000, scoped, tag = 'input window, operand 3, single buffered']
    #allocation9 [shape = 'u8[163840]{0}', space=vmem, size = 0x28000, scoped, tag = 'input window, operand 5, single buffered']
    #allocation10 [shape = 's32[1]{0}', space=sflag, size = 0x4, scoped, tag = 'scoped memory for tpu_custom_call.1']
    #allocation11 [shape = 'u8[32768]{0}', space=vmem, size = 0x8000, scoped, tag = 'input window, operand 7, single buffered']
    #allocation12 [shape = 'u8[4096]{0}', space=vmem, size = 0x1000, scoped, tag = 'output window, operand 0, single buffered']
    %14 = vsyncpa [#allocation4], 0
    %15 = vsyncpa [#allocation7], 0
    %16 = vsyncpa [#allocation10], 0
    %17 = vsyncpa [#allocation5], 0
    // Predicated region
    $region2: #{tpu_custom_call.1} parent=1 // pred_check
      _
    $region3: #{tpu_custom_call.1} parent=1 // pred_check_branch
      %19 = sbr.rel (0) target = $region5
    $region4: #{tpu_custom_call.1} parent=1 // pred_region
      %s21 = ssub.s32 16384, 16384
      %22 = vsyncadd [#allocation4], %s21
      %s23 = sshll.u32 [#allocation3], 4
      %s24 = int_to_ptr.vmem [resolvable:$true] %s23
      %29 = dma.hbm_to_vmem [thread:$0]  %s0, 16384, %s24, [#allocation4], 128, 128, 8
    $region5: #{tpu_custom_call.1} parent=1 // pred_fallthru
      _
    // Predicated region
    $region6: #{tpu_custom_call.1} parent=1 // pred_check
      _
    $region7: #{tpu_custom_call.1} parent=1 // pred_check_branch
      %31 = sbr.rel (0) target = $region9
    $region8: #{tpu_custom_call.1} parent=1 // pred_region
      %s33 = ssub.s32 2048, 2048
      %34 = vsyncadd [#allocation7], %s33
      %s35 = sshll.u32 [#allocation6], 4
      %s36 = int_to_ptr.vmem [resolvable:$true] %s35
      %41 = dma.hbm_to_vmem [thread:$0]  %s1, 2048, %s36, [#allocation7], 64, 64, 4
    $region9: #{tpu_custom_call.1} parent=1 // pred_fallthru
      _
    // Predicated region
    $region10: #{tpu_custom_call.1} parent=1 // pred_check
      _
    $region11: #{tpu_custom_call.1} parent=1 // pred_check_branch
      %43 = sbr.rel (0) target = $region13
    $region12: #{tpu_custom_call.1} parent=1 // pred_region
      _
    $region13: #{tpu_custom_call.1} parent=1 // pred_fallthru
      _
    // Predicated region
    $region14: #{tpu_custom_call.1} parent=1 // pred_check
      _
    $region15: #{tpu_custom_call.1} parent=1 // pred_check_branch
      %45 = sbr.rel (0) target = $region17
    $region16: #{tpu_custom_call.1} parent=1 // pred_region
      %s47 = ssub.s32 1024, 1024
      %48 = vsyncadd [#allocation7], %s47
      %s49 = sshll.u32 [#allocation8], 4
      %s50 = int_to_ptr.vmem [resolvable:$true] %s49
      %55 = dma.hbm_to_vmem [thread:$0]  %s3, 1024, %s50, [#allocation7], 64, 64, 4
    $region17: #{tpu_custom_call.1} parent=1 // pred_fallthru
      _
    // Predicated region
    $region18: #{tpu_custom_call.1} parent=1 // pred_check
      _
    $region19: #{tpu_custom_call.1} parent=1 // pred_check_branch
      %57 = sbr.rel (0) target = $region21
    $region20: #{tpu_custom_call.1} parent=1 // pred_region
      _
    $region21: #{tpu_custom_call.1} parent=1 // pred_fallthru
      _
    // Predicated region
    $region22: #{tpu_custom_call.1} parent=1 // pred_check
      _
    $region23: #{tpu_custom_call.1} parent=1 // pred_check_branch
      %59 = sbr.rel (0) target = $region25
    $region24: #{tpu_custom_call.1} parent=1 // pred_region
      %s61 = ssub.s32 5120, 5120
      %62 = vsyncadd [#allocation10], %s61
      %s63 = sshll.u32 [#allocation9], 4
      %s64 = int_to_ptr.vmem [resolvable:$true] %s63
      %69 = dma.hbm_to_vmem [thread:$0]  %s5, 5120, %s64, [#allocation10], 64, 64, 4
    $region25: #{tpu_custom_call.1} parent=1 // pred_fallthru
      _
    // Predicated region
    $region26: #{tpu_custom_call.1} parent=1 // pred_check
      _
    $region27: #{tpu_custom_call.1} parent=1 // pred_check_branch
      %71 = sbr.rel (0) target = $region29
    $region28: #{tpu_custom_call.1} parent=1 // pred_region
      _
    $region29: #{tpu_custom_call.1} parent=1 // pred_fallthru
      _
    // Predicated region
    $region30: #{tpu_custom_call.1} parent=1 // pred_check
      _
    $region31: #{tpu_custom_call.1} parent=1 // pred_check_branch
      %73 = sbr.rel (0) target = $region33
    $region32: #{tpu_custom_call.1} parent=1 // pred_region
      %s75 = ssub.s32 1024, 1024
      %76 = vsyncadd [#allocation10], %s75
      %s77 = sshll.u32 [#allocation11], 4
      %s78 = int_to_ptr.vmem [resolvable:$true] %s77
      %83 = dma.hbm_to_vmem [thread:$0]  %s7, 1024, %s78, [#allocation10], 64, 64, 4
    $region33: #{tpu_custom_call.1} parent=1 // pred_fallthru
      _
    // Predicated region
    $region34: #{tpu_custom_call.1} parent=1 // pred_check
      _
    $region35: #{tpu_custom_call.1} parent=1 // pred_check_branch
      %85 = sbr.rel (0) target = $region37
    $region36: #{tpu_custom_call.1} parent=1 // pred_region
      _
    $region37: #{tpu_custom_call.1} parent=1 // pred_fallthru
      _
    // Predicated region
    $region38: #{tpu_custom_call.1} parent=1 // pred_check
      _
    $region39: #{tpu_custom_call.1} parent=1 // pred_check_branch
      %87 = sbr.rel (0) target = $region41
    $region40: #{tpu_custom_call.1} parent=1 // pred_region
      %88 = dma.done [#allocation4], 16384
    $region41: #{tpu_custom_call.1} parent=1 // pred_fallthru
      _
    // Predicated region
    $region42: #{tpu_custom_call.1} parent=1 // pred_check
      _
    $region43: #{tpu_custom_call.1} parent=1 // pred_check_branch
      %90 = sbr.rel (0) target = $region45
    $region44: #{tpu_custom_call.1} parent=1 // pred_region
      %91 = dma.done [#allocation7], 2048
    $region45: #{tpu_custom_call.1} parent=1 // pred_fallthru
      _
    // Predicated region
    $region46: #{tpu_custom_call.1} parent=1 // pred_check
      _
    $region47: #{tpu_custom_call.1} parent=1 // pred_check_branch
      %93 = sbr.rel (0) target = $region49
    $region48: #{tpu_custom_call.1} parent=1 // pred_region
      %94 = dma.done [#allocation7], 1024
    $region49: #{tpu_custom_call.1} parent=1 // pred_fallthru
      _
    // Predicated region
    $region50: #{tpu_custom_call.1} parent=1 // pred_check
      _
    $region51: #{tpu_custom_call.1} parent=1 // pred_check_branch
      %96 = sbr.rel (0) target = $region53
    $region52: #{tpu_custom_call.1} parent=1 // pred_region
      %97 = dma.done [#allocation10], 5120
    $region53: #{tpu_custom_call.1} parent=1 // pred_fallthru
      _
    // Predicated region
    $region54: #{tpu_custom_call.1} parent=1 // pred_check
      _
    $region55: #{tpu_custom_call.1} parent=1 // pred_check_branch
      %99 = sbr.rel (0) target = $region57
    $region56: #{tpu_custom_call.1} parent=1 // pred_region
      %100 = dma.done [#allocation10], 1024
    $region57: #{tpu_custom_call.1} parent=1 // pred_fallthru
      _
    %v102 = vld [vmem:[#allocation6] sm:$0xf]
    %v103 = vld [vmem:[#allocation6 + $0x4] sm:$0xf]
    %v104 = vld [vmem:[#allocation6 + $0x8] sm:$0xf]
    %v105 = vld [vmem:[#allocation6 + $0xc] sm:$0xf]
    %v106 = vld [vmem:[#allocation6 + $0x10] sm:$0xf]
    %v107 = vld [vmem:[#allocation6 + $0x14] sm:$0xf]
    %v108 = vld [vmem:[#allocation6 + $0x18] sm:$0xf]
    %v109 = vld [vmem:[#allocation6 + $0x1c] sm:$0xf]
    %v110 = vld [vmem:[#allocation6 + $0x20] sm:$0xf]
    %v111 = vld [vmem:[#allocation6 + $0x24] sm:$0xf]
    %v112 = vld [vmem:[#allocation6 + $0x28] sm:$0xf]
    %v113 = vld [vmem:[#allocation6 + $0x2c] sm:$0xf]
    %v114 = vld [vmem:[#allocation6 + $0x30] sm:$0xf]
    %v115 = vld [vmem:[#allocation6 + $0x34] sm:$0xf]
    %v116 = vld [vmem:[#allocation6 + $0x38] sm:$0xf]
    %v117 = vld [vmem:[#allocation6 + $0x3c] sm:$0xf]
    %v118 = vld [vmem:[#allocation6 + $0x40] sm:$0xf]
    %v119 = vld [vmem:[#allocation6 + $0x44] sm:$0xf]
    %v120 = vld [vmem:[#allocation6 + $0x48] sm:$0xf]
    %v121 = vld [vmem:[#allocation6 + $0x4c] sm:$0xf]
    %v122 = vld [vmem:[#allocation6 + $0x50] sm:$0xf]
    %v123 = vld [vmem:[#allocation6 + $0x54] sm:$0xf]
    %v124 = vld [vmem:[#allocation6 + $0x58] sm:$0xf]
    %v125 = vld [vmem:[#allocation6 + $0x5c] sm:$0xf]
    %v126 = vld [vmem:[#allocation6 + $0x60] sm:$0xf]
    %v127 = vld [vmem:[#allocation6 + $0x64] sm:$0xf]
    %v128 = vld [vmem:[#allocation6 + $0x68] sm:$0xf]
    %v129 = vld [vmem:[#allocation6 + $0x6c] sm:$0xf]
    %v130 = vld [vmem:[#allocation6 + $0x70] sm:$0xf]
    %v131 = vld [vmem:[#allocation6 + $0x74] sm:$0xf]
    %v132 = vld [vmem:[#allocation6 + $0x78] sm:$0xf]
    %v133 = vld [vmem:[#allocation6 + $0x7c] sm:$0xf]
    %v134 = vld [vmem:[#allocation8] sm:$0xf]
    %v135 = vld [vmem:[#allocation8 + $0x4] sm:$0xf]
    %v136 = vld [vmem:[#allocation8 + $0x8] sm:$0xf]
    %v137 = vld [vmem:[#allocation8 + $0xc] sm:$0xf]
    %v138 = vld [vmem:[#allocation8 + $0x10] sm:$0xf]
    %v139 = vld [vmem:[#allocation8 + $0x14] sm:$0xf]
    %v140 = vld [vmem:[#allocation8 + $0x18] sm:$0xf]
    %v141 = vld [vmem:[#allocation8 + $0x1c] sm:$0xf]
    %v142 = vld [vmem:[#allocation8 + $0x20] sm:$0xf]
    %v143 = vld [vmem:[#allocation8 + $0x24] sm:$0xf]
    %v144 = vld [vmem:[#allocation8 + $0x28] sm:$0xf]
    %v145 = vld [vmem:[#allocation8 + $0x2c] sm:$0xf]
    %v146 = vld [vmem:[#allocation8 + $0x30] sm:$0xf]
    %v147 = vld [vmem:[#allocation8 + $0x34] sm:$0xf]
    %v148 = vld [vmem:[#allocation8 + $0x38] sm:$0xf]
    %v149 = vld [vmem:[#allocation8 + $0x3c] sm:$0xf]
    %v150 = vld [vmem:[%s2] sm:$0x1]
    %v151 = vld [vmem:[%s4] sm:$0x1]
    %v152 = vlaneseq
    %v153 = vshrl.u32 %v152, 7
    %v154 = vadd.s32 %v153, 8
    %v155 = vadd.s32 %v153, 16
    %v156 = vadd.s32 %v153, 24
    %v157 = vadd.s32 %v153, 32
    %v158 = vadd.s32 %v153, 40
    %v159 = vadd.s32 %v153, 48
    %v160 = vadd.s32 %v153, 56
    %v161 = vadd.s32 %v153, 64
    %v162 = vadd.s32 %v153, 72
    %v163 = vadd.s32 %v153, 80
    %v164 = vadd.s32 %v153, 88
    %v165 = vadd.s32 %v153, 96
    %v166 = vadd.s32 %v153, 104
    %v167 = vadd.s32 %v153, 112
    %v168 = vadd.s32 %v153, 120
    %v169 = vadd.s32 %v153, 128
    %v170 = vadd.s32 %v153, 136
    %v171 = vadd.s32 %v153, 144
    %v172 = vadd.s32 %v153, 152
    %v173 = vadd.s32 %v153, 160
    %v174 = vadd.s32 %v153, 168
    %v175 = vadd.s32 %v153, 176
    %v176 = vadd.s32 %v153, 184
    %v177 = vadd.s32 %v153, 192
    %v178 = vadd.s32 %v153, 200
    %v179 = vadd.s32 %v153, 208
    %v180 = vadd.s32 %v153, 216
    %v181 = vadd.s32 %v153, 224
    %v182 = vadd.s32 %v153, 232
    %v183 = vadd.s32 %v153, 240
    %v184 = vadd.s32 %v153, 248
    %v185 = vadd.s32 %v153, 256
    %v186 = vadd.s32 %v153, 264
    %v187 = vadd.s32 %v153, 272
    %v188 = vadd.s32 %v153, 280
    %v189 = vadd.s32 %v153, 288
    %v190 = vadd.s32 %v153, 296
    %v191 = vadd.s32 %v153, 304
    %v192 = vadd.s32 %v153, 312
    %v193 = vadd.s32 %v153, 320
    %v194 = vadd.s32 %v153, 328
    %v195 = vadd.s32 %v153, 336
    %v196 = vadd.s32 %v153, 344
    %v197 = vadd.s32 %v153, 352
    %v198 = vadd.s32 %v153, 360
    %v199 = vadd.s32 %v153, 368
    %v200 = vadd.s32 %v153, 376
    %v201 = vadd.s32 %v153, 384
    %v202 = vadd.s32 %v153, 392
    %v203 = vadd.s32 %v153, 400
    %v204 = vadd.s32 %v153, 408
    %v205 = vadd.s32 %v153, 416
    %v206 = vadd.s32 %v153, 424
    %v207 = vadd.s32 %v153, 432
    %v208 = vadd.s32 %v153, 440
    %v209 = vadd.s32 %v153, 448
    %v210 = vadd.s32 %v153, 456
    %v211 = vadd.s32 %v153, 464
    %v212 = vadd.s32 %v153, 472
    %v213 = vadd.s32 %v153, 480
    %v214 = vadd.s32 %v153, 488
    %v215 = vadd.s32 %v153, 496
    %v216 = vadd.s32 %v153, 504
    %v217 = vadd.s32 %v153, 512
    %v218 = vadd.s32 %v153, 520
    %v219 = vadd.s32 %v153, 528
    %v220 = vadd.s32 %v153, 536
    %v221 = vadd.s32 %v153, 544
    %v222 = vadd.s32 %v153, 552
    %v223 = vadd.s32 %v153, 560
    %v224 = vadd.s32 %v153, 568
    %v225 = vadd.s32 %v153, 576
    %v226 = vadd.s32 %v153, 584
    %v227 = vadd.s32 %v153, 592
    %v228 = vadd.s32 %v153, 600
    %v229 = vadd.s32 %v153, 608
    %v230 = vadd.s32 %v153, 616
    %v231 = vadd.s32 %v153, 624
    %v232 = vadd.s32 %v153, 632
    %v233 = vadd.s32 %v153, 640
    %v234 = vadd.s32 %v153, 648
    %v235 = vadd.s32 %v153, 656
    %v236 = vadd.s32 %v153, 664
    %v237 = vadd.s32 %v153, 672
    %v238 = vadd.s32 %v153, 680
    %v239 = vadd.s32 %v153, 688
    %v240 = vadd.s32 %v153, 696
    %v241 = vadd.s32 %v153, 704
    %v242 = vadd.s32 %v153, 712
    %v243 = vadd.s32 %v153, 720
    %v244 = vadd.s32 %v153, 728
    %v245 = vadd.s32 %v153, 736
    %v246 = vadd.s32 %v153, 744
    %v247 = vadd.s32 %v153, 752
    %v248 = vadd.s32 %v153, 760
    %v249 = vadd.s32 %v153, 768
    %v250 = vadd.s32 %v153, 776
    %v251 = vadd.s32 %v153, 784
    %v252 = vadd.s32 %v153, 792
    %v253 = vadd.s32 %v153, 800
    %v254 = vadd.s32 %v153, 808
    %v255 = vadd.s32 %v153, 816
    %v256 = vadd.s32 %v153, 824
    %v257 = vadd.s32 %v153, 832
    %v258 = vadd.s32 %v153, 840
    %v259 = vadd.s32 %v153, 848
    %v260 = vadd.s32 %v153, 856
    %v261 = vadd.s32 %v153, 864
    %v262 = vadd.s32 %v153, 872
    %v263 = vadd.s32 %v153, 880
    %v264 = vadd.s32 %v153, 888
    %v265 = vadd.s32 %v153, 896
    %v266 = vadd.s32 %v153, 904
    %v267 = vadd.s32 %v153, 912
    %v268 = vadd.s32 %v153, 920
    %v269 = vadd.s32 %v153, 928
    %v270 = vadd.s32 %v153, 936
    %v271 = vadd.s32 %v153, 944
    %v272 = vadd.s32 %v153, 952
    %v273 = vadd.s32 %v153, 960
    %v274 = vadd.s32 %v153, 968
    %v275 = vadd.s32 %v153, 976
    %v276 = vadd.s32 %v153, 984
    %v277 = vadd.s32 %v153, 992
    %v278 = vadd.s32 %v153, 1000
    %v279 = vadd.s32 %v153, 1008
    %v280 = vadd.s32 %v153, 1016
    %v281 = vand.u32 %v153, 511
    %v282 = vand.u32 %v154, 511
    %v283 = vand.u32 %v155, 511
    %v284 = vand.u32 %v156, 511
    %v285 = vand.u32 %v157, 511
    %v286 = vand.u32 %v158, 511
    %v287 = vand.u32 %v159, 511
    %v288 = vand.u32 %v160, 511
    %v289 = vand.u32 %v161, 511
    %v290 = vand.u32 %v162, 511
    %v291 = vand.u32 %v163, 511
    %v292 = vand.u32 %v164, 511
    %v293 = vand.u32 %v165, 511
    %v294 = vand.u32 %v166, 511
    %v295 = vand.u32 %v167, 511
    %v296 = vand.u32 %v168, 511
    %v297 = vand.u32 %v169, 511
    %v298 = vand.u32 %v170, 511
    %v299 = vand.u32 %v171, 511
    %v300 = vand.u32 %v172, 511
    %v301 = vand.u32 %v173, 511
    %v302 = vand.u32 %v174, 511
    %v303 = vand.u32 %v175, 511
    %v304 = vand.u32 %v176, 511
    %v305 = vand.u32 %v177, 511
    %v306 = vand.u32 %v178, 511
    %v307 = vand.u32 %v179, 511
    %v308 = vand.u32 %v180, 511
    %v309 = vand.u32 %v181, 511
    %v310 = vand.u32 %v182, 511
    %v311 = vand.u32 %v183, 511
    %v312 = vand.u32 %v184, 511
    %v313 = vand.u32 %v185, 511
    %v314 = vand.u32 %v186, 511
    %v315 = vand.u32 %v187, 511
    %v316 = vand.u32 %v188, 511
    %v317 = vand.u32 %v189, 511
    %v318 = vand.u32 %v190, 511
    %v319 = vand.u32 %v191, 511
    %v320 = vand.u32 %v192, 511
    %v321 = vand.u32 %v193, 511
    %v322 = vand.u32 %v194, 511
    %v323 = vand.u32 %v195, 511
    %v324 = vand.u32 %v196, 511
    %v325 = vand.u32 %v197, 511
    %v326 = vand.u32 %v198, 511
    %v327 = vand.u32 %v199, 511
    %v328 = vand.u32 %v200, 511
    %v329 = vand.u32 %v201, 511
    %v330 = vand.u32 %v202, 511
    %v331 = vand.u32 %v203, 511
    %v332 = vand.u32 %v204, 511
    %v333 = vand.u32 %v205, 511
    %v334 = vand.u32 %v206, 511
    %v335 = vand.u32 %v207, 511
    %v336 = vand.u32 %v208, 511
    %v337 = vand.u32 %v209, 511
    %v338 = vand.u32 %v210, 511
    %v339 = vand.u32 %v211, 511
    %v340 = vand.u32 %v212, 511
    %v341 = vand.u32 %v213, 511
    %v342 = vand.u32 %v214, 511
    %v343 = vand.u32 %v215, 511
    %v344 = vand.u32 %v216, 511
    %v345 = vand.u32 %v217, 511
    %v346 = vand.u32 %v218, 511
    %v347 = vand.u32 %v219, 511
    %v348 = vand.u32 %v220, 511
    %v349 = vand.u32 %v221, 511
    %v350 = vand.u32 %v222, 511
    %v351 = vand.u32 %v223, 511
    %v352 = vand.u32 %v224, 511
    %v353 = vand.u32 %v225, 511
    %v354 = vand.u32 %v226, 511
    %v355 = vand.u32 %v227, 511
    %v356 = vand.u32 %v228, 511
    %v357 = vand.u32 %v229, 511
    %v358 = vand.u32 %v230, 511
    %v359 = vand.u32 %v231, 511
    %v360 = vand.u32 %v232, 511
    %v361 = vand.u32 %v233, 511
    %v362 = vand.u32 %v234, 511
    %v363 = vand.u32 %v235, 511
    %v364 = vand.u32 %v236, 511
    %v365 = vand.u32 %v237, 511
    %v366 = vand.u32 %v238, 511
    %v367 = vand.u32 %v239, 511
    %v368 = vand.u32 %v240, 511
    %v369 = vand.u32 %v241, 511
    %v370 = vand.u32 %v242, 511
    %v371 = vand.u32 %v243, 511
    %v372 = vand.u32 %v244, 511
    %v373 = vand.u32 %v245, 511
    %v374 = vand.u32 %v246, 511
    %v375 = vand.u32 %v247, 511
    %v376 = vand.u32 %v248, 511
    %v377 = vand.u32 %v249, 511
    %v378 = vand.u32 %v250, 511
    %v379 = vand.u32 %v251, 511
    %v380 = vand.u32 %v252, 511
    %v381 = vand.u32 %v253, 511
    %v382 = vand.u32 %v254, 511
    %v383 = vand.u32 %v255, 511
    %v384 = vand.u32 %v256, 511
    %v385 = vand.u32 %v257, 511
    %v386 = vand.u32 %v258, 511
    %v387 = vand.u32 %v259, 511
    %v388 = vand.u32 %v260, 511
    %v389 = vand.u32 %v261, 511
    %v390 = vand.u32 %v262, 511
    %v391 = vand.u32 %v263, 511
    %v392 = vand.u32 %v264, 511
    %v393 = vand.u32 %v265, 511
    %v394 = vand.u32 %v266, 511
    %v395 = vand.u32 %v267, 511
    %v396 = vand.u32 %v268, 511
    %v397 = vand.u32 %v269, 511
    %v398 = vand.u32 %v270, 511
    %v399 = vand.u32 %v271, 511
    %v400 = vand.u32 %v272, 511
    %v401 = vand.u32 %v273, 511
    %v402 = vand.u32 %v274, 511
    %v403 = vand.u32 %v275, 511
    %v404 = vand.u32 %v276, 511
    %v405 = vand.u32 %v277, 511
    %v406 = vand.u32 %v278, 511
    %v407 = vand.u32 %v279, 511
    %v408 = vand.u32 %v280, 511
    %v409 = vlaneseq
    %v410 = vand.u32 %v409, 127
    %vm411 = vcmp.eq.s32.totalorder %v281, 0
    %vm412 = vcmp.eq.s32.totalorder %v282, 0
    %vm413 = vcmp.eq.s32.totalorder %v283, 0
    %vm414 = vcmp.eq.s32.totalorder %v284, 0
    %vm415 = vcmp.eq.s32.totalorder %v285, 0
    %vm416 = vcmp.eq.s32.totalorder %v286, 0
    %vm417 = vcmp.eq.s32.totalorder %v287, 0
    %vm418 = vcmp.eq.s32.totalorder %v288, 0
    %vm419 = vcmp.eq.s32.totalorder %v289, 0
    %vm420 = vcmp.eq.s32.totalorder %v290, 0
    %vm421 = vcmp.eq.s32.totalorder %v291, 0
    %vm422 = vcmp.eq.s32.totalorder %v292, 0
    %vm423 = vcmp.eq.s32.totalorder %v293, 0
    %vm424 = vcmp.eq.s32.totalorder %v294, 0
    %vm425 = vcmp.eq.s32.totalorder %v295, 0
    %vm426 = vcmp.eq.s32.totalorder %v296, 0
    %vm427 = vcmp.eq.s32.totalorder %v297, 0
    %vm428 = vcmp.eq.s32.totalorder %v298, 0
    %vm429 = vcmp.eq.s32.totalorder %v299, 0
    %vm430 = vcmp.eq.s32.totalorder %v300, 0
    %vm431 = vcmp.eq.s32.totalorder %v301, 0
    %vm432 = vcmp.eq.s32.totalorder %v302, 0
    %vm433 = vcmp.eq.s32.totalorder %v303, 0
    %vm434 = vcmp.eq.s32.totalorder %v304, 0
    %vm435 = vcmp.eq.s32.totalorder %v305, 0
    %vm436 = vcmp.eq.s32.totalorder %v306, 0
    %vm437 = vcmp.eq.s32.totalorder %v307, 0
    %vm438 = vcmp.eq.s32.totalorder %v308, 0
    %vm439 = vcmp.eq.s32.totalorder %v309, 0
    %vm440 = vcmp.eq.s32.totalorder %v310, 0
    %vm441 = vcmp.eq.s32.totalorder %v311, 0
    %vm442 = vcmp.eq.s32.totalorder %v312, 0
    %vm443 = vcmp.eq.s32.totalorder %v313, 0
    %vm444 = vcmp.eq.s32.totalorder %v314, 0
    %vm445 = vcmp.eq.s32.totalorder %v315, 0
    %vm446 = vcmp.eq.s32.totalorder %v316, 0
    %vm447 = vcmp.eq.s32.totalorder %v317, 0
    %vm448 = vcmp.eq.s32.totalorder %v318, 0
    %vm449 = vcmp.eq.s32.totalorder %v319, 0
    %vm450 = vcmp.eq.s32.totalorder %v320, 0
    %vm451 = vcmp.eq.s32.totalorder %v321, 0
    %vm452 = vcmp.eq.s32.totalorder %v322, 0
    %vm453 = vcmp.eq.s32.totalorder %v323, 0
    %vm454 = vcmp.eq.s32.totalorder %v324, 0
    %vm455 = vcmp.eq.s32.totalorder %v325, 0
    %vm456 = vcmp.eq.s32.totalorder %v326, 0
    %vm457 = vcmp.eq.s32.totalorder %v327, 0
    %vm458 = vcmp.eq.s32.totalorder %v328, 0
    %vm459 = vcmp.eq.s32.totalorder %v329, 0
    %vm460 = vcmp.eq.s32.totalorder %v330, 0
    %vm461 = vcmp.eq.s32.totalorder %v331, 0
    %vm462 = vcmp.eq.s32.totalorder %v332, 0
    %vm463 = vcmp.eq.s32.totalorder %v333, 0
    %vm464 = vcmp.eq.s32.totalorder %v334, 0
    %vm465 = vcmp.eq.s32.totalorder %v335, 0
    %vm466 = vcmp.eq.s32.totalorder %v336, 0
    %vm467 = vcmp.eq.s32.totalorder %v337, 0
    %vm468 = vcmp.eq.s32.totalorder %v338, 0
    %vm469 = vcmp.eq.s32.totalorder %v339, 0
    %vm470 = vcmp.eq.s32.totalorder %v340, 0
    %vm471 = vcmp.eq.s32.totalorder %v341, 0
    %vm472 = vcmp.eq.s32.totalorder %v342, 0
    %vm473 = vcmp.eq.s32.totalorder %v343, 0
    %vm474 = vcmp.eq.s32.totalorder %v344, 0
    %vm475 = vcmp.eq.s32.totalorder %v345, 0
    %vm476 = vcmp.eq.s32.totalorder %v346, 0
    %vm477 = vcmp.eq.s32.totalorder %v347, 0
    %vm478 = vcmp.eq.s32.totalorder %v348, 0
    %vm479 = vcmp.eq.s32.totalorder %v349, 0
    %vm480 = vcmp.eq.s32.totalorder %v350, 0
    %vm481 = vcmp.eq.s32.totalorder %v351, 0
    %vm482 = vcmp.eq.s32.totalorder %v352, 0
    %vm483 = vcmp.eq.s32.totalorder %v353, 0
    %vm484 = vcmp.eq.s32.totalorder %v354, 0
    %vm485 = vcmp.eq.s32.totalorder %v355, 0
    %vm486 = vcmp.eq.s32.totalorder %v356, 0
    %vm487 = vcmp.eq.s32.totalorder %v357, 0
    %vm488 = vcmp.eq.s32.totalorder %v358, 0
    %vm489 = vcmp.eq.s32.totalorder %v359, 0
    %vm490 = vcmp.eq.s32.totalorder %v360, 0
    %vm491 = vcmp.eq.s32.totalorder %v361, 0
    %vm492 = vcmp.eq.s32.totalorder %v362, 0
    %vm493 = vcmp.eq.s32.totalorder %v363, 0
    %vm494 = vcmp.eq.s32.totalorder %v364, 0
    %vm495 = vcmp.eq.s32.totalorder %v365, 0
    %vm496 = vcmp.eq.s32.totalorder %v366, 0
    %vm497 = vcmp.eq.s32.totalorder %v367, 0
    %vm498 = vcmp.eq.s32.totalorder %v368, 0
    %vm499 = vcmp.eq.s32.totalorder %v369, 0
    %vm500 = vcmp.eq.s32.totalorder %v370, 0
    %vm501 = vcmp.eq.s32.totalorder %v371, 0
    %vm502 = vcmp.eq.s32.totalorder %v372, 0
    %vm503 = vcmp.eq.s32.totalorder %v373, 0
    %vm504 = vcmp.eq.s32.totalorder %v374, 0
    %vm505 = vcmp.eq.s32.totalorder %v375, 0
    %vm506 = vcmp.eq.s32.totalorder %v376, 0
    %vm507 = vcmp.eq.s32.totalorder %v377, 0
    %vm508 = vcmp.eq.s32.totalorder %v378, 0
    %vm509 = vcmp.eq.s32.totalorder %v379, 0
    %vm510 = vcmp.eq.s32.totalorder %v380, 0
    %vm511 = vcmp.eq.s32.totalorder %v381, 0
    %vm512 = vcmp.eq.s32.totalorder %v382, 0
    %vm513 = vcmp.eq.s32.totalorder %v383, 0
    %vm514 = vcmp.eq.s32.totalorder %v384, 0
    %vm515 = vcmp.eq.s32.totalorder %v385, 0
    %vm516 = vcmp.eq.s32.totalorder %v386, 0
    %vm517 = vcmp.eq.s32.totalorder %v387, 0
    %vm518 = vcmp.eq.s32.totalorder %v388, 0
    %vm519 = vcmp.eq.s32.totalorder %v389, 0
    %vm520 = vcmp.eq.s32.totalorder %v390, 0
    %vm521 = vcmp.eq.s32.totalorder %v391, 0
    %vm522 = vcmp.eq.s32.totalorder %v392, 0
    %vm523 = vcmp.eq.s32.totalorder %v393, 0
    %vm524 = vcmp.eq.s32.totalorder %v394, 0
    %vm525 = vcmp.eq.s32.totalorder %v395, 0
    %vm526 = vcmp.eq.s32.totalorder %v396, 0
    %vm527 = vcmp.eq.s32.totalorder %v397, 0
    %vm528 = vcmp.eq.s32.totalorder %v398, 0
    %vm529 = vcmp.eq.s32.totalorder %v399, 0
    %vm530 = vcmp.eq.s32.totalorder %v400, 0
    %vm531 = vcmp.eq.s32.totalorder %v401, 0
    %vm532 = vcmp.eq.s32.totalorder %v402, 0
    %vm533 = vcmp.eq.s32.totalorder %v403, 0
    %vm534 = vcmp.eq.s32.totalorder %v404, 0
    %vm535 = vcmp.eq.s32.totalorder %v405, 0
    %vm536 = vcmp.eq.s32.totalorder %v406, 0
    %vm537 = vcmp.eq.s32.totalorder %v407, 0
    %vm538 = vcmp.eq.s32.totalorder %v408, 0
    %vm539 = vcmp.lt.s32.totalorder %v410, 32
    %vm540 = vmand %vm411, %vm539
    %vm541 = vmand %vm412, %vm539
    %vm542 = vmand %vm413, %vm539
    %vm543 = vmand %vm414, %vm539
    %vm544 = vmand %vm415, %vm539
    %vm545 = vmand %vm416, %vm539
    %vm546 = vmand %vm417, %vm539
    %vm547 = vmand %vm418, %vm539
    %vm548 = vmand %vm419, %vm539
    %vm549 = vmand %vm420, %vm539
    %vm550 = vmand %vm421, %vm539
    %vm551 = vmand %vm422, %vm539
    %vm552 = vmand %vm423, %vm539
    %vm553 = vmand %vm424, %vm539
    %vm554 = vmand %vm425, %vm539
    %vm555 = vmand %vm426, %vm539
    %vm556 = vmand %vm427, %vm539
    %vm557 = vmand %vm428, %vm539
    %vm558 = vmand %vm429, %vm539
    %vm559 = vmand %vm430, %vm539
    %vm560 = vmand %vm431, %vm539
    %vm561 = vmand %vm432, %vm539
    %vm562 = vmand %vm433, %vm539
    %vm563 = vmand %vm434, %vm539
    %vm564 = vmand %vm435, %vm539
    %vm565 = vmand %vm436, %vm539
    %vm566 = vmand %vm437, %vm539
    %vm567 = vmand %vm438, %vm539
    %vm568 = vmand %vm439, %vm539
    %vm569 = vmand %vm440, %vm539
    %vm570 = vmand %vm441, %vm539
    %vm571 = vmand %vm442, %vm539
    %vm572 = vmand %vm443, %vm539
    %vm573 = vmand %vm444, %vm539
    %vm574 = vmand %vm445, %vm539
    %vm575 = vmand %vm446, %vm539
    %vm576 = vmand %vm447, %vm539
    %vm577 = vmand %vm448, %vm539
    %vm578 = vmand %vm449, %vm539
    %vm579 = vmand %vm450, %vm539
    %vm580 = vmand %vm451, %vm539
    %vm581 = vmand %vm452, %vm539
    %vm582 = vmand %vm453, %vm539
    %vm583 = vmand %vm454, %vm539
    %vm584 = vmand %vm455, %vm539
    %vm585 = vmand %vm456, %vm539
    %vm586 = vmand %vm457, %vm539
    %vm587 = vmand %vm458, %vm539
    %vm588 = vmand %vm459, %vm539
    %vm589 = vmand %vm460, %vm539
    %vm590 = vmand %vm461, %vm539
    %vm591 = vmand %vm462, %vm539
    %vm592 = vmand %vm463, %vm539
    %vm593 = vmand %vm464, %vm539
    %vm594 = vmand %vm465, %vm539
    %vm595 = vmand %vm466, %vm539
    %vm596 = vmand %vm467, %vm539
    %vm597 = vmand %vm468, %vm539
    %vm598 = vmand %vm469, %vm539
    %vm599 = vmand %vm470, %vm539
    %vm600 = vmand %vm471, %vm539
    %vm601 = vmand %vm472, %vm539
    %vm602 = vmand %vm473, %vm539
    %vm603 = vmand %vm474, %vm539
    %vm604 = vmand %vm475, %vm539
    %vm605 = vmand %vm476, %vm539
    %vm606 = vmand %vm477, %vm539
    %vm607 = vmand %vm478, %vm539
    %vm608 = vmand %vm479, %vm539
    %vm609 = vmand %vm480, %vm539
    %vm610 = vmand %vm481, %vm539
    %vm611 = vmand %vm482, %vm539
    %vm612 = vmand %vm483, %vm539
    %vm613 = vmand %vm484, %vm539
    %vm614 = vmand %vm485, %vm539
    %vm615 = vmand %vm486, %vm539
    %vm616 = vmand %vm487, %vm539
    %vm617 = vmand %vm488, %vm539
    %vm618 = vmand %vm489, %vm539
    %vm619 = vmand %vm490, %vm539
    %vm620 = vmand %vm491, %vm539
    %vm621 = vmand %vm492, %vm539
    %vm622 = vmand %vm493, %vm539
    %vm623 = vmand %vm494, %vm539
    %vm624 = vmand %vm495, %vm539
    %vm625 = vmand %vm496, %vm539
    %vm626 = vmand %vm497, %vm539
    %vm627 = vmand %vm498, %vm539
    %vm628 = vmand %vm499, %vm539
    %vm629 = vmand %vm500, %vm539
    %vm630 = vmand %vm501, %vm539
    %vm631 = vmand %vm502, %vm539
    %vm632 = vmand %vm503, %vm539
    %vm633 = vmand %vm504, %vm539
    %vm634 = vmand %vm505, %vm539
    %vm635 = vmand %vm506, %vm539
    %vm636 = vmand %vm507, %vm539
    %vm637 = vmand %vm508, %vm539
    %vm638 = vmand %vm509, %vm539
    %vm639 = vmand %vm510, %vm539
    %vm640 = vmand %vm511, %vm539
    %vm641 = vmand %vm512, %vm539
    %vm642 = vmand %vm513, %vm539
    %vm643 = vmand %vm514, %vm539
    %vm644 = vmand %vm515, %vm539
    %vm645 = vmand %vm516, %vm539
    %vm646 = vmand %vm517, %vm539
    %vm647 = vmand %vm518, %vm539
    %vm648 = vmand %vm519, %vm539
    %vm649 = vmand %vm520, %vm539
    %vm650 = vmand %vm521, %vm539
    %vm651 = vmand %vm522, %vm539
    %vm652 = vmand %vm523, %vm539
    %vm653 = vmand %vm524, %vm539
    %vm654 = vmand %vm525, %vm539
    %vm655 = vmand %vm526, %vm539
    %vm656 = vmand %vm527, %vm539
    %vm657 = vmand %vm528, %vm539
    %vm658 = vmand %vm529, %vm539
    %vm659 = vmand %vm530, %vm539
    %vm660 = vmand %vm531, %vm539
    %vm661 = vmand %vm532, %vm539
    %vm662 = vmand %vm533, %vm539
    %vm663 = vmand %vm534, %vm539
    %vm664 = vmand %vm535, %vm539
    %vm665 = vmand %vm536, %vm539
    %vm666 = vmand %vm537, %vm539
    %vm667 = vmand %vm538, %vm539
    %vm668 = vcmp.eq.s32.totalorder %v281, 499
    %vm669 = vcmp.eq.s32.totalorder %v282, 499
    %vm670 = vcmp.eq.s32.totalorder %v283, 499
    %vm671 = vcmp.eq.s32.totalorder %v284, 499
    %vm672 = vcmp.eq.s32.totalorder %v285, 499
    %vm673 = vcmp.eq.s32.totalorder %v286, 499
    %vm674 = vcmp.eq.s32.totalorder %v287, 499
    %vm675 = vcmp.eq.s32.totalorder %v288, 499
    %vm676 = vcmp.eq.s32.totalorder %v289, 499
    %vm677 = vcmp.eq.s32.totalorder %v290, 499
    %vm678 = vcmp.eq.s32.totalorder %v291, 499
    %vm679 = vcmp.eq.s32.totalorder %v292, 499
    %vm680 = vcmp.eq.s32.totalorder %v293, 499
    %vm681 = vcmp.eq.s32.totalorder %v294, 499
    %vm682 = vcmp.eq.s32.totalorder %v295, 499
    %vm683 = vcmp.eq.s32.totalorder %v296, 499
    %vm684 = vcmp.eq.s32.totalorder %v297, 499
    %vm685 = vcmp.eq.s32.totalorder %v298, 499
    %vm686 = vcmp.eq.s32.totalorder %v299, 499
    %vm687 = vcmp.eq.s32.totalorder %v300, 499
    %vm688 = vcmp.eq.s32.totalorder %v301, 499
    %vm689 = vcmp.eq.s32.totalorder %v302, 499
    %vm690 = vcmp.eq.s32.totalorder %v303, 499
    %vm691 = vcmp.eq.s32.totalorder %v304, 499
    %vm692 = vcmp.eq.s32.totalorder %v305, 499
    %vm693 = vcmp.eq.s32.totalorder %v306, 499
    %vm694 = vcmp.eq.s32.totalorder %v307, 499
    %vm695 = vcmp.eq.s32.totalorder %v308, 499
    %vm696 = vcmp.eq.s32.totalorder %v309, 499
    %vm697 = vcmp.eq.s32.totalorder %v310, 499
    %vm698 = vcmp.eq.s32.totalorder %v311, 499
    %vm699 = vcmp.eq.s32.totalorder %v312, 499
    %vm700 = vcmp.eq.s32.totalorder %v313, 499
    %vm701 = vcmp.eq.s32.totalorder %v314, 499
    %vm702 = vcmp.eq.s32.totalorder %v315, 499
    %vm703 = vcmp.eq.s32.totalorder %v316, 499
    %vm704 = vcmp.eq.s32.totalorder %v317, 499
    %vm705 = vcmp.eq.s32.totalorder %v318, 499
    %vm706 = vcmp.eq.s32.totalorder %v319, 499
    %vm707 = vcmp.eq.s32.totalorder %v320, 499
    %vm708 = vcmp.eq.s32.totalorder %v321, 499
    %vm709 = vcmp.eq.s32.totalorder %v322, 499
    %vm710 = vcmp.eq.s32.totalorder %v323, 499
    %vm711 = vcmp.eq.s32.totalorder %v324, 499
    %vm712 = vcmp.eq.s32.totalorder %v325, 499
    %vm713 = vcmp.eq.s32.totalorder %v326, 499
    %vm714 = vcmp.eq.s32.totalorder %v327, 499
    %vm715 = vcmp.eq.s32.totalorder %v328, 499
    %vm716 = vcmp.eq.s32.totalorder %v329, 499
    %vm717 = vcmp.eq.s32.totalorder %v330, 499
    %vm718 = vcmp.eq.s32.totalorder %v331, 499
    %vm719 = vcmp.eq.s32.totalorder %v332, 499
    %vm720 = vcmp.eq.s32.totalorder %v333, 499
    %vm721 = vcmp.eq.s32.totalorder %v334, 499
    %vm722 = vcmp.eq.s32.totalorder %v335, 499
    %vm723 = vcmp.eq.s32.totalorder %v336, 499
    %vm724 = vcmp.eq.s32.totalorder %v337, 499
    %vm725 = vcmp.eq.s32.totalorder %v338, 499
    %vm726 = vcmp.eq.s32.totalorder %v339, 499
    %vm727 = vcmp.eq.s32.totalorder %v340, 499
    %vm728 = vcmp.eq.s32.totalorder %v341, 499
    %vm729 = vcmp.eq.s32.totalorder %v342, 499
    %vm730 = vcmp.eq.s32.totalorder %v343, 499
    %vm731 = vcmp.eq.s32.totalorder %v344, 499
    %vm732 = vcmp.eq.s32.totalorder %v345, 499
    %vm733 = vcmp.eq.s32.totalorder %v346, 499
    %vm734 = vcmp.eq.s32.totalorder %v347, 499
    %vm735 = vcmp.eq.s32.totalorder %v348, 499
    %vm736 = vcmp.eq.s32.totalorder %v349, 499
    %vm737 = vcmp.eq.s32.totalorder %v350, 499
    %vm738 = vcmp.eq.s32.totalorder %v351, 499
    %vm739 = vcmp.eq.s32.totalorder %v352, 499
    %vm740 = vcmp.eq.s32.totalorder %v353, 499
    %vm741 = vcmp.eq.s32.totalorder %v354, 499
    %vm742 = vcmp.eq.s32.totalorder %v355, 499
    %vm743 = vcmp.eq.s32.totalorder %v356, 499
    %vm744 = vcmp.eq.s32.totalorder %v357, 499
    %vm745 = vcmp.eq.s32.totalorder %v358, 499
    %vm746 = vcmp.eq.s32.totalorder %v359, 499
    %vm747 = vcmp.eq.s32.totalorder %v360, 499
    %vm748 = vcmp.eq.s32.totalorder %v361, 499
    %vm749 = vcmp.eq.s32.totalorder %v362, 499
    %vm750 = vcmp.eq.s32.totalorder %v363, 499
    %vm751 = vcmp.eq.s32.totalorder %v364, 499
    %vm752 = vcmp.eq.s32.totalorder %v365, 499
    %vm753 = vcmp.eq.s32.totalorder %v366, 499
    %vm754 = vcmp.eq.s32.totalorder %v367, 499
    %vm755 = vcmp.eq.s32.totalorder %v368, 499
    %vm756 = vcmp.eq.s32.totalorder %v369, 499
    %vm757 = vcmp.eq.s32.totalorder %v370, 499
    %vm758 = vcmp.eq.s32.totalorder %v371, 499
    %vm759 = vcmp.eq.s32.totalorder %v372, 499
    %vm760 = vcmp.eq.s32.totalorder %v373, 499
    %vm761 = vcmp.eq.s32.totalorder %v374, 499
    %vm762 = vcmp.eq.s32.totalorder %v375, 499
    %vm763 = vcmp.eq.s32.totalorder %v376, 499
    %vm764 = vcmp.eq.s32.totalorder %v377, 499
    %vm765 = vcmp.eq.s32.totalorder %v378, 499
    %vm766 = vcmp.eq.s32.totalorder %v379, 499
    %vm767 = vcmp.eq.s32.totalorder %v380, 499
    %vm768 = vcmp.eq.s32.totalorder %v381, 499
    %vm769 = vcmp.eq.s32.totalorder %v382, 499
    %vm770 = vcmp.eq.s32.totalorder %v383, 499
    %vm771 = vcmp.eq.s32.totalorder %v384, 499
    %vm772 = vcmp.eq.s32.totalorder %v385, 499
    %vm773 = vcmp.eq.s32.totalorder %v386, 499
    %vm774 = vcmp.eq.s32.totalorder %v387, 499
    %vm775 = vcmp.eq.s32.totalorder %v388, 499
    %vm776 = vcmp.eq.s32.totalorder %v389, 499
    %vm777 = vcmp.eq.s32.totalorder %v390, 499
    %vm778 = vcmp.eq.s32.totalorder %v391, 499
    %vm779 = vcmp.eq.s32.totalorder %v392, 499
    %vm780 = vcmp.eq.s32.totalorder %v393, 499
    %vm781 = vcmp.eq.s32.totalorder %v394, 499
    %vm782 = vcmp.eq.s32.totalorder %v395, 499
    %vm783 = vcmp.eq.s32.totalorder %v396, 499
    %vm784 = vcmp.eq.s32.totalorder %v397, 499
    %vm785 = vcmp.eq.s32.totalorder %v398, 499
    %vm786 = vcmp.eq.s32.totalorder %v399, 499
    %vm787 = vcmp.eq.s32.totalorder %v400, 499
    %vm788 = vcmp.eq.s32.totalorder %v401, 499
    %vm789 = vcmp.eq.s32.totalorder %v402, 499
    %vm790 = vcmp.eq.s32.totalorder %v403, 499
    %vm791 = vcmp.eq.s32.totalorder %v404, 499
    %vm792 = vcmp.eq.s32.totalorder %v405, 499
    %vm793 = vcmp.eq.s32.totalorder %v406, 499
    %vm794 = vcmp.eq.s32.totalorder %v407, 499
    %vm795 = vcmp.eq.s32.totalorder %v408, 499
    %vm796 = vcmp.ge.s32.totalorder %v410, 96
    %vm797 = vmand %vm668, %vm796
    %vm798 = vmand %vm669, %vm796
    %vm799 = vmand %vm670, %vm796
    %vm800 = vmand %vm671, %vm796
    %vm801 = vmand %vm672, %vm796
    %vm802 = vmand %vm673, %vm796
    %vm803 = vmand %vm674, %vm796
    %vm804 = vmand %vm675, %vm796
    %vm805 = vmand %vm676, %vm796
    %vm806 = vmand %vm677, %vm796
    %vm807 = vmand %vm678, %vm796
    %vm808 = vmand %vm679, %vm796
    %vm809 = vmand %vm680, %vm796
    %vm810 = vmand %vm681, %vm796
    %vm811 = vmand %vm682, %vm796
    %vm812 = vmand %vm683, %vm796
    %vm813 = vmand %vm684, %vm796
    %vm814 = vmand %vm685, %vm796
    %vm815 = vmand %vm686, %vm796
    %vm816 = vmand %vm687, %vm796
    %vm817 = vmand %vm688, %vm796
    %vm818 = vmand %vm689, %vm796
    %vm819 = vmand %vm690, %vm796
    %vm820 = vmand %vm691, %vm796
    %vm821 = vmand %vm692, %vm796
    %vm822 = vmand %vm693, %vm796
    %vm823 = vmand %vm694, %vm796
    %vm824 = vmand %vm695, %vm796
    %vm825 = vmand %vm696, %vm796
    %vm826 = vmand %vm697, %vm796
    %vm827 = vmand %vm698, %vm796
    %vm828 = vmand %vm699, %vm796
    %vm829 = vmand %vm700, %vm796
    %vm830 = vmand %vm701, %vm796
    %vm831 = vmand %vm702, %vm796
    %vm832 = vmand %vm703, %vm796
    %vm833 = vmand %vm704, %vm796
    %vm834 = vmand %vm705, %vm796
    %vm835 = vmand %vm706, %vm796
    %vm836 = vmand %vm707, %vm796
    %vm837 = vmand %vm708, %vm796
    %vm838 = vmand %vm709, %vm796
    %vm839 = vmand %vm710, %vm796
    %vm840 = vmand %vm711, %vm796
    %vm841 = vmand %vm712, %vm796
    %vm842 = vmand %vm713, %vm796
    %vm843 = vmand %vm714, %vm796
    %vm844 = vmand %vm715, %vm796
    %vm845 = vmand %vm716, %vm796
    %vm846 = vmand %vm717, %vm796
    %vm847 = vmand %vm718, %vm796
    %vm848 = vmand %vm719, %vm796
    %vm849 = vmand %vm720, %vm796
    %vm850 = vmand %vm721, %vm796
    %vm851 = vmand %vm722, %vm796
    %vm852 = vmand %vm723, %vm796
    %vm853 = vmand %vm724, %vm796
    %vm854 = vmand %vm725, %vm796
    %vm855 = vmand %vm726, %vm796
    %vm856 = vmand %vm727, %vm796
    %vm857 = vmand %vm728, %vm796
    %vm858 = vmand %vm729, %vm796
    %vm859 = vmand %vm730, %vm796
    %vm860 = vmand %vm731, %vm796
    %vm861 = vmand %vm732, %vm796
    %vm862 = vmand %vm733, %vm796
    %vm863 = vmand %vm734, %vm796
    %vm864 = vmand %vm735, %vm796
    %vm865 = vmand %vm736, %vm796
    %vm866 = vmand %vm737, %vm796
    %vm867 = vmand %vm738, %vm796
    %vm868 = vmand %vm739, %vm796
    %vm869 = vmand %vm740, %vm796
    %vm870 = vmand %vm741, %vm796
    %vm871 = vmand %vm742, %vm796
    %vm872 = vmand %vm743, %vm796
    %vm873 = vmand %vm744, %vm796
    %vm874 = vmand %vm745, %vm796
    %vm875 = vmand %vm746, %vm796
    %vm876 = vmand %vm747, %vm796
    %vm877 = vmand %vm748, %vm796
    %vm878 = vmand %vm749, %vm796
    %vm879 = vmand %vm750, %vm796
    %vm880 = vmand %vm751, %vm796
    %vm881 = vmand %vm752, %vm796
    %vm882 = vmand %vm753, %vm796
    %vm883 = vmand %vm754, %vm796
    %vm884 = vmand %vm755, %vm796
    %vm885 = vmand %vm756, %vm796
    %vm886 = vmand %vm757, %vm796
    %vm887 = vmand %vm758, %vm796
    %vm888 = vmand %vm759, %vm796
    %vm889 = vmand %vm760, %vm796
    %vm890 = vmand %vm761, %vm796
    %vm891 = vmand %vm762, %vm796
    %vm892 = vmand %vm763, %vm796
    %vm893 = vmand %vm764, %vm796
    %vm894 = vmand %vm765, %vm796
    %vm895 = vmand %vm766, %vm796
    %vm896 = vmand %vm767, %vm796
    %vm897 = vmand %vm768, %vm796
    %vm898 = vmand %vm769, %vm796
    %vm899 = vmand %vm770, %vm796
    %vm900 = vmand %vm771, %vm796
    %vm901 = vmand %vm772, %vm796
    %vm902 = vmand %vm773, %vm796
    %vm903 = vmand %vm774, %vm796
    %vm904 = vmand %vm775, %vm796
    %vm905 = vmand %vm776, %vm796
    %vm906 = vmand %vm777, %vm796
    %vm907 = vmand %vm778, %vm796
    %vm908 = vmand %vm779, %vm796
    %vm909 = vmand %vm780, %vm796
    %vm910 = vmand %vm781, %vm796
    %vm911 = vmand %vm782, %vm796
    %vm912 = vmand %vm783, %vm796
    %vm913 = vmand %vm784, %vm796
    %vm914 = vmand %vm785, %vm796
    %vm915 = vmand %vm786, %vm796
    %vm916 = vmand %vm787, %vm796
    %vm917 = vmand %vm788, %vm796
    %vm918 = vmand %vm789, %vm796
    %vm919 = vmand %vm790, %vm796
    %vm920 = vmand %vm791, %vm796
    %vm921 = vmand %vm792, %vm796
    %vm922 = vmand %vm793, %vm796
    %vm923 = vmand %vm794, %vm796
    %vm924 = vmand %vm795, %vm796
    %vm925 = vmor %vm540, %vm797
    %vm926 = vmor %vm541, %vm798
    %vm927 = vmor %vm542, %vm799
    %vm928 = vmor %vm543, %vm800
    %vm929 = vmor %vm544, %vm801
    %vm930 = vmor %vm545, %vm802
    %vm931 = vmor %vm546, %vm803
    %vm932 = vmor %vm547, %vm804
    %vm933 = vmor %vm548, %vm805
    %vm934 = vmor %vm549, %vm806
    %vm935 = vmor %vm550, %vm807
    %vm936 = vmor %vm551, %vm808
    %vm937 = vmor %vm552, %vm809
    %vm938 = vmor %vm553, %vm810
    %vm939 = vmor %vm554, %vm811
    %vm940 = vmor %vm555, %vm812
    %vm941 = vmor %vm556, %vm813
    %vm942 = vmor %vm557, %vm814
    %vm943 = vmor %vm558, %vm815
    %vm944 = vmor %vm559, %vm816
    %vm945 = vmor %vm560, %vm817
    %vm946 = vmor %vm561, %vm818
    %vm947 = vmor %vm562, %vm819
    %vm948 = vmor %vm563, %vm820
    %vm949 = vmor %vm564, %vm821
    %vm950 = vmor %vm565, %vm822
    %vm951 = vmor %vm566, %vm823
    %vm952 = vmor %vm567, %vm824
    %vm953 = vmor %vm568, %vm825
    %vm954 = vmor %vm569, %vm826
    %vm955 = vmor %vm570, %vm827
    %vm956 = vmor %vm571, %vm828
    %vm957 = vmor %vm572, %vm829
    %vm958 = vmor %vm573, %vm830
    %vm959 = vmor %vm574, %vm831
    %vm960 = vmor %vm575, %vm832
    %vm961 = vmor %vm576, %vm833
    %vm962 = vmor %vm577, %vm834
    %vm963 = vmor %vm578, %vm835
    %vm964 = vmor %vm579, %vm836
    %vm965 = vmor %vm580, %vm837
    %vm966 = vmor %vm581, %vm838
    %vm967 = vmor %vm582, %vm839
    %vm968 = vmor %vm583, %vm840
    %vm969 = vmor %vm584, %vm841
    %vm970 = vmor %vm585, %vm842
    %vm971 = vmor %vm586, %vm843
    %vm972 = vmor %vm587, %vm844
    %vm973 = vmor %vm588, %vm845
    %vm974 = vmor %vm589, %vm846
    %vm975 = vmor %vm590, %vm847
    %vm976 = vmor %vm591, %vm848
    %vm977 = vmor %vm592, %vm849
    %vm978 = vmor %vm593, %vm850
    %vm979 = vmor %vm594, %vm851
    %vm980 = vmor %vm595, %vm852
    %vm981 = vmor %vm596, %vm853
    %vm982 = vmor %vm597, %vm854
    %vm983 = vmor %vm598, %vm855
    %vm984 = vmor %vm599, %vm856
    %vm985 = vmor %vm600, %vm857
    %vm986 = vmor %vm601, %vm858
    %vm987 = vmor %vm602, %vm859
    %vm988 = vmor %vm603, %vm860
    %vm989 = vmor %vm604, %vm861
    %vm990 = vmor %vm605, %vm862
    %vm991 = vmor %vm606, %vm863
    %vm992 = vmor %vm607, %vm864
    %vm993 = vmor %vm608, %vm865
    %vm994 = vmor %vm609, %vm866
    %vm995 = vmor %vm610, %vm867
    %vm996 = vmor %vm611, %vm868
    %vm997 = vmor %vm612, %vm869
    %vm998 = vmor %vm613, %vm870
    %vm999 = vmor %vm614, %vm871
    %vm1000 = vmor %vm615, %vm872
    %vm1001 = vmor %vm616, %vm873
    %vm1002 = vmor %vm617, %vm874
    %vm1003 = vmor %vm618, %vm875
    %vm1004 = vmor %vm619, %vm876
    %vm1005 = vmor %vm620, %vm877
    %vm1006 = vmor %vm621, %vm878
    %vm1007 = vmor %vm622, %vm879
    %vm1008 = vmor %vm623, %vm880
    %vm1009 = vmor %vm624, %vm881
    %vm1010 = vmor %vm625, %vm882
    %vm1011 = vmor %vm626, %vm883
    %vm1012 = vmor %vm627, %vm884
    %vm1013 = vmor %vm628, %vm885
    %vm1014 = vmor %vm629, %vm886
    %vm1015 = vmor %vm630, %vm887
    %vm1016 = vmor %vm631, %vm888
    %vm1017 = vmor %vm632, %vm889
    %vm1018 = vmor %vm633, %vm890
    %vm1019 = vmor %vm634, %vm891
    %vm1020 = vmor %vm635, %vm892
    %vm1021 = vmor %vm636, %vm893
    %vm1022 = vmor %vm637, %vm894
    %vm1023 = vmor %vm638, %vm895
    %vm1024 = vmor %vm639, %vm896
    %vm1025 = vmor %vm640, %vm897
    %vm1026 = vmor %vm641, %vm898
    %vm1027 = vmor %vm642, %vm899
    %vm1028 = vmor %vm643, %vm900
    %vm1029 = vmor %vm644, %vm901
    %vm1030 = vmor %vm645, %vm902
    %vm1031 = vmor %vm646, %vm903
    %vm1032 = vmor %vm647, %vm904
    %vm1033 = vmor %vm648, %vm905
    %vm1034 = vmor %vm649, %vm906
    %vm1035 = vmor %vm650, %vm907
    %vm1036 = vmor %vm651, %vm908
    %vm1037 = vmor %vm652, %vm909
    %vm1038 = vmor %vm653, %vm910
    %vm1039 = vmor %vm654, %vm911
    %vm1040 = vmor %vm655, %vm912
    %vm1041 = vmor %vm656, %vm913
    %vm1042 = vmor %vm657, %vm914
    %vm1043 = vmor %vm658, %vm915
    %vm1044 = vmor %vm659, %vm916
    %vm1045 = vmor %vm660, %vm917
    %vm1046 = vmor %vm661, %vm918
    %vm1047 = vmor %vm662, %vm919
    %vm1048 = vmor %vm663, %vm920
    %vm1049 = vmor %vm664, %vm921
    %vm1050 = vmor %vm665, %vm922
    %vm1051 = vmor %vm666, %vm923
    %vm1052 = vmor %vm667, %vm924
    %v1053 = vsel %vm925, 0.0, 1.0
    %v1054 = vsel %vm926, 0.0, 1.0
    %v1055 = vsel %vm927, 0.0, 1.0
    %v1056 = vsel %vm928, 0.0, 1.0
    %v1057 = vsel %vm929, 0.0, 1.0
    %v1058 = vsel %vm930, 0.0, 1.0
    %v1059 = vsel %vm931, 0.0, 1.0
    %v1060 = vsel %vm932, 0.0, 1.0
    %v1061 = vsel %vm933, 0.0, 1.0
    %v1062 = vsel %vm934, 0.0, 1.0
    %v1063 = vsel %vm935, 0.0, 1.0
    %v1064 = vsel %vm936, 0.0, 1.0
    %v1065 = vsel %vm937, 0.0, 1.0
    %v1066 = vsel %vm938, 0.0, 1.0
    %v1067 = vsel %vm939, 0.0, 1.0
    %v1068 = vsel %vm940, 0.0, 1.0
    %v1069 = vsel %vm941, 0.0, 1.0
    %v1070 = vsel %vm942, 0.0, 1.0
    %v1071 = vsel %vm943, 0.0, 1.0
    %v1072 = vsel %vm944, 0.0, 1.0
    %v1073 = vsel %vm945, 0.0, 1.0
    %v1074 = vsel %vm946, 0.0, 1.0
    %v1075 = vsel %vm947, 0.0, 1.0
    %v1076 = vsel %vm948, 0.0, 1.0
    %v1077 = vsel %vm949, 0.0, 1.0
    %v1078 = vsel %vm950, 0.0, 1.0
    %v1079 = vsel %vm951, 0.0, 1.0
    %v1080 = vsel %vm952, 0.0, 1.0
    %v1081 = vsel %vm953, 0.0, 1.0
    %v1082 = vsel %vm954, 0.0, 1.0
    %v1083 = vsel %vm955, 0.0, 1.0
    %v1084 = vsel %vm956, 0.0, 1.0
    %v1085 = vsel %vm957, 0.0, 1.0
    %v1086 = vsel %vm958, 0.0, 1.0
    %v1087 = vsel %vm959, 0.0, 1.0
    %v1088 = vsel %vm960, 0.0, 1.0
    %v1089 = vsel %vm961, 0.0, 1.0
    %v1090 = vsel %vm962, 0.0, 1.0
    %v1091 = vsel %vm963, 0.0, 1.0
    %v1092 = vsel %vm964, 0.0, 1.0
    %v1093 = vsel %vm965, 0.0, 1.0
    %v1094 = vsel %vm966, 0.0, 1.0
    %v1095 = vsel %vm967, 0.0, 1.0
    %v1096 = vsel %vm968, 0.0, 1.0
    %v1097 = vsel %vm969, 0.0, 1.0
    %v1098 = vsel %vm970, 0.0, 1.0
    %v1099 = vsel %vm971, 0.0, 1.0
    %v1100 = vsel %vm972, 0.0, 1.0
    %v1101 = vsel %vm973, 0.0, 1.0
    %v1102 = vsel %vm974, 0.0, 1.0
    %v1103 = vsel %vm975, 0.0, 1.0
    %v1104 = vsel %vm976, 0.0, 1.0
    %v1105 = vsel %vm977, 0.0, 1.0
    %v1106 = vsel %vm978, 0.0, 1.0
    %v1107 = vsel %vm979, 0.0, 1.0
    %v1108 = vsel %vm980, 0.0, 1.0
    %v1109 = vsel %vm981, 0.0, 1.0
    %v1110 = vsel %vm982, 0.0, 1.0
    %v1111 = vsel %vm983, 0.0, 1.0
    %v1112 = vsel %vm984, 0.0, 1.0
    %v1113 = vsel %vm985, 0.0, 1.0
    %v1114 = vsel %vm986, 0.0, 1.0
    %v1115 = vsel %vm987, 0.0, 1.0
    %v1116 = vsel %vm988, 0.0, 1.0
    %v1117 = vsel %vm989, 0.0, 1.0
    %v1118 = vsel %vm990, 0.0, 1.0
    %v1119 = vsel %vm991, 0.0, 1.0
    %v1120 = vsel %vm992, 0.0, 1.0
    %v1121 = vsel %vm993, 0.0, 1.0
    %v1122 = vsel %vm994, 0.0, 1.0
    %v1123 = vsel %vm995, 0.0, 1.0
    %v1124 = vsel %vm996, 0.0, 1.0
    %v1125 = vsel %vm997, 0.0, 1.0
    %v1126 = vsel %vm998, 0.0, 1.0
    %v1127 = vsel %vm999, 0.0, 1.0
    %v1128 = vsel %vm1000, 0.0, 1.0
    %v1129 = vsel %vm1001, 0.0, 1.0
    %v1130 = vsel %vm1002, 0.0, 1.0
    %v1131 = vsel %vm1003, 0.0, 1.0
    %v1132 = vsel %vm1004, 0.0, 1.0
    %v1133 = vsel %vm1005, 0.0, 1.0
    %v1134 = vsel %vm1006, 0.0, 1.0
    %v1135 = vsel %vm1007, 0.0, 1.0
    %v1136 = vsel %vm1008, 0.0, 1.0
    %v1137 = vsel %vm1009, 0.0, 1.0
    %v1138 = vsel %vm1010, 0.0, 1.0
    %v1139 = vsel %vm1011, 0.0, 1.0
    %v1140 = vsel %vm1012, 0.0, 1.0
    %v1141 = vsel %vm1013, 0.0, 1.0
    %v1142 = vsel %vm1014, 0.0, 1.0
    %v1143 = vsel %vm1015, 0.0, 1.0
    %v1144 = vsel %vm1016, 0.0, 1.0
    %v1145 = vsel %vm1017, 0.0, 1.0
    %v1146 = vsel %vm1018, 0.0, 1.0
    %v1147 = vsel %vm1019, 0.0, 1.0
    %v1148 = vsel %vm1020, 0.0, 1.0
    %v1149 = vsel %vm1021, 0.0, 1.0
    %v1150 = vsel %vm1022, 0.0, 1.0
    %v1151 = vsel %vm1023, 0.0, 1.0
    %v1152 = vsel %vm1024, 0.0, 1.0
    %v1153 = vsel %vm1025, 0.0, 1.0
    %v1154 = vsel %vm1026, 0.0, 1.0
    %v1155 = vsel %vm1027, 0.0, 1.0
    %v1156 = vsel %vm1028, 0.0, 1.0
    %v1157 = vsel %vm1029, 0.0, 1.0
    %v1158 = vsel %vm1030, 0.0, 1.0
    %v1159 = vsel %vm1031, 0.0, 1.0
    %v1160 = vsel %vm1032, 0.0, 1.0
    %v1161 = vsel %vm1033, 0.0, 1.0
    %v1162 = vsel %vm1034, 0.0, 1.0
    %v1163 = vsel %vm1035, 0.0, 1.0
    %v1164 = vsel %vm1036, 0.0, 1.0
    %v1165 = vsel %vm1037, 0.0, 1.0
    %v1166 = vsel %vm1038, 0.0, 1.0
    %v1167 = vsel %vm1039, 0.0, 1.0
    %v1168 = vsel %vm1040, 0.0, 1.0
    %v1169 = vsel %vm1041, 0.0, 1.0
    %v1170 = vsel %vm1042, 0.0, 1.0
    %v1171 = vsel %vm1043, 0.0, 1.0
    %v1172 = vsel %vm1044, 0.0, 1.0
    %v1173 = vsel %vm1045, 0.0, 1.0
    %v1174 = vsel %vm1046, 0.0, 1.0
    %v1175 = vsel %vm1047, 0.0, 1.0
    %v1176 = vsel %vm1048, 0.0, 1.0
    %v1177 = vsel %vm1049, 0.0, 1.0
    %v1178 = vsel %vm1050, 0.0, 1.0
    %v1179 = vsel %vm1051, 0.0, 1.0
    %v1180 = vsel %vm1052, 0.0, 1.0
    %v1181 = vpack.c.bf16 %v1054, %v1053
    %v1182 = vpack.c.bf16 %v1056, %v1055
    %v1183 = vpack.c.bf16 %v1058, %v1057
    %v1184 = vpack.c.bf16 %v1060, %v1059
    %v1185 = vpack.c.bf16 %v1062, %v1061
    %v1186 = vpack.c.bf16 %v1064, %v1063
    %v1187 = vpack.c.bf16 %v1066, %v1065
    %v1188 = vpack.c.bf16 %v1068, %v1067
    %v1189 = vpack.c.bf16 %v1070, %v1069
    %v1190 = vpack.c.bf16 %v1072, %v1071
    %v1191 = vpack.c.bf16 %v1074, %v1073
    %v1192 = vpack.c.bf16 %v1076, %v1075
    %v1193 = vpack.c.bf16 %v1078, %v1077
    %v1194 = vpack.c.bf16 %v1080, %v1079
    %v1195 = vpack.c.bf16 %v1082, %v1081
    %v1196 = vpack.c.bf16 %v1084, %v1083
    %v1197 = vpack.c.bf16 %v1086, %v1085
    %v1198 = vpack.c.bf16 %v1088, %v1087
    %v1199 = vpack.c.bf16 %v1090, %v1089
    %v1200 = vpack.c.bf16 %v1092, %v1091
    %v1201 = vpack.c.bf16 %v1094, %v1093
    %v1202 = vpack.c.bf16 %v1096, %v1095
    %v1203 = vpack.c.bf16 %v1098, %v1097
    %v1204 = vpack.c.bf16 %v1100, %v1099
    %v1205 = vpack.c.bf16 %v1102, %v1101
    %v1206 = vpack.c.bf16 %v1104, %v1103
    %v1207 = vpack.c.bf16 %v1106, %v1105
    %v1208 = vpack.c.bf16 %v1108, %v1107
    %v1209 = vpack.c.bf16 %v1110, %v1109
    %v1210 = vpack.c.bf16 %v1112, %v1111
    %v1211 = vpack.c.bf16 %v1114, %v1113
    %v1212 = vpack.c.bf16 %v1116, %v1115
    %v1213 = vpack.c.bf16 %v1118, %v1117
    %v1214 = vpack.c.bf16 %v1120, %v1119
    %v1215 = vpack.c.bf16 %v1122, %v1121
    %v1216 = vpack.c.bf16 %v1124, %v1123
    %v1217 = vpack.c.bf16 %v1126, %v1125
    %v1218 = vpack.c.bf16 %v1128, %v1127
    %v1219 = vpack.c.bf16 %v1130, %v1129
    %v1220 = vpack.c.bf16 %v1132, %v1131
    %v1221 = vpack.c.bf16 %v1134, %v1133
    %v1222 = vpack.c.bf16 %v1136, %v1135
    %v1223 = vpack.c.bf16 %v1138, %v1137
    %v1224 = vpack.c.bf16 %v1140, %v1139
    %v1225 = vpack.c.bf16 %v1142, %v1141
    %v1226 = vpack.c.bf16 %v1144, %v1143
    %v1227 = vpack.c.bf16 %v1146, %v1145
    %v1228 = vpack.c.bf16 %v1148, %v1147
    %v1229 = vpack.c.bf16 %v1150, %v1149
    %v1230 = vpack.c.bf16 %v1152, %v1151
    %v1231 = vpack.c.bf16 %v1154, %v1153
    %v1232 = vpack.c.bf16 %v1156, %v1155
    %v1233 = vpack.c.bf16 %v1158, %v1157
    %v1234 = vpack.c.bf16 %v1160, %v1159
    %v1235 = vpack.c.bf16 %v1162, %v1161
    %v1236 = vpack.c.bf16 %v1164, %v1163
    %v1237 = vpack.c.bf16 %v1166, %v1165
    %v1238 = vpack.c.bf16 %v1168, %v1167
    %v1239 = vpack.c.bf16 %v1170, %v1169
    %v1240 = vpack.c.bf16 %v1172, %v1171
    %v1241 = vpack.c.bf16 %v1174, %v1173
    %v1242 = vpack.c.bf16 %v1176, %v1175
    %v1243 = vpack.c.bf16 %v1178, %v1177
    %v1244 = vpack.c.bf16 %v1180, %v1179
    %1245 = vst [vmem:[#allocation2] sm:$0xff] 0.0
    %1246 = vst [vmem:[#allocation2 + $0x8] sm:$0xff] 0.0
    %1247 = vst [vmem:[#allocation2 + $0x10] sm:$0xff] 0.0
    %1248 = vst [vmem:[#allocation2 + $0x18] sm:$0xff] 0.0
    %1249 = vst [vmem:[#allocation2 + $0x20] sm:$0xff] 0.0
    %v1250 = vld [vmem:[#allocation3] sm:$0xff]
    %v1251 = vld [vmem:[#allocation3 + $0x8] sm:$0xff]
    %v1252 = vld [vmem:[#allocation3 + $0x10] sm:$0xff]
    %v1253 = vld [vmem:[#allocation3 + $0x18] sm:$0xff]
    %v1254 = vld [vmem:[#allocation3 + $0x20] sm:$0xff]
    %v1255 = vld [vmem:[#allocation3 + $0x28] sm:$0xff]
    %v1256 = vld [vmem:[#allocation3 + $0x30] sm:$0xff]
    %v1257 = vld [vmem:[#allocation3 + $0x38] sm:$0xff]
    %v1258 = vld [vmem:[#allocation3 + $0x40] sm:$0xff]
    %v1259 = vld [vmem:[#allocation3 + $0x48] sm:$0xff]
    %v1260 = vld [vmem:[#allocation3 + $0x50] sm:$0xff]
    %v1261 = vld [vmem:[#allocation3 + $0x58] sm:$0xff]
    %v1262 = vld [vmem:[#allocation3 + $0x60] sm:$0xff]
    %v1263 = vld [vmem:[#allocation3 + $0x68] sm:$0xff]
    %v1264 = vld [vmem:[#allocation3 + $0x70] sm:$0xff]
    %v1265 = vld [vmem:[#allocation3 + $0x78] sm:$0xff]
    %v1266 = vld [vmem:[#allocation3 + $0x80] sm:$0xff]
    %v1267 = vld [vmem:[#allocation3 + $0x88] sm:$0xff]
    %v1268 = vld [vmem:[#allocation3 + $0x90] sm:$0xff]
    %v1269 = vld [vmem:[#allocation3 + $0x98] sm:$0xff]
    %v1270 = vld [vmem:[#allocation3 + $0xa0] sm:$0xff]
    %v1271 = vld [vmem:[#allocation3 + $0xa8] sm:$0xff]
    %v1272 = vld [vmem:[#allocation3 + $0xb0] sm:$0xff]
    %v1273 = vld [vmem:[#allocation3 + $0xb8] sm:$0xff]
    %v1274 = vld [vmem:[#allocation3 + $0xc0] sm:$0xff]
    %v1275 = vld [vmem:[#allocation3 + $0xc8] sm:$0xff]
    %v1276 = vld [vmem:[#allocation3 + $0xd0] sm:$0xff]
    %v1277 = vld [vmem:[#allocation3 + $0xd8] sm:$0xff]
    %v1278 = vld [vmem:[#allocation3 + $0xe0] sm:$0xff]
    %v1279 = vld [vmem:[#allocation3 + $0xe8] sm:$0xff]
    %v1280 = vld [vmem:[#allocation3 + $0xf0] sm:$0xff]
    %v1281 = vld [vmem:[#allocation3 + $0xf8] sm:$0xff]
    %v1282 = vld [vmem:[#allocation3 + $0x100] sm:$0xff]
    %v1283 = vld [vmem:[#allocation3 + $0x108] sm:$0xff]
    %v1284 = vld [vmem:[#allocation3 + $0x110] sm:$0xff]
    %v1285 = vld [vmem:[#allocation3 + $0x118] sm:$0xff]
    %v1286 = vld [vmem:[#allocation3 + $0x120] sm:$0xff]
    %v1287 = vld [vmem:[#allocation3 + $0x128] sm:$0xff]
    %v1288 = vld [vmem:[#allocation3 + $0x130] sm:$0xff]
    %v1289 = vld [vmem:[#allocation3 + $0x138] sm:$0xff]
    %v1290 = vld [vmem:[#allocation3 + $0x140] sm:$0xff]
    %v1291 = vld [vmem:[#allocation3 + $0x148] sm:$0xff]
    %v1292 = vld [vmem:[#allocation3 + $0x150] sm:$0xff]
    %v1293 = vld [vmem:[#allocation3 + $0x158] sm:$0xff]
    %v1294 = vld [vmem:[#allocation3 + $0x160] sm:$0xff]
    %v1295 = vld [vmem:[#allocation3 + $0x168] sm:$0xff]
    %v1296 = vld [vmem:[#allocation3 + $0x170] sm:$0xff]
    %v1297 = vld [vmem:[#allocation3 + $0x178] sm:$0xff]
    %v1298 = vld [vmem:[#allocation3 + $0x180] sm:$0xff]
    %v1299 = vld [vmem:[#allocation3 + $0x188] sm:$0xff]
    %v1300 = vld [vmem:[#allocation3 + $0x190] sm:$0xff]
    %v1301 = vld [vmem:[#allocation3 + $0x198] sm:$0xff]
    %v1302 = vld [vmem:[#allocation3 + $0x1a0] sm:$0xff]
    %v1303 = vld [vmem:[#allocation3 + $0x1a8] sm:$0xff]
    %v1304 = vld [vmem:[#allocation3 + $0x1b0] sm:$0xff]
    %v1305 = vld [vmem:[#allocation3 + $0x1b8] sm:$0xff]
    %v1306 = vld [vmem:[#allocation3 + $0x1c0] sm:$0xff]
    %v1307 = vld [vmem:[#allocation3 + $0x1c8] sm:$0xff]
    %v1308 = vld [vmem:[#allocation3 + $0x1d0] sm:$0xff]
    %v1309 = vld [vmem:[#allocation3 + $0x1d8] sm:$0xff]
    %v1310 = vld [vmem:[#allocation3 + $0x1e0] sm:$0xff]
    %v1311 = vld [vmem:[#allocation3 + $0x1e8] sm:$0xff]
    %v1312 = vld [vmem:[#allocation3 + $0x1f0] sm:$0xff]
    %v1313 = vld [vmem:[#allocation3 + $0x1f8] sm:$0xff]
    %s1314 = scalar_lea.vmem [#allocation3], 512
    %v1315 = vld [vmem:[%s1314] sm:$0xff]
    %v1316 = vld [vmem:[%s1314 + $0x8] sm:$0xff]
    %v1317 = vld [vmem:[%s1314 + $0x10] sm:$0xff]
    %v1318 = vld [vmem:[%s1314 + $0x18] sm:$0xff]
    %v1319 = vld [vmem:[%s1314 + $0x20] sm:$0xff]
    %v1320 = vld [vmem:[%s1314 + $0x28] sm:$0xff]
    %v1321 = vld [vmem:[%s1314 + $0x30] sm:$0xff]
    %v1322 = vld [vmem:[%s1314 + $0x38] sm:$0xff]
    %v1323 = vld [vmem:[%s1314 + $0x40] sm:$0xff]
    %v1324 = vld [vmem:[%s1314 + $0x48] sm:$0xff]
    %v1325 = vld [vmem:[%s1314 + $0x50] sm:$0xff]
    %v1326 = vld [vmem:[%s1314 + $0x58] sm:$0xff]
    %v1327 = vld [vmem:[%s1314 + $0x60] sm:$0xff]
    %v1328 = vld [vmem:[%s1314 + $0x68] sm:$0xff]
    %v1329 = vld [vmem:[%s1314 + $0x70] sm:$0xff]
    %v1330 = vld [vmem:[%s1314 + $0x78] sm:$0xff]
    %v1331 = vld [vmem:[%s1314 + $0x80] sm:$0xff]
    %v1332 = vld [vmem:[%s1314 + $0x88] sm:$0xff]
    %v1333 = vld [vmem:[%s1314 + $0x90] sm:$0xff]
    %v1334 = vld [vmem:[%s1314 + $0x98] sm:$0xff]
    %v1335 = vld [vmem:[%s1314 + $0xa0] sm:$0xff]
    %v1336 = vld [vmem:[%s1314 + $0xa8] sm:$0xff]
    %v1337 = vld [vmem:[%s1314 + $0xb0] sm:$0xff]
    %v1338 = vld [vmem:[%s1314 + $0xb8] sm:$0xff]
    %v1339 = vld [vmem:[%s1314 + $0xc0] sm:$0xff]
    %v1340 = vld [vmem:[%s1314 + $0xc8] sm:$0xff]
    %v1341 = vld [vmem:[%s1314 + $0xd0] sm:$0xff]
    %v1342 = vld [vmem:[%s1314 + $0xd8] sm:$0xff]
    %v1343 = vld [vmem:[%s1314 + $0xe0] sm:$0xff]
    %v1344 = vld [vmem:[%s1314 + $0xe8] sm:$0xff]
    %v1345 = vld [vmem:[%s1314 + $0xf0] sm:$0xff]
    %v1346 = vld [vmem:[%s1314 + $0xf8] sm:$0xff]
    %v1347 = vld [vmem:[%s1314 + $0x100] sm:$0xff]
    %v1348 = vld [vmem:[%s1314 + $0x108] sm:$0xff]
    %v1349 = vld [vmem:[%s1314 + $0x110] sm:$0xff]
    %v1350 = vld [vmem:[%s1314 + $0x118] sm:$0xff]
    %v1351 = vld [vmem:[%s1314 + $0x120] sm:$0xff]
    %v1352 = vld [vmem:[%s1314 + $0x128] sm:$0xff]
    %v1353 = vld [vmem:[%s1314 + $0x130] sm:$0xff]
    %v1354 = vld [vmem:[%s1314 + $0x138] sm:$0xff]
    %v1355 = vld [vmem:[%s1314 + $0x140] sm:$0xff]
    %v1356 = vld [vmem:[%s1314 + $0x148] sm:$0xff]
    %v1357 = vld [vmem:[%s1314 + $0x150] sm:$0xff]
    %v1358 = vld [vmem:[%s1314 + $0x158] sm:$0xff]
    %v1359 = vld [vmem:[%s1314 + $0x160] sm:$0xff]
    %v1360 = vld [vmem:[%s1314 + $0x168] sm:$0xff]
    %v1361 = vld [vmem:[%s1314 + $0x170] sm:$0xff]
    %v1362 = vld [vmem:[%s1314 + $0x178] sm:$0xff]
    %v1363 = vld [vmem:[%s1314 + $0x180] sm:$0xff]
    %v1364 = vld [vmem:[%s1314 + $0x188] sm:$0xff]
    %v1365 = vld [vmem:[%s1314 + $0x190] sm:$0xff]
    %v1366 = vld [vmem:[%s1314 + $0x198] sm:$0xff]
    %v1367 = vld [vmem:[%s1314 + $0x1a0] sm:$0xff]
    %v1368 = vld [vmem:[%s1314 + $0x1a8] sm:$0xff]
    %v1369 = vld [vmem:[%s1314 + $0x1b0] sm:$0xff]
    %v1370 = vld [vmem:[%s1314 + $0x1b8] sm:$0xff]
    %v1371 = vld [vmem:[%s1314 + $0x1c0] sm:$0xff]
    %v1372 = vld [vmem:[%s1314 + $0x1c8] sm:$0xff]
    %v1373 = vld [vmem:[%s1314 + $0x1d0] sm:$0xff]
    %v1374 = vld [vmem:[%s1314 + $0x1d8] sm:$0xff]
    %v1375 = vld [vmem:[%s1314 + $0x1e0] sm:$0xff]
    %v1376 = vld [vmem:[%s1314 + $0x1e8] sm:$0xff]
    %v1377 = vld [vmem:[%s1314 + $0x1f0] sm:$0xff]
    %v1378 = vld [vmem:[%s1314 + $0x1f8] sm:$0xff]
    %v1443 = vunpack.c.l.b16 %v1250
    %v1444 = vunpack.c.h.b16 %v1250
    %v1445 = vunpack.c.l.b16 %v1251
    %v1446 = vunpack.c.h.b16 %v1251
    %v1447 = vunpack.c.l.b16 %v1252
    %v1448 = vunpack.c.h.b16 %v1252
    %v1449 = vunpack.c.l.b16 %v1253
    %v1450 = vunpack.c.h.b16 %v1253
    %v1451 = vunpack.c.l.b16 %v1254
    %v1452 = vunpack.c.h.b16 %v1254
    %v1453 = vunpack.c.l.b16 %v1255
    %v1454 = vunpack.c.h.b16 %v1255
    %v1455 = vunpack.c.l.b16 %v1256
    %v1456 = vunpack.c.h.b16 %v1256
    %v1457 = vunpack.c.l.b16 %v1257
    %v1458 = vunpack.c.h.b16 %v1257
    %v1459 = vunpack.c.l.b16 %v1258
    %v1460 = vunpack.c.h.b16 %v1258
    %v1461 = vunpack.c.l.b16 %v1259
    %v1462 = vunpack.c.h.b16 %v1259
    %v1463 = vunpack.c.l.b16 %v1260
    %v1464 = vunpack.c.h.b16 %v1260
    %v1465 = vunpack.c.l.b16 %v1261
    %v1466 = vunpack.c.h.b16 %v1261
    %v1467 = vunpack.c.l.b16 %v1262
    %v1468 = vunpack.c.h.b16 %v1262
    %v1469 = vunpack.c.l.b16 %v1263
    %v1470 = vunpack.c.h.b16 %v1263
    %v1471 = vunpack.c.l.b16 %v1264
    %v1472 = vunpack.c.h.b16 %v1264
    %v1473 = vunpack.c.l.b16 %v1265
    %v1474 = vunpack.c.h.b16 %v1265
    %v1475 = vunpack.c.l.b16 %v1266
    %v1476 = vunpack.c.h.b16 %v1266
    %v1477 = vunpack.c.l.b16 %v1267
    %v1478 = vunpack.c.h.b16 %v1267
    %v1479 = vunpack.c.l.b16 %v1268
    %v1480 = vunpack.c.h.b16 %v1268
    %v1481 = vunpack.c.l.b16 %v1269
    %v1482 = vunpack.c.h.b16 %v1269
    %v1483 = vunpack.c.l.b16 %v1270
    %v1484 = vunpack.c.h.b16 %v1270
    %v1485 = vunpack.c.l.b16 %v1271
    %v1486 = vunpack.c.h.b16 %v1271
    %v1487 = vunpack.c.l.b16 %v1272
    %v1488 = vunpack.c.h.b16 %v1272
    %v1489 = vunpack.c.l.b16 %v1273
    %v1490 = vunpack.c.h.b16 %v1273
    %v1491 = vunpack.c.l.b16 %v1274
    %v1492 = vunpack.c.h.b16 %v1274
    %v1493 = vunpack.c.l.b16 %v1275
    %v1494 = vunpack.c.h.b16 %v1275
    %v1495 = vunpack.c.l.b16 %v1276
    %v1496 = vunpack.c.h.b16 %v1276
    %v1497 = vunpack.c.l.b16 %v1277
    %v1498 = vunpack.c.h.b16 %v1277
    %v1499 = vunpack.c.l.b16 %v1278
    %v1500 = vunpack.c.h.b16 %v1278
    %v1501 = vunpack.c.l.b16 %v1279
    %v1502 = vunpack.c.h.b16 %v1279
    %v1503 = vunpack.c.l.b16 %v1280
    %v1504 = vunpack.c.h.b16 %v1280
    %v1505 = vunpack.c.l.b16 %v1281
    %v1506 = vunpack.c.h.b16 %v1281
    %v1507 = vunpack.c.l.b16 %v1282
    %v1508 = vunpack.c.h.b16 %v1282
    %v1509 = vunpack.c.l.b16 %v1283
    %v1510 = vunpack.c.h.b16 %v1283
    %v1511 = vunpack.c.l.b16 %v1284
    %v1512 = vunpack.c.h.b16 %v1284
    %v1513 = vunpack.c.l.b16 %v1285
    %v1514 = vunpack.c.h.b16 %v1285
    %v1515 = vunpack.c.l.b16 %v1286
    %v1516 = vunpack.c.h.b16 %v1286
    %v1517 = vunpack.c.l.b16 %v1287
    %v1518 = vunpack.c.h.b16 %v1287
    %v1519 = vunpack.c.l.b16 %v1288
    %v1520 = vunpack.c.h.b16 %v1288
    %v1521 = vunpack.c.l.b16 %v1289
    %v1522 = vunpack.c.h.b16 %v1289
    %v1523 = vunpack.c.l.b16 %v1290
    %v1524 = vunpack.c.h.b16 %v1290
    %v1525 = vunpack.c.l.b16 %v1291
    %v1526 = vunpack.c.h.b16 %v1291
    %v1527 = vunpack.c.l.b16 %v1292
    %v1528 = vunpack.c.h.b16 %v1292
    %v1529 = vunpack.c.l.b16 %v1293
    %v1530 = vunpack.c.h.b16 %v1293
    %v1531 = vunpack.c.l.b16 %v1294
    %v1532 = vunpack.c.h.b16 %v1294
    %v1533 = vunpack.c.l.b16 %v1295
    %v1534 = vunpack.c.h.b16 %v1295
    %v1535 = vunpack.c.l.b16 %v1296
    %v1536 = vunpack.c.h.b16 %v1296
    %v1537 = vunpack.c.l.b16 %v1297
    %v1538 = vunpack.c.h.b16 %v1297
    %v1539 = vunpack.c.l.b16 %v1298
    %v1540 = vunpack.c.h.b16 %v1298
    %v1541 = vunpack.c.l.b16 %v1299
    %v1542 = vunpack.c.h.b16 %v1299
    %v1543 = vunpack.c.l.b16 %v1300
    %v1544 = vunpack.c.h.b16 %v1300
    %v1545 = vunpack.c.l.b16 %v1301
    %v1546 = vunpack.c.h.b16 %v1301
    %v1547 = vunpack.c.l.b16 %v1302
    %v1548 = vunpack.c.h.b16 %v1302
    %v1549 = vunpack.c.l.b16 %v1303
    %v1550 = vunpack.c.h.b16 %v1303
    %v1551 = vunpack.c.l.b16 %v1304
    %v1552 = vunpack.c.h.b16 %v1304
    %v1553 = vunpack.c.l.b16 %v1305
    %v1554 = vunpack.c.h.b16 %v1305
    %v1555 = vunpack.c.l.b16 %v1306
    %v1556 = vunpack.c.h.b16 %v1306
    %v1557 = vunpack.c.l.b16 %v1307
    %v1558 = vunpack.c.h.b16 %v1307
    %v1559 = vunpack.c.l.b16 %v1308
    %v1560 = vunpack.c.h.b16 %v1308
    %v1561 = vunpack.c.l.b16 %v1309
    %v1562 = vunpack.c.h.b16 %v1309
    %v1563 = vunpack.c.l.b16 %v1310
    %v1564 = vunpack.c.h.b16 %v1310
    %v1565 = vunpack.c.l.b16 %v1311
    %v1566 = vunpack.c.h.b16 %v1311
    %v1567 = vunpack.c.l.b16 %v1312
    %v1568 = vunpack.c.h.b16 %v1312
    %v1569 = vunpack.c.l.b16 %v1313
    %v1570 = vunpack.c.h.b16 %v1313
    %v1571 = vpack.c.b16 %v1445, %v1443
    %v1572 = vpack.c.b16 %v1446, %v1444
    %v1573 = vpack.c.b16 %v1449, %v1447
    %v1574 = vpack.c.b16 %v1450, %v1448
    %v1575 = vpack.c.b16 %v1453, %v1451
    %v1576 = vpack.c.b16 %v1454, %v1452
    %v1577 = vpack.c.b16 %v1457, %v1455
    %v1578 = vpack.c.b16 %v1458, %v1456
    %v1579 = vpack.c.b16 %v1461, %v1459
    %v1580 = vpack.c.b16 %v1462, %v1460
    %v1581 = vpack.c.b16 %v1465, %v1463
    %v1582 = vpack.c.b16 %v1466, %v1464
    %v1583 = vpack.c.b16 %v1469, %v1467
    %v1584 = vpack.c.b16 %v1470, %v1468
    %v1585 = vpack.c.b16 %v1473, %v1471
    %v1586 = vpack.c.b16 %v1474, %v1472
    %v1587 = vpack.c.b16 %v1477, %v1475
    %v1588 = vpack.c.b16 %v1478, %v1476
    %v1589 = vpack.c.b16 %v1481, %v1479
    %v1590 = vpack.c.b16 %v1482, %v1480
    %v1591 = vpack.c.b16 %v1485, %v1483
    %v1592 = vpack.c.b16 %v1486, %v1484
    %v1593 = vpack.c.b16 %v1489, %v1487
    %v1594 = vpack.c.b16 %v1490, %v1488
    %v1595 = vpack.c.b16 %v1493, %v1491
    %v1596 = vpack.c.b16 %v1494, %v1492
    %v1597 = vpack.c.b16 %v1497, %v1495
    %v1598 = vpack.c.b16 %v1498, %v1496
    %v1599 = vpack.c.b16 %v1501, %v1499
    %v1600 = vpack.c.b16 %v1502, %v1500
    %v1601 = vpack.c.b16 %v1505, %v1503
    %v1602 = vpack.c.b16 %v1506, %v1504
    %v1603 = vpack.c.b16 %v1509, %v1507
    %v1604 = vpack.c.b16 %v1510, %v1508
    %v1605 = vpack.c.b16 %v1513, %v1511
    %v1606 = vpack.c.b16 %v1514, %v1512
    %v1607 = vpack.c.b16 %v1517, %v1515
    %v1608 = vpack.c.b16 %v1518, %v1516
    %v1609 = vpack.c.b16 %v1521, %v1519
    %v1610 = vpack.c.b16 %v1522, %v1520
    %v1611 = vpack.c.b16 %v1525, %v1523
    %v1612 = vpack.c.b16 %v1526, %v1524
    %v1613 = vpack.c.b16 %v1529, %v1527
    %v1614 = vpack.c.b16 %v1530, %v1528
    %v1615 = vpack.c.b16 %v1533, %v1531
    %v1616 = vpack.c.b16 %v1534, %v1532
    %v1617 = vpack.c.b16 %v1537, %v1535
    %v1618 = vpack.c.b16 %v1538, %v1536
    %v1619 = vpack.c.b16 %v1541, %v1539
    %v1620 = vpack.c.b16 %v1542, %v1540
    %v1621 = vpack.c.b16 %v1545, %v1543
    %v1622 = vpack.c.b16 %v1546, %v1544
    %v1623 = vpack.c.b16 %v1549, %v1547
    %v1624 = vpack.c.b16 %v1550, %v1548
    %v1625 = vpack.c.b16 %v1553, %v1551
    %v1626 = vpack.c.b16 %v1554, %v1552
    %v1627 = vpack.c.b16 %v1557, %v1555
    %v1628 = vpack.c.b16 %v1558, %v1556
    %v1629 = vpack.c.b16 %v1561, %v1559
    %v1630 = vpack.c.b16 %v1562, %v1560
    %v1631 = vpack.c.b16 %v1565, %v1563
    %v1632 = vpack.c.b16 %v1566, %v1564
    %v1633 = vpack.c.b16 %v1569, %v1567
    %v1634 = vpack.c.b16 %v1570, %v1568
    %v1763 = vunpack.c.l.b16 %v1315
    %v1764 = vunpack.c.h.b16 %v1315
    %v1765 = vunpack.c.l.b16 %v1316
    %v1766 = vunpack.c.h.b16 %v1316
    %v1767 = vunpack.c.l.b16 %v1317
    %v1768 = vunpack.c.h.b16 %v1317
    %v1769 = vunpack.c.l.b16 %v1318
    %v1770 = vunpack.c.h.b16 %v1318
    %v1771 = vunpack.c.l.b16 %v1319
    %v1772 = vunpack.c.h.b16 %v1319
    %v1773 = vunpack.c.l.b16 %v1320
    %v1774 = vunpack.c.h.b16 %v1320
    %v1775 = vunpack.c.l.b16 %v1321
    %v1776 = vunpack.c.h.b16 %v1321
    %v1777 = vunpack.c.l.b16 %v1322
    %v1778 = vunpack.c.h.b16 %v1322
    %v1779 = vunpack.c.l.b16 %v1323
    %v1780 = vunpack.c.h.b16 %v1323
    %v1781 = vunpack.c.l.b16 %v1324
    %v1782 = vunpack.c.h.b16 %v1324
    %v1783 = vunpack.c.l.b16 %v1325
    %v1784 = vunpack.c.h.b16 %v1325
    %v1785 = vunpack.c.l.b16 %v1326
    %v1786 = vunpack.c.h.b16 %v1326
    %v1787 = vunpack.c.l.b16 %v1327
    %v1788 = vunpack.c.h.b16 %v1327
    %v1789 = vunpack.c.l.b16 %v1328
    %v1790 = vunpack.c.h.b16 %v1328
    %v1791 = vunpack.c.l.b16 %v1329
    %v1792 = vunpack.c.h.b16 %v1329
    %v1793 = vunpack.c.l.b16 %v1330
    %v1794 = vunpack.c.h.b16 %v1330
    %v1795 = vunpack.c.l.b16 %v1331
    %v1796 = vunpack.c.h.b16 %v1331
    %v1797 = vunpack.c.l.b16 %v1332
    %v1798 = vunpack.c.h.b16 %v1332
    %v1799 = vunpack.c.l.b16 %v1333
    %v1800 = vunpack.c.h.b16 %v1333
    %v1801 = vunpack.c.l.b16 %v1334
    %v1802 = vunpack.c.h.b16 %v1334
    %v1803 = vunpack.c.l.b16 %v1335
    %v1804 = vunpack.c.h.b16 %v1335
    %v1805 = vunpack.c.l.b16 %v1336
    %v1806 = vunpack.c.h.b16 %v1336
    %v1807 = vunpack.c.l.b16 %v1337
    %v1808 = vunpack.c.h.b16 %v1337
    %v1809 = vunpack.c.l.b16 %v1338
    %v1810 = vunpack.c.h.b16 %v1338
    %v1811 = vunpack.c.l.b16 %v1339
    %v1812 = vunpack.c.h.b16 %v1339
    %v1813 = vunpack.c.l.b16 %v1340
    %v1814 = vunpack.c.h.b16 %v1340
    %v1815 = vunpack.c.l.b16 %v1341
    %v1816 = vunpack.c.h.b16 %v1341
    %v1817 = vunpack.c.l.b16 %v1342
    %v1818 = vunpack.c.h.b16 %v1342
    %v1819 = vunpack.c.l.b16 %v1343
    %v1820 = vunpack.c.h.b16 %v1343
    %v1821 = vunpack.c.l.b16 %v1344
    %v1822 = vunpack.c.h.b16 %v1344
    %v1823 = vunpack.c.l.b16 %v1345
    %v1824 = vunpack.c.h.b16 %v1345
    %v1825 = vunpack.c.l.b16 %v1346
    %v1826 = vunpack.c.h.b16 %v1346
    %v1827 = vunpack.c.l.b16 %v1347
    %v1828 = vunpack.c.h.b16 %v1347
    %v1829 = vunpack.c.l.b16 %v1348
    %v1830 = vunpack.c.h.b16 %v1348
    %v1831 = vunpack.c.l.b16 %v1349
    %v1832 = vunpack.c.h.b16 %v1349
    %v1833 = vunpack.c.l.b16 %v1350
    %v1834 = vunpack.c.h.b16 %v1350
    %v1835 = vunpack.c.l.b16 %v1351
    %v1836 = vunpack.c.h.b16 %v1351
    %v1837 = vunpack.c.l.b16 %v1352
    %v1838 = vunpack.c.h.b16 %v1352
    %v1839 = vunpack.c.l.b16 %v1353
    %v1840 = vunpack.c.h.b16 %v1353
    %v1841 = vunpack.c.l.b16 %v1354
    %v1842 = vunpack.c.h.b16 %v1354
    %v1843 = vunpack.c.l.b16 %v1355
    %v1844 = vunpack.c.h.b16 %v1355
    %v1845 = vunpack.c.l.b16 %v1356
    %v1846 = vunpack.c.h.b16 %v1356
    %v1847 = vunpack.c.l.b16 %v1357
    %v1848 = vunpack.c.h.b16 %v1357
    %v1849 = vunpack.c.l.b16 %v1358
    %v1850 = vunpack.c.h.b16 %v1358
    %v1851 = vunpack.c.l.b16 %v1359
    %v1852 = vunpack.c.h.b16 %v1359
    %v1853 = vunpack.c.l.b16 %v1360
    %v1854 = vunpack.c.h.b16 %v1360
    %v1855 = vunpack.c.l.b16 %v1361
    %v1856 = vunpack.c.h.b16 %v1361
    %v1857 = vunpack.c.l.b16 %v1362
    %v1858 = vunpack.c.h.b16 %v1362
    %v1859 = vunpack.c.l.b16 %v1363
    %v1860 = vunpack.c.h.b16 %v1363
    %v1861 = vunpack.c.l.b16 %v1364
    %v1862 = vunpack.c.h.b16 %v1364
    %v1863 = vunpack.c.l.b16 %v1365
    %v1864 = vunpack.c.h.b16 %v1365
    %v1865 = vunpack.c.l.b16 %v1366
    %v1866 = vunpack.c.h.b16 %v1366
    %v1867 = vunpack.c.l.b16 %v1367
    %v1868 = vunpack.c.h.b16 %v1367
    %v1869 = vunpack.c.l.b16 %v1368
    %v1870 = vunpack.c.h.b16 %v1368
    %v1871 = vunpack.c.l.b16 %v1369
    %v1872 = vunpack.c.h.b16 %v1369
    %v1873 = vunpack.c.l.b16 %v1370
    %v1874 = vunpack.c.h.b16 %v1370
    %v1875 = vunpack.c.l.b16 %v1371
    %v1876 = vunpack.c.h.b16 %v1371
    %v1877 = vunpack.c.l.b16 %v1372
    %v1878 = vunpack.c.h.b16 %v1372
    %v1879 = vunpack.c.l.b16 %v1373
    %v1880 = vunpack.c.h.b16 %v1373
    %v1881 = vunpack.c.l.b16 %v1374
    %v1882 = vunpack.c.h.b16 %v1374
    %v1883 = vunpack.c.l.b16 %v1375
    %v1884 = vunpack.c.h.b16 %v1375
    %v1885 = vunpack.c.l.b16 %v1376
    %v1886 = vunpack.c.h.b16 %v1376
    %v1887 = vunpack.c.l.b16 %v1377
    %v1888 = vunpack.c.h.b16 %v1377
    %v1889 = vunpack.c.l.b16 %v1378
    %v1890 = vunpack.c.h.b16 %v1378
    %v1891 = vpack.c.b16 %v1765, %v1763
    %v1892 = vpack.c.b16 %v1766, %v1764
    %v1893 = vpack.c.b16 %v1769, %v1767
    %v1894 = vpack.c.b16 %v1770, %v1768
    %v1895 = vpack.c.b16 %v1773, %v1771
    %v1896 = vpack.c.b16 %v1774, %v1772
    %v1897 = vpack.c.b16 %v1777, %v1775
    %v1898 = vpack.c.b16 %v1778, %v1776
    %v1899 = vpack.c.b16 %v1781, %v1779
    %v1900 = vpack.c.b16 %v1782, %v1780
    %v1901 = vpack.c.b16 %v1785, %v1783
    %v1902 = vpack.c.b16 %v1786, %v1784
    %v1903 = vpack.c.b16 %v1789, %v1787
    %v1904 = vpack.c.b16 %v1790, %v1788
    %v1905 = vpack.c.b16 %v1793, %v1791
    %v1906 = vpack.c.b16 %v1794, %v1792
    %v1907 = vpack.c.b16 %v1797, %v1795
    %v1908 = vpack.c.b16 %v1798, %v1796
    %v1909 = vpack.c.b16 %v1801, %v1799
    %v1910 = vpack.c.b16 %v1802, %v1800
    %v1911 = vpack.c.b16 %v1805, %v1803
    %v1912 = vpack.c.b16 %v1806, %v1804
    %v1913 = vpack.c.b16 %v1809, %v1807
    %v1914 = vpack.c.b16 %v1810, %v1808
    %v1915 = vpack.c.b16 %v1813, %v1811
    %v1916 = vpack.c.b16 %v1814, %v1812
    %v1917 = vpack.c.b16 %v1817, %v1815
    %v1918 = vpack.c.b16 %v1818, %v1816
    %v1919 = vpack.c.b16 %v1821, %v1819
    %v1920 = vpack.c.b16 %v1822, %v1820
    %v1921 = vpack.c.b16 %v1825, %v1823
    %v1922 = vpack.c.b16 %v1826, %v1824
    %v1923 = vpack.c.b16 %v1829, %v1827
    %v1924 = vpack.c.b16 %v1830, %v1828
    %v1925 = vpack.c.b16 %v1833, %v1831
    %v1926 = vpack.c.b16 %v1834, %v1832
    %v1927 = vpack.c.b16 %v1837, %v1835
    %v1928 = vpack.c.b16 %v1838, %v1836
    %v1929 = vpack.c.b16 %v1841, %v1839
    %v1930 = vpack.c.b16 %v1842, %v1840
    %v1931 = vpack.c.b16 %v1845, %v1843
    %v1932 = vpack.c.b16 %v1846, %v1844
    %v1933 = vpack.c.b16 %v1849, %v1847
    %v1934 = vpack.c.b16 %v1850, %v1848
    %v1935 = vpack.c.b16 %v1853, %v1851
    %v1936 = vpack.c.b16 %v1854, %v1852
    %v1937 = vpack.c.b16 %v1857, %v1855
    %v1938 = vpack.c.b16 %v1858, %v1856
    %v1939 = vpack.c.b16 %v1861, %v1859
    %v1940 = vpack.c.b16 %v1862, %v1860
    %v1941 = vpack.c.b16 %v1865, %v1863
    %v1942 = vpack.c.b16 %v1866, %v1864
    %v1943 = vpack.c.b16 %v1869, %v1867
    %v1944 = vpack.c.b16 %v1870, %v1868
    %v1945 = vpack.c.b16 %v1873, %v1871
    %v1946 = vpack.c.b16 %v1874, %v1872
    %v1947 = vpack.c.b16 %v1877, %v1875
    %v1948 = vpack.c.b16 %v1878, %v1876
    %v1949 = vpack.c.b16 %v1881, %v1879
    %v1950 = vpack.c.b16 %v1882, %v1880
    %v1951 = vpack.c.b16 %v1885, %v1883
    %v1952 = vpack.c.b16 %v1886, %v1884
    %v1953 = vpack.c.b16 %v1889, %v1887
    %v1954 = vpack.c.b16 %v1890, %v1888
    %v2020 = vlaneseq
    %v2021 = vshrl.u32 %v2020, 7
    %v2022 = vsub.s32 0, %v2021
    %v2023 = vrot.slane %v150, %v2022
    %v2057 = vunpack.c.l.b16 %v102
    %v2058 = vunpack.c.l.b16 %v103
    %v2059 = vunpack.c.l.b16 %v104
    %v2060 = vunpack.c.l.b16 %v105
    %v2061 = vunpack.c.l.b16 %v106
    %v2062 = vunpack.c.l.b16 %v107
    %v2063 = vunpack.c.l.b16 %v108
    %v2064 = vunpack.c.l.b16 %v109
    %v2065 = vunpack.c.l.b16 %v110
    %v2066 = vunpack.c.l.b16 %v111
    %v2067 = vunpack.c.l.b16 %v112
    %v2068 = vunpack.c.l.b16 %v113
    %v2069 = vunpack.c.l.b16 %v114
    %v2070 = vunpack.c.l.b16 %v115
    %v2071 = vunpack.c.l.b16 %v116
    %v2072 = vunpack.c.l.b16 %v117
    %v2073 = vunpack.c.l.b16 %v118
    %v2074 = vunpack.c.l.b16 %v119
    %v2075 = vunpack.c.l.b16 %v120
    %v2076 = vunpack.c.l.b16 %v121
    %v2077 = vunpack.c.l.b16 %v122
    %v2078 = vunpack.c.l.b16 %v123
    %v2079 = vunpack.c.l.b16 %v124
    %v2080 = vunpack.c.l.b16 %v125
    %v2081 = vunpack.c.l.b16 %v126
    %v2082 = vunpack.c.l.b16 %v127
    %v2083 = vunpack.c.l.b16 %v128
    %v2084 = vunpack.c.l.b16 %v129
    %v2085 = vunpack.c.l.b16 %v130
    %v2086 = vunpack.c.l.b16 %v131
    %v2087 = vunpack.c.l.b16 %v132
    %v2088 = vunpack.c.l.b16 %v133
    %v2089 = vpack.c.b16 %v2058, %v2057
    %v2090 = vpack.c.b16 %v2060, %v2059
    %v2091 = vpack.c.b16 %v2062, %v2061
    %v2092 = vpack.c.b16 %v2064, %v2063
    %v2093 = vpack.c.b16 %v2066, %v2065
    %v2094 = vpack.c.b16 %v2068, %v2067
    %v2095 = vpack.c.b16 %v2070, %v2069
    %v2096 = vpack.c.b16 %v2072, %v2071
    %v2097 = vpack.c.b16 %v2074, %v2073
    %v2098 = vpack.c.b16 %v2076, %v2075
    %v2099 = vpack.c.b16 %v2078, %v2077
    %v2100 = vpack.c.b16 %v2080, %v2079
    %v2101 = vpack.c.b16 %v2082, %v2081
    %v2102 = vpack.c.b16 %v2084, %v2083
    %v2103 = vpack.c.b16 %v2086, %v2085
    %v2104 = vpack.c.b16 %v2088, %v2087
    %2121 = vmatprep.subr.bf16.mxu0 0
    %2122 = vmatpush1.bf16.msra.mxu0 %v2096
    %2123 = vmatprep.subr.bf16.mxu0 0
    %2124 = vmatpush1.bf16.msra.mxu0 %v2095
    %2125 = vmatprep.subr.bf16.mxu0 0
    %2126 = vmatpush1.bf16.msra.mxu0 %v2094
    %2127 = vmatprep.subr.bf16.mxu0 0
    %2128 = vmatpush1.bf16.msra.mxu0 %v2093
    %2129 = vmatprep.subr.bf16.mxu0 0
    %2130 = vmatpush1.bf16.msra.mxu0 %v2092
    %2131 = vmatprep.subr.bf16.mxu0 0
    %2132 = vmatpush1.bf16.msra.mxu0 %v2091
    %2133 = vmatprep.subr.bf16.mxu0 0
    %2134 = vmatpush1.bf16.msra.mxu0 %v2090
    %2135 = vmatprep.subr.bf16.mxu0 0
    %2136 = vmatpush1.bf16.msra.mxu0 %v2089
    %2137 = vmatprep.subr.bf16.mxu0 0
    %2138 = vmatpush2.bf16.msra.mxu0 %v2104
    %2139 = vmatprep.subr.bf16.mxu0 0
    %2140 = vmatpush2.bf16.msra.mxu0 %v2103
    %2141 = vmatprep.subr.bf16.mxu0 0
    %2142 = vmatpush2.bf16.msra.mxu0 %v2102
    %2143 = vmatprep.subr.bf16.mxu0 0
    %2144 = vmatpush2.bf16.msra.mxu0 %v2101
    %2145 = vmatprep.subr.bf16.mxu0 0
    %2146 = vmatpush2.bf16.msra.mxu0 %v2100
    %2147 = vmatprep.subr.bf16.mxu0 0
    %2148 = vmatpush2.bf16.msra.mxu0 %v2099
    %2149 = vmatprep.subr.bf16.mxu0 0
    %2150 = vmatpush2.bf16.msra.mxu0 %v2098
    %2151 = vmatprep.subr.bf16.mxu0 0
    %2152 = vmatpush2.bf16.msra.mxu0 %v2097
    %2153 = vmatprep.mubr.bf16.mxu0 %v1572
    %2154 = vmatmul.mubr.bf16.gmra.mxu0 %v1571
    %v2155 = vpop.f32.mrf.mxu0
    %v2156 = vadd.f32 %v2023, %v2155
    %v2157 = vpop.f32.mrf.mxu0
    %v2158 = vpop.f32.mrf.mxu0
    %v2159 = vadd.f32 %v2023, %v2158
    %v2160 = vpop.f32.mrf.mxu0
    %2161 = vmatprep.mubr.bf16.mxu0 %v1574
    %2162 = vmatmul.mubr.bf16.gmra.mxu0 %v1573
    %v2163 = vpop.f32.mrf.mxu0
    %v2164 = vadd.f32 %v2023, %v2163
    %v2165 = vpop.f32.mrf.mxu0
    %v2166 = vpop.f32.mrf.mxu0
    %v2167 = vadd.f32 %v2023, %v2166
    %v2168 = vpop.f32.mrf.mxu0
    %2169 = vmatprep.mubr.bf16.mxu0 %v1576
    %2170 = vmatmul.mubr.bf16.gmra.mxu0 %v1575
    %v2171 = vpop.f32.mrf.mxu0
    %v2172 = vadd.f32 %v2023, %v2171
    %v2173 = vpop.f32.mrf.mxu0
    %v2174 = vpop.f32.mrf.mxu0
    %v2175 = vadd.f32 %v2023, %v2174
    %v2176 = vpop.f32.mrf.mxu0
    %2177 = vmatprep.mubr.bf16.mxu0 %v1578
    %2178 = vmatmul.mubr.bf16.gmra.mxu0 %v1577
    %v2179 = vpop.f32.mrf.mxu0
    %v2180 = vadd.f32 %v2023, %v2179
    %v2181 = vpop.f32.mrf.mxu0
    %v2182 = vpop.f32.mrf.mxu0
    %v2183 = vadd.f32 %v2023, %v2182
    %v2184 = vpop.f32.mrf.mxu0
    %2185 = vmatprep.mubr.bf16.mxu0 %v1580
    %2186 = vmatmul.mubr.bf16.gmra.mxu0 %v1579
    %v2187 = vpop.f32.mrf.mxu0
    %v2188 = vadd.f32 %v2023, %v2187
    %v2189 = vpop.f32.mrf.mxu0
    %v2190 = vpop.f32.mrf.mxu0
    %v2191 = vadd.f32 %v2023, %v2190
    %v2192 = vpop.f32.mrf.mxu0
    %2193 = vmatprep.mubr.bf16.mxu0 %v1582
    %2194 = vmatmul.mubr.bf16.gmra.mxu0 %v1581
    %v2195 = vpop.f32.mrf.mxu0
    %v2196 = vadd.f32 %v2023, %v2195
    %v2197 = vpop.f32.mrf.mxu0
    %v2198 = vpop.f32.mrf.mxu0
    %v2199 = vadd.f32 %v2023, %v2198
    %v2200 = vpop.f32.mrf.mxu0
    %2201 = vmatprep.mubr.bf16.mxu0 %v1584
    %2202 = vmatmul.mubr.bf16.gmra.mxu0 %v1583
    %v2203 = vpop.f32.mrf.mxu0
    %v2204 = vadd.f32 %v2023, %v2203
    %v2205 = vpop.f32.mrf.mxu0
    %v2206 = vpop.f32.mrf.mxu0
    %v2207 = vadd.f32 %v2023, %v2206
    %v2208 = vpop.f32.mrf.mxu0
    %2209 = vmatprep.mubr.bf16.mxu0 %v1586
    %2210 = vmatmul.mubr.bf16.gmra.mxu0 %v1585
    %v2211 = vpop.f32.mrf.mxu0
    %v2212 = vadd.f32 %v2023, %v2211
    %v2213 = vpop.f32.mrf.mxu0
    %v2214 = vpop.f32.mrf.mxu0
    %v2215 = vadd.f32 %v2023, %v2214
    %v2216 = vpop.f32.mrf.mxu0
    %2217 = vmatprep.mubr.bf16.mxu0 %v1588
    %2218 = vmatmul.mubr.bf16.gmra.mxu0 %v1587
    %v2219 = vpop.f32.mrf.mxu0
    %v2220 = vadd.f32 %v2023, %v2219
    %v2221 = vpop.f32.mrf.mxu0
    %v2222 = vpop.f32.mrf.mxu0
    %v2223 = vadd.f32 %v2023, %v2222
    %v2224 = vpop.f32.mrf.mxu0
    %2225 = vmatprep.mubr.bf16.mxu0 %v1590
    %2226 = vmatmul.mubr.bf16.gmra.mxu0 %v1589
    %v2227 = vpop.f32.mrf.mxu0
    %v2228 = vadd.f32 %v2023, %v2227
    %v2229 = vpop.f32.mrf.mxu0
    %v2230 = vpop.f32.mrf.mxu0
    %v2231 = vadd.f32 %v2023, %v2230
    %v2232 = vpop.f32.mrf.mxu0
    %2233 = vmatprep.mubr.bf16.mxu0 %v1592
    %2234 = vmatmul.mubr.bf16.gmra.mxu0 %v1591
    %v2235 = vpop.f32.mrf.mxu0
    %v2236 = vadd.f32 %v2023, %v2235
    %v2237 = vpop.f32.mrf.mxu0
    %v2238 = vpop.f32.mrf.mxu0
    %v2239 = vadd.f32 %v2023, %v2238
    %v2240 = vpop.f32.mrf.mxu0
    %2241 = vmatprep.mubr.bf16.mxu0 %v1594
    %2242 = vmatmul.mubr.bf16.gmra.mxu0 %v1593
    %v2243 = vpop.f32.mrf.mxu0
    %v2244 = vadd.f32 %v2023, %v2243
    %v2245 = vpop.f32.mrf.mxu0
    %v2246 = vpop.f32.mrf.mxu0
    %v2247 = vadd.f32 %v2023, %v2246
    %v2248 = vpop.f32.mrf.mxu0
    %2249 = vmatprep.mubr.bf16.mxu0 %v1596
    %2250 = vmatmul.mubr.bf16.gmra.mxu0 %v1595
    %v2251 = vpop.f32.mrf.mxu0
    %v2252 = vadd.f32 %v2023, %v2251
    %v2253 = vpop.f32.mrf.mxu0
    %v2254 = vpop.f32.mrf.mxu0
    %v2255 = vadd.f32 %v2023, %v2254
    %v2256 = vpop.f32.mrf.mxu0
    %2257 = vmatprep.mubr.bf16.mxu0 %v1598
    %2258 = vmatmul.mubr.bf16.gmra.mxu0 %v1597
    %v2259 = vpop.f32.mrf.mxu0
    %v2260 = vadd.f32 %v2023, %v2259
    %v2261 = vpop.f32.mrf.mxu0
    %v2262 = vpop.f32.mrf.mxu0
    %v2263 = vadd.f32 %v2023, %v2262
    %v2264 = vpop.f32.mrf.mxu0
    %2265 = vmatprep.mubr.bf16.mxu0 %v1600
    %2266 = vmatmul.mubr.bf16.gmra.mxu0 %v1599
    %v2267 = vpop.f32.mrf.mxu0
    %v2268 = vadd.f32 %v2023, %v2267
    %v2269 = vpop.f32.mrf.mxu0
    %v2270 = vpop.f32.mrf.mxu0
    %v2271 = vadd.f32 %v2023, %v2270
    %v2272 = vpop.f32.mrf.mxu0
    %2273 = vmatprep.mubr.bf16.mxu0 %v1602
    %2274 = vmatmul.mubr.bf16.gmra.mxu0 %v1601
    %v2275 = vpop.f32.mrf.mxu0
    %v2276 = vadd.f32 %v2023, %v2275
    %v2277 = vpop.f32.mrf.mxu0
    %v2278 = vpop.f32.mrf.mxu0
    %v2279 = vadd.f32 %v2023, %v2278
    %v2280 = vpop.f32.mrf.mxu0
    %2281 = vmatprep.mubr.bf16.mxu0 %v1604
    %2282 = vmatmul.mubr.bf16.gmra.mxu0 %v1603
    %v2283 = vpop.f32.mrf.mxu0
    %v2284 = vadd.f32 %v2023, %v2283
    %v2285 = vpop.f32.mrf.mxu0
    %v2286 = vpop.f32.mrf.mxu0
    %v2287 = vadd.f32 %v2023, %v2286
    %v2288 = vpop.f32.mrf.mxu0
    %2289 = vmatprep.mubr.bf16.mxu0 %v1606
    %2290 = vmatmul.mubr.bf16.gmra.mxu0 %v1605
    %v2291 = vpop.f32.mrf.mxu0
    %v2292 = vadd.f32 %v2023, %v2291
    %v2293 = vpop.f32.mrf.mxu0
    %v2294 = vpop.f32.mrf.mxu0
    %v2295 = vadd.f32 %v2023, %v2294
    %v2296 = vpop.f32.mrf.mxu0
    %2297 = vmatprep.mubr.bf16.mxu0 %v1608
    %2298 = vmatmul.mubr.bf16.gmra.mxu0 %v1607
    %v2299 = vpop.f32.mrf.mxu0
    %v2300 = vadd.f32 %v2023, %v2299
    %v2301 = vpop.f32.mrf.mxu0
    %v2302 = vpop.f32.mrf.mxu0
    %v2303 = vadd.f32 %v2023, %v2302
    %v2304 = vpop.f32.mrf.mxu0
    %2305 = vmatprep.mubr.bf16.mxu0 %v1610
    %2306 = vmatmul.mubr.bf16.gmra.mxu0 %v1609
    %v2307 = vpop.f32.mrf.mxu0
    %v2308 = vadd.f32 %v2023, %v2307
    %v2309 = vpop.f32.mrf.mxu0
    %v2310 = vpop.f32.mrf.mxu0
    %v2311 = vadd.f32 %v2023, %v2310
    %v2312 = vpop.f32.mrf.mxu0
    %2313 = vmatprep.mubr.bf16.mxu0 %v1612
    %2314 = vmatmul.mubr.bf16.gmra.mxu0 %v1611
    %v2315 = vpop.f32.mrf.mxu0
    %v2316 = vadd.f32 %v2023, %v2315
    %v2317 = vpop.f32.mrf.mxu0
    %v2318 = vpop.f32.mrf.mxu0
    %v2319 = vadd.f32 %v2023, %v2318
    %v2320 = vpop.f32.mrf.mxu0
    %2321 = vmatprep.mubr.bf16.mxu0 %v1614
    %2322 = vmatmul.mubr.bf16.gmra.mxu0 %v1613
    %v2323 = vpop.f32.mrf.mxu0
    %v2324 = vadd.f32 %v2023, %v2323
    %v2325 = vpop.f32.mrf.mxu0
    %v2326 = vpop.f32.mrf.mxu0
    %v2327 = vadd.f32 %v2023, %v2326
    %v2328 = vpop.f32.mrf.mxu0
    %2329 = vmatprep.mubr.bf16.mxu0 %v1616
    %2330 = vmatmul.mubr.bf16.gmra.mxu0 %v1615
    %v2331 = vpop.f32.mrf.mxu0
    %v2332 = vadd.f32 %v2023, %v2331
    %v2333 = vpop.f32.mrf.mxu0
    %v2334 = vpop.f32.mrf.mxu0
    %v2335 = vadd.f32 %v2023, %v2334
    %v2336 = vpop.f32.mrf.mxu0
    %2337 = vmatprep.mubr.bf16.mxu0 %v1618
    %2338 = vmatmul.mubr.bf16.gmra.mxu0 %v1617
    %v2339 = vpop.f32.mrf.mxu0
    %v2340 = vadd.f32 %v2023, %v2339
    %v2341 = vpop.f32.mrf.mxu0
    %v2342 = vpop.f32.mrf.mxu0
    %v2343 = vadd.f32 %v2023, %v2342
    %v2344 = vpop.f32.mrf.mxu0
    %2345 = vmatprep.mubr.bf16.mxu0 %v1620
    %2346 = vmatmul.mubr.bf16.gmra.mxu0 %v1619
    %v2347 = vpop.f32.mrf.mxu0
    %v2348 = vadd.f32 %v2023, %v2347
    %v2349 = vpop.f32.mrf.mxu0
    %v2350 = vpop.f32.mrf.mxu0
    %v2351 = vadd.f32 %v2023, %v2350
    %v2352 = vpop.f32.mrf.mxu0
    %2353 = vmatprep.mubr.bf16.mxu0 %v1622
    %2354 = vmatmul.mubr.bf16.gmra.mxu0 %v1621
    %v2355 = vpop.f32.mrf.mxu0
    %v2356 = vadd.f32 %v2023, %v2355
    %v2357 = vpop.f32.mrf.mxu0
    %v2358 = vpop.f32.mrf.mxu0
    %v2359 = vadd.f32 %v2023, %v2358
    %v2360 = vpop.f32.mrf.mxu0
    %2361 = vmatprep.mubr.bf16.mxu0 %v1624
    %2362 = vmatmul.mubr.bf16.gmra.mxu0 %v1623
    %v2363 = vpop.f32.mrf.mxu0
    %v2364 = vadd.f32 %v2023, %v2363
    %v2365 = vpop.f32.mrf.mxu0
    %v2366 = vpop.f32.mrf.mxu0
    %v2367 = vadd.f32 %v2023, %v2366
    %v2368 = vpop.f32.mrf.mxu0
    %2369 = vmatprep.mubr.bf16.mxu0 %v1626
    %2370 = vmatmul.mubr.bf16.gmra.mxu0 %v1625
    %v2371 = vpop.f32.mrf.mxu0
    %v2372 = vadd.f32 %v2023, %v2371
    %v2373 = vpop.f32.mrf.mxu0
    %v2374 = vpop.f32.mrf.mxu0
    %v2375 = vadd.f32 %v2023, %v2374
    %v2376 = vpop.f32.mrf.mxu0
    %2377 = vmatprep.mubr.bf16.mxu0 %v1628
    %2378 = vmatmul.mubr.bf16.gmra.mxu0 %v1627
    %v2379 = vpop.f32.mrf.mxu0
    %v2380 = vadd.f32 %v2023, %v2379
    %v2381 = vpop.f32.mrf.mxu0
    %v2382 = vpop.f32.mrf.mxu0
    %v2383 = vadd.f32 %v2023, %v2382
    %v2384 = vpop.f32.mrf.mxu0
    %2385 = vmatprep.mubr.bf16.mxu0 %v1630
    %2386 = vmatmul.mubr.bf16.gmra.mxu0 %v1629
    %v2387 = vpop.f32.mrf.mxu0
    %v2388 = vadd.f32 %v2023, %v2387
    %v2389 = vpop.f32.mrf.mxu0
    %v2390 = vpop.f32.mrf.mxu0
    %v2391 = vadd.f32 %v2023, %v2390
    %v2392 = vpop.f32.mrf.mxu0
    %2393 = vmatprep.mubr.bf16.mxu0 %v1632
    %2394 = vmatmul.mubr.bf16.gmra.mxu0 %v1631
    %v2395 = vpop.f32.mrf.mxu0
    %v2396 = vadd.f32 %v2023, %v2395
    %v2397 = vpop.f32.mrf.mxu0
    %v2398 = vpop.f32.mrf.mxu0
    %v2399 = vadd.f32 %v2023, %v2398
    %v2400 = vpop.f32.mrf.mxu0
    %2401 = vmatprep.mubr.bf16.mxu0 %v1634
    %2402 = vmatmul.mubr.bf16.gmra.mxu0 %v1633
    %v2403 = vpop.f32.mrf.mxu0
    %v2404 = vadd.f32 %v2023, %v2403
    %v2405 = vpop.f32.mrf.mxu0
    %v2406 = vpop.f32.mrf.mxu0
    %v2407 = vadd.f32 %v2023, %v2406
    %v2408 = vpop.f32.mrf.mxu0
    %2409 = vmatprep.mubr.bf16.mxu0 %v1892
    %2410 = vmatmul.mubr.bf16.gmra.mxu0 %v1891
    %v2411 = vpop.f32.mrf.mxu0
    %v2412 = vadd.f32 %v2023, %v2411
    %v2413 = vpop.f32.mrf.mxu0
    %v2414 = vpop.f32.mrf.mxu0
    %v2415 = vadd.f32 %v2023, %v2414
    %v2416 = vpop.f32.mrf.mxu0
    %2417 = vmatprep.mubr.bf16.mxu0 %v1894
    %2418 = vmatmul.mubr.bf16.gmra.mxu0 %v1893
    %v2419 = vpop.f32.mrf.mxu0
    %v2420 = vadd.f32 %v2023, %v2419
    %v2421 = vpop.f32.mrf.mxu0
    %v2422 = vpop.f32.mrf.mxu0
    %v2423 = vadd.f32 %v2023, %v2422
    %v2424 = vpop.f32.mrf.mxu0
    %2425 = vmatprep.mubr.bf16.mxu0 %v1896
    %2426 = vmatmul.mubr.bf16.gmra.mxu0 %v1895
    %v2427 = vpop.f32.mrf.mxu0
    %v2428 = vadd.f32 %v2023, %v2427
    %v2429 = vpop.f32.mrf.mxu0
    %v2430 = vpop.f32.mrf.mxu0
    %v2431 = vadd.f32 %v2023, %v2430
    %v2432 = vpop.f32.mrf.mxu0
    %2433 = vmatprep.mubr.bf16.mxu0 %v1898
    %2434 = vmatmul.mubr.bf16.gmra.mxu0 %v1897
    %v2435 = vpop.f32.mrf.mxu0
    %v2436 = vadd.f32 %v2023, %v2435
    %v2437 = vpop.f32.mrf.mxu0
    %v2438 = vpop.f32.mrf.mxu0
    %v2439 = vadd.f32 %v2023, %v2438
    %v2440 = vpop.f32.mrf.mxu0
    %2441 = vmatprep.mubr.bf16.mxu0 %v1900
    %2442 = vmatmul.mubr.bf16.gmra.mxu0 %v1899
    %v2443 = vpop.f32.mrf.mxu0
    %v2444 = vadd.f32 %v2023, %v2443
    %v2445 = vpop.f32.mrf.mxu0
    %v2446 = vpop.f32.mrf.mxu0
    %v2447 = vadd.f32 %v2023, %v2446
    %v2448 = vpop.f32.mrf.mxu0
    %2449 = vmatprep.mubr.bf16.mxu0 %v1902
    %2450 = vmatmul.mubr.bf16.gmra.mxu0 %v1901
    %v2451 = vpop.f32.mrf.mxu0
    %v2452 = vadd.f32 %v2023, %v2451
    %v2453 = vpop.f32.mrf.mxu0
    %v2454 = vpop.f32.mrf.mxu0
    %v2455 = vadd.f32 %v2023, %v2454
    %v2456 = vpop.f32.mrf.mxu0
    %2457 = vmatprep.mubr.bf16.mxu0 %v1904
    %2458 = vmatmul.mubr.bf16.gmra.mxu0 %v1903
    %v2459 = vpop.f32.mrf.mxu0
    %v2460 = vadd.f32 %v2023, %v2459
    %v2461 = vpop.f32.mrf.mxu0
    %v2462 = vpop.f32.mrf.mxu0
    %v2463 = vadd.f32 %v2023, %v2462
    %v2464 = vpop.f32.mrf.mxu0
    %2465 = vmatprep.mubr.bf16.mxu0 %v1906
    %2466 = vmatmul.mubr.bf16.gmra.mxu0 %v1905
    %v2467 = vpop.f32.mrf.mxu0
    %v2468 = vadd.f32 %v2023, %v2467
    %v2469 = vpop.f32.mrf.mxu0
    %v2470 = vpop.f32.mrf.mxu0
    %v2471 = vadd.f32 %v2023, %v2470
    %v2472 = vpop.f32.mrf.mxu0
    %2473 = vmatprep.mubr.bf16.mxu0 %v1908
    %2474 = vmatmul.mubr.bf16.gmra.mxu0 %v1907
    %v2475 = vpop.f32.mrf.mxu0
    %v2476 = vadd.f32 %v2023, %v2475
    %v2477 = vpop.f32.mrf.mxu0
    %v2478 = vpop.f32.mrf.mxu0
    %v2479 = vadd.f32 %v2023, %v2478
    %v2480 = vpop.f32.mrf.mxu0
    %2481 = vmatprep.mubr.bf16.mxu0 %v1910
    %2482 = vmatmul.mubr.bf16.gmra.mxu0 %v1909
    %v2483 = vpop.f32.mrf.mxu0
    %v2484 = vadd.f32 %v2023, %v2483
    %v2485 = vpop.f32.mrf.mxu0
    %v2486 = vpop.f32.mrf.mxu0
    %v2487 = vadd.f32 %v2023, %v2486
    %v2488 = vpop.f32.mrf.mxu0
    %2489 = vmatprep.mubr.bf16.mxu0 %v1912
    %2490 = vmatmul.mubr.bf16.gmra.mxu0 %v1911
    %v2491 = vpop.f32.mrf.mxu0
    %v2492 = vadd.f32 %v2023, %v2491
    %v2493 = vpop.f32.mrf.mxu0
    %v2494 = vpop.f32.mrf.mxu0
    %v2495 = vadd.f32 %v2023, %v2494
    %v2496 = vpop.f32.mrf.mxu0
    %2497 = vmatprep.mubr.bf16.mxu0 %v1914
    %2498 = vmatmul.mubr.bf16.gmra.mxu0 %v1913
    %v2499 = vpop.f32.mrf.mxu0
    %v2500 = vadd.f32 %v2023, %v2499
    %v2501 = vpop.f32.mrf.mxu0
    %v2502 = vpop.f32.mrf.mxu0
    %v2503 = vadd.f32 %v2023, %v2502
    %v2504 = vpop.f32.mrf.mxu0
    %2505 = vmatprep.mubr.bf16.mxu0 %v1916
    %2506 = vmatmul.mubr.bf16.gmra.mxu0 %v1915
    %v2507 = vpop.f32.mrf.mxu0
    %v2508 = vadd.f32 %v2023, %v2507
    %v2509 = vpop.f32.mrf.mxu0
    %v2510 = vpop.f32.mrf.mxu0
    %v2511 = vadd.f32 %v2023, %v2510
    %v2512 = vpop.f32.mrf.mxu0
    %2513 = vmatprep.mubr.bf16.mxu0 %v1918
    %2514 = vmatmul.mubr.bf16.gmra.mxu0 %v1917
    %v2515 = vpop.f32.mrf.mxu0
    %v2516 = vadd.f32 %v2023, %v2515
    %v2517 = vpop.f32.mrf.mxu0
    %v2518 = vpop.f32.mrf.mxu0
    %v2519 = vadd.f32 %v2023, %v2518
    %v2520 = vpop.f32.mrf.mxu0
    %2521 = vmatprep.mubr.bf16.mxu0 %v1920
    %2522 = vmatmul.mubr.bf16.gmra.mxu0 %v1919
    %v2523 = vpop.f32.mrf.mxu0
    %v2524 = vadd.f32 %v2023, %v2523
    %v2525 = vpop.f32.mrf.mxu0
    %v2526 = vpop.f32.mrf.mxu0
    %v2527 = vadd.f32 %v2023, %v2526
    %v2528 = vpop.f32.mrf.mxu0
    %2529 = vmatprep.mubr.bf16.mxu0 %v1922
    %2530 = vmatmul.mubr.bf16.gmra.mxu0 %v1921
    %v2531 = vpop.f32.mrf.mxu0
    %v2532 = vadd.f32 %v2023, %v2531
    %v2533 = vpop.f32.mrf.mxu0
    %v2534 = vpop.f32.mrf.mxu0
    %v2535 = vadd.f32 %v2023, %v2534
    %v2536 = vpop.f32.mrf.mxu0
    %2537 = vmatprep.mubr.bf16.mxu0 %v1924
    %2538 = vmatmul.mubr.bf16.gmra.mxu0 %v1923
    %v2539 = vpop.f32.mrf.mxu0
    %v2540 = vadd.f32 %v2023, %v2539
    %v2541 = vpop.f32.mrf.mxu0
    %v2542 = vpop.f32.mrf.mxu0
    %v2543 = vadd.f32 %v2023, %v2542
    %v2544 = vpop.f32.mrf.mxu0
    %2545 = vmatprep.mubr.bf16.mxu0 %v1926
    %2546 = vmatmul.mubr.bf16.gmra.mxu0 %v1925
    %v2547 = vpop.f32.mrf.mxu0
    %v2548 = vadd.f32 %v2023, %v2547
    %v2549 = vpop.f32.mrf.mxu0
    %v2550 = vpop.f32.mrf.mxu0
    %v2551 = vadd.f32 %v2023, %v2550
    %v2552 = vpop.f32.mrf.mxu0
    %2553 = vmatprep.mubr.bf16.mxu0 %v1928
    %2554 = vmatmul.mubr.bf16.gmra.mxu0 %v1927
    %v2555 = vpop.f32.mrf.mxu0
    %v2556 = vadd.f32 %v2023, %v2555
    %v2557 = vpop.f32.mrf.mxu0
    %v2558 = vpop.f32.mrf.mxu0
    %v2559 = vadd.f32 %v2023, %v2558
    %v2560 = vpop.f32.mrf.mxu0
    %2561 = vmatprep.mubr.bf16.mxu0 %v1930
    %2562 = vmatmul.mubr.bf16.gmra.mxu0 %v1929
    %v2563 = vpop.f32.mrf.mxu0
    %v2564 = vadd.f32 %v2023, %v2563
    %v2565 = vpop.f32.mrf.mxu0
    %v2566 = vpop.f32.mrf.mxu0
    %v2567 = vadd.f32 %v2023, %v2566
    %v2568 = vpop.f32.mrf.mxu0
    %2569 = vmatprep.mubr.bf16.mxu0 %v1932
    %2570 = vmatmul.mubr.bf16.gmra.mxu0 %v1931
    %v2571 = vpop.f32.mrf.mxu0
    %v2572 = vadd.f32 %v2023, %v2571
    %v2573 = vpop.f32.mrf.mxu0
    %v2574 = vpop.f32.mrf.mxu0
    %v2575 = vadd.f32 %v2023, %v2574
    %v2576 = vpop.f32.mrf.mxu0
    %2577 = vmatprep.mubr.bf16.mxu0 %v1934
    %2578 = vmatmul.mubr.bf16.gmra.mxu0 %v1933
    %v2579 = vpop.f32.mrf.mxu0
    %v2580 = vadd.f32 %v2023, %v2579
    %v2581 = vpop.f32.mrf.mxu0
    %v2582 = vpop.f32.mrf.mxu0
    %v2583 = vadd.f32 %v2023, %v2582
    %v2584 = vpop.f32.mrf.mxu0
    %2585 = vmatprep.mubr.bf16.mxu0 %v1936
    %2586 = vmatmul.mubr.bf16.gmra.mxu0 %v1935
    %v2587 = vpop.f32.mrf.mxu0
    %v2588 = vadd.f32 %v2023, %v2587
    %v2589 = vpop.f32.mrf.mxu0
    %v2590 = vpop.f32.mrf.mxu0
    %v2591 = vadd.f32 %v2023, %v2590
    %v2592 = vpop.f32.mrf.mxu0
    %2593 = vmatprep.mubr.bf16.mxu0 %v1938
    %2594 = vmatmul.mubr.bf16.gmra.mxu0 %v1937
    %v2595 = vpop.f32.mrf.mxu0
    %v2596 = vadd.f32 %v2023, %v2595
    %v2597 = vpop.f32.mrf.mxu0
    %v2598 = vpop.f32.mrf.mxu0
    %v2599 = vadd.f32 %v2023, %v2598
    %v2600 = vpop.f32.mrf.mxu0
    %2601 = vmatprep.mubr.bf16.mxu0 %v1940
    %2602 = vmatmul.mubr.bf16.gmra.mxu0 %v1939
    %v2603 = vpop.f32.mrf.mxu0
    %v2604 = vadd.f32 %v2023, %v2603
    %v2605 = vpop.f32.mrf.mxu0
    %v2606 = vpop.f32.mrf.mxu0
    %v2607 = vadd.f32 %v2023, %v2606
    %v2608 = vpop.f32.mrf.mxu0
    %2609 = vmatprep.mubr.bf16.mxu0 %v1942
    %2610 = vmatmul.mubr.bf16.gmra.mxu0 %v1941
    %v2611 = vpop.f32.mrf.mxu0
    %v2612 = vadd.f32 %v2023, %v2611
    %v2613 = vpop.f32.mrf.mxu0
    %v2614 = vpop.f32.mrf.mxu0
    %v2615 = vadd.f32 %v2023, %v2614
    %v2616 = vpop.f32.mrf.mxu0
    %2617 = vmatprep.mubr.bf16.mxu0 %v1944
    %2618 = vmatmul.mubr.bf16.gmra.mxu0 %v1943
    %v2619 = vpop.f32.mrf.mxu0
    %v2620 = vadd.f32 %v2023, %v2619
    %v2621 = vpop.f32.mrf.mxu0
    %v2622 = vpop.f32.mrf.mxu0
    %v2623 = vadd.f32 %v2023, %v2622
    %v2624 = vpop.f32.mrf.mxu0
    %2625 = vmatprep.mubr.bf16.mxu0 %v1946
    %2626 = vmatmul.mubr.bf16.gmra.mxu0 %v1945
    %v2627 = vpop.f32.mrf.mxu0
    %v2628 = vadd.f32 %v2023, %v2627
    %v2629 = vpop.f32.mrf.mxu0
    %v2630 = vpop.f32.mrf.mxu0
    %v2631 = vadd.f32 %v2023, %v2630
    %v2632 = vpop.f32.mrf.mxu0
    %2633 = vmatprep.mubr.bf16.mxu0 %v1948
    %2634 = vmatmul.mubr.bf16.gmra.mxu0 %v1947
    %v2635 = vpop.f32.mrf.mxu0
    %v2636 = vadd.f32 %v2023, %v2635
    %v2637 = vpop.f32.mrf.mxu0
    %v2638 = vpop.f32.mrf.mxu0
    %v2639 = vadd.f32 %v2023, %v2638
    %v2640 = vpop.f32.mrf.mxu0
    %2641 = vmatprep.mubr.bf16.mxu0 %v1950
    %2642 = vmatmul.mubr.bf16.gmra.mxu0 %v1949
    %v2643 = vpop.f32.mrf.mxu0
    %v2644 = vadd.f32 %v2023, %v2643
    %v2645 = vpop.f32.mrf.mxu0
    %v2646 = vpop.f32.mrf.mxu0
    %v2647 = vadd.f32 %v2023, %v2646
    %v2648 = vpop.f32.mrf.mxu0
    %2649 = vmatprep.mubr.bf16.mxu0 %v1952
    %2650 = vmatmul.mubr.bf16.gmra.mxu0 %v1951
    %v2651 = vpop.f32.mrf.mxu0
    %v2652 = vadd.f32 %v2023, %v2651
    %v2653 = vpop.f32.mrf.mxu0
    %v2654 = vpop.f32.mrf.mxu0
    %v2655 = vadd.f32 %v2023, %v2654
    %v2656 = vpop.f32.mrf.mxu0
    %2657 = vmatprep.mubr.bf16.mxu0 %v1954
    %2658 = vmatmul.mubr.bf16.gmra.mxu0 %v1953
    %v2659 = vpop.f32.mrf.mxu0
    %v2660 = vadd.f32 %v2023, %v2659
    %v2661 = vpop.f32.mrf.mxu0
    %v2662 = vpop.f32.mrf.mxu0
    %v2663 = vadd.f32 %v2023, %v2662
    %v2664 = vpop.f32.mrf.mxu0
    %2665 = vdwg.mxu0
    %v2666 = vmax.f32 %v2156, 0.0
    %v2667 = vmax.f32 %v2159, 0.0
    %v2668 = vmax.f32 %v2164, 0.0
    %v2669 = vmax.f32 %v2167, 0.0
    %v2670 = vmax.f32 %v2172, 0.0
    %v2671 = vmax.f32 %v2175, 0.0
    %v2672 = vmax.f32 %v2180, 0.0
    %v2673 = vmax.f32 %v2183, 0.0
    %v2674 = vmax.f32 %v2188, 0.0
    %v2675 = vmax.f32 %v2191, 0.0
    %v2676 = vmax.f32 %v2196, 0.0
    %v2677 = vmax.f32 %v2199, 0.0
    %v2678 = vmax.f32 %v2204, 0.0
    %v2679 = vmax.f32 %v2207, 0.0
    %v2680 = vmax.f32 %v2212, 0.0
    %v2681 = vmax.f32 %v2215, 0.0
    %v2682 = vmax.f32 %v2220, 0.0
    %v2683 = vmax.f32 %v2223, 0.0
    %v2684 = vmax.f32 %v2228, 0.0
    %v2685 = vmax.f32 %v2231, 0.0
    %v2686 = vmax.f32 %v2236, 0.0
    %v2687 = vmax.f32 %v2239, 0.0
    %v2688 = vmax.f32 %v2244, 0.0
    %v2689 = vmax.f32 %v2247, 0.0
    %v2690 = vmax.f32 %v2252, 0.0
    %v2691 = vmax.f32 %v2255, 0.0
    %v2692 = vmax.f32 %v2260, 0.0
    %v2693 = vmax.f32 %v2263, 0.0
    %v2694 = vmax.f32 %v2268, 0.0
    %v2695 = vmax.f32 %v2271, 0.0
    %v2696 = vmax.f32 %v2276, 0.0
    %v2697 = vmax.f32 %v2279, 0.0
    %v2698 = vmax.f32 %v2284, 0.0
    %v2699 = vmax.f32 %v2287, 0.0
    %v2700 = vmax.f32 %v2292, 0.0
    %v2701 = vmax.f32 %v2295, 0.0
    %v2702 = vmax.f32 %v2300, 0.0
    %v2703 = vmax.f32 %v2303, 0.0
    %v2704 = vmax.f32 %v2308, 0.0
    %v2705 = vmax.f32 %v2311, 0.0
    %v2706 = vmax.f32 %v2316, 0.0
    %v2707 = vmax.f32 %v2319, 0.0
    %v2708 = vmax.f32 %v2324, 0.0
    %v2709 = vmax.f32 %v2327, 0.0
    %v2710 = vmax.f32 %v2332, 0.0
    %v2711 = vmax.f32 %v2335, 0.0
    %v2712 = vmax.f32 %v2340, 0.0
    %v2713 = vmax.f32 %v2343, 0.0
    %v2714 = vmax.f32 %v2348, 0.0
    %v2715 = vmax.f32 %v2351, 0.0
    %v2716 = vmax.f32 %v2356, 0.0
    %v2717 = vmax.f32 %v2359, 0.0
    %v2718 = vmax.f32 %v2364, 0.0
    %v2719 = vmax.f32 %v2367, 0.0
    %v2720 = vmax.f32 %v2372, 0.0
    %v2721 = vmax.f32 %v2375, 0.0
    %v2722 = vmax.f32 %v2380, 0.0
    %v2723 = vmax.f32 %v2383, 0.0
    %v2724 = vmax.f32 %v2388, 0.0
    %v2725 = vmax.f32 %v2391, 0.0
    %v2726 = vmax.f32 %v2396, 0.0
    %v2727 = vmax.f32 %v2399, 0.0
    %v2728 = vmax.f32 %v2404, 0.0
    %v2729 = vmax.f32 %v2407, 0.0
    %v2730 = vmax.f32 %v2412, 0.0
    %v2731 = vmax.f32 %v2415, 0.0
    %v2732 = vmax.f32 %v2420, 0.0
    %v2733 = vmax.f32 %v2423, 0.0
    %v2734 = vmax.f32 %v2428, 0.0
    %v2735 = vmax.f32 %v2431, 0.0
    %v2736 = vmax.f32 %v2436, 0.0
    %v2737 = vmax.f32 %v2439, 0.0
    %v2738 = vmax.f32 %v2444, 0.0
    %v2739 = vmax.f32 %v2447, 0.0
    %v2740 = vmax.f32 %v2452, 0.0
    %v2741 = vmax.f32 %v2455, 0.0
    %v2742 = vmax.f32 %v2460, 0.0
    %v2743 = vmax.f32 %v2463, 0.0
    %v2744 = vmax.f32 %v2468, 0.0
    %v2745 = vmax.f32 %v2471, 0.0
    %v2746 = vmax.f32 %v2476, 0.0
    %v2747 = vmax.f32 %v2479, 0.0
    %v2748 = vmax.f32 %v2484, 0.0
    %v2749 = vmax.f32 %v2487, 0.0
    %v2750 = vmax.f32 %v2492, 0.0
    %v2751 = vmax.f32 %v2495, 0.0
    %v2752 = vmax.f32 %v2500, 0.0
    %v2753 = vmax.f32 %v2503, 0.0
    %v2754 = vmax.f32 %v2508, 0.0
    %v2755 = vmax.f32 %v2511, 0.0
    %v2756 = vmax.f32 %v2516, 0.0
    %v2757 = vmax.f32 %v2519, 0.0
    %v2758 = vmax.f32 %v2524, 0.0
    %v2759 = vmax.f32 %v2527, 0.0
    %v2760 = vmax.f32 %v2532, 0.0
    %v2761 = vmax.f32 %v2535, 0.0
    %v2762 = vmax.f32 %v2540, 0.0
    %v2763 = vmax.f32 %v2543, 0.0
    %v2764 = vmax.f32 %v2548, 0.0
    %v2765 = vmax.f32 %v2551, 0.0
    %v2766 = vmax.f32 %v2556, 0.0
    %v2767 = vmax.f32 %v2559, 0.0
    %v2768 = vmax.f32 %v2564, 0.0
    %v2769 = vmax.f32 %v2567, 0.0
    %v2770 = vmax.f32 %v2572, 0.0
    %v2771 = vmax.f32 %v2575, 0.0
    %v2772 = vmax.f32 %v2580, 0.0
    %v2773 = vmax.f32 %v2583, 0.0
    %v2774 = vmax.f32 %v2588, 0.0
    %v2775 = vmax.f32 %v2591, 0.0
    %v2776 = vmax.f32 %v2596, 0.0
    %v2777 = vmax.f32 %v2599, 0.0
    %v2778 = vmax.f32 %v2604, 0.0
    %v2779 = vmax.f32 %v2607, 0.0
    %v2780 = vmax.f32 %v2612, 0.0
    %v2781 = vmax.f32 %v2615, 0.0
    %v2782 = vmax.f32 %v2620, 0.0
    %v2783 = vmax.f32 %v2623, 0.0
    %v2784 = vmax.f32 %v2628, 0.0
    %v2785 = vmax.f32 %v2631, 0.0
    %v2786 = vmax.f32 %v2636, 0.0
    %v2787 = vmax.f32 %v2639, 0.0
    %v2788 = vmax.f32 %v2644, 0.0
    %v2789 = vmax.f32 %v2647, 0.0
    %v2790 = vmax.f32 %v2652, 0.0
    %v2791 = vmax.f32 %v2655, 0.0
    %v2792 = vmax.f32 %v2660, 0.0
    %v2793 = vmax.f32 %v2663, 0.0
    %v2794 = vpack.c.bf16 %v2667, %v2666
    %v2795 = vpack.c.bf16 %v2669, %v2668
    %v2796 = vpack.c.bf16 %v2671, %v2670
    %v2797 = vpack.c.bf16 %v2673, %v2672
    %v2798 = vpack.c.bf16 %v2675, %v2674
    %v2799 = vpack.c.bf16 %v2677, %v2676
    %v2800 = vpack.c.bf16 %v2679, %v2678
    %v2801 = vpack.c.bf16 %v2681, %v2680
    %v2802 = vpack.c.bf16 %v2683, %v2682
    %v2803 = vpack.c.bf16 %v2685, %v2684
    %v2804 = vpack.c.bf16 %v2687, %v2686
    %v2805 = vpack.c.bf16 %v2689, %v2688
    %v2806 = vpack.c.bf16 %v2691, %v2690
    %v2807 = vpack.c.bf16 %v2693, %v2692
    %v2808 = vpack.c.bf16 %v2695, %v2694
    %v2809 = vpack.c.bf16 %v2697, %v2696
    %v2810 = vpack.c.bf16 %v2699, %v2698
    %v2811 = vpack.c.bf16 %v2701, %v2700
    %v2812 = vpack.c.bf16 %v2703, %v2702
    %v2813 = vpack.c.bf16 %v2705, %v2704
    %v2814 = vpack.c.bf16 %v2707, %v2706
    %v2815 = vpack.c.bf16 %v2709, %v2708
    %v2816 = vpack.c.bf16 %v2711, %v2710
    %v2817 = vpack.c.bf16 %v2713, %v2712
    %v2818 = vpack.c.bf16 %v2715, %v2714
    %v2819 = vpack.c.bf16 %v2717, %v2716
    %v2820 = vpack.c.bf16 %v2719, %v2718
    %v2821 = vpack.c.bf16 %v2721, %v2720
    %v2822 = vpack.c.bf16 %v2723, %v2722
    %v2823 = vpack.c.bf16 %v2725, %v2724
    %v2824 = vpack.c.bf16 %v2727, %v2726
    %v2825 = vpack.c.bf16 %v2729, %v2728
    %v2826 = vpack.c.bf16 %v2731, %v2730
    %v2827 = vpack.c.bf16 %v2733, %v2732
    %v2828 = vpack.c.bf16 %v2735, %v2734
    %v2829 = vpack.c.bf16 %v2737, %v2736
    %v2830 = vpack.c.bf16 %v2739, %v2738
    %v2831 = vpack.c.bf16 %v2741, %v2740
    %v2832 = vpack.c.bf16 %v2743, %v2742
    %v2833 = vpack.c.bf16 %v2745, %v2744
    %v2834 = vpack.c.bf16 %v2747, %v2746
    %v2835 = vpack.c.bf16 %v2749, %v2748
    %v2836 = vpack.c.bf16 %v2751, %v2750
    %v2837 = vpack.c.bf16 %v2753, %v2752
    %v2838 = vpack.c.bf16 %v2755, %v2754
    %v2839 = vpack.c.bf16 %v2757, %v2756
    %v2840 = vpack.c.bf16 %v2759, %v2758
    %v2841 = vpack.c.bf16 %v2761, %v2760
    %v2842 = vpack.c.bf16 %v2763, %v2762
    %v2843 = vpack.c.bf16 %v2765, %v2764
    %v2844 = vpack.c.bf16 %v2767, %v2766
    %v2845 = vpack.c.bf16 %v2769, %v2768
    %v2846 = vpack.c.bf16 %v2771, %v2770
    %v2847 = vpack.c.bf16 %v2773, %v2772
    %v2848 = vpack.c.bf16 %v2775, %v2774
    %v2849 = vpack.c.bf16 %v2777, %v2776
    %v2850 = vpack.c.bf16 %v2779, %v2778
    %v2851 = vpack.c.bf16 %v2781, %v2780
    %v2852 = vpack.c.bf16 %v2783, %v2782
    %v2853 = vpack.c.bf16 %v2785, %v2784
    %v2854 = vpack.c.bf16 %v2787, %v2786
    %v2855 = vpack.c.bf16 %v2789, %v2788
    %v2856 = vpack.c.bf16 %v2791, %v2790
    %v2857 = vpack.c.bf16 %v2793, %v2792
    %v2858 = vmul.bf16 %v2794, %v1181
    %v2859 = vmul.bf16 %v2795, %v1182
    %v2860 = vmul.bf16 %v2796, %v1183
    %v2861 = vmul.bf16 %v2797, %v1184
    %v2862 = vmul.bf16 %v2798, %v1185
    %v2863 = vmul.bf16 %v2799, %v1186
    %v2864 = vmul.bf16 %v2800, %v1187
    %v2865 = vmul.bf16 %v2801, %v1188
    %v2866 = vmul.bf16 %v2802, %v1189
    %v2867 = vmul.bf16 %v2803, %v1190
    %v2868 = vmul.bf16 %v2804, %v1191
    %v2869 = vmul.bf16 %v2805, %v1192
    %v2870 = vmul.bf16 %v2806, %v1193
    %v2871 = vmul.bf16 %v2807, %v1194
    %v2872 = vmul.bf16 %v2808, %v1195
    %v2873 = vmul.bf16 %v2809, %v1196
    %v2874 = vmul.bf16 %v2810, %v1197
    %v2875 = vmul.bf16 %v2811, %v1198
    %v2876 = vmul.bf16 %v2812, %v1199
    %v2877 = vmul.bf16 %v2813, %v1200
    %v2878 = vmul.bf16 %v2814, %v1201
    %v2879 = vmul.bf16 %v2815, %v1202
    %v2880 = vmul.bf16 %v2816, %v1203
    %v2881 = vmul.bf16 %v2817, %v1204
    %v2882 = vmul.bf16 %v2818, %v1205
    %v2883 = vmul.bf16 %v2819, %v1206
    %v2884 = vmul.bf16 %v2820, %v1207
    %v2885 = vmul.bf16 %v2821, %v1208
    %v2886 = vmul.bf16 %v2822, %v1209
    %v2887 = vmul.bf16 %v2823, %v1210
    %v2888 = vmul.bf16 %v2824, %v1211
    %v2889 = vmul.bf16 %v2825, %v1212
    %v2890 = vmul.bf16 %v2826, %v1213
    %v2891 = vmul.bf16 %v2827, %v1214
    %v2892 = vmul.bf16 %v2828, %v1215
    %v2893 = vmul.bf16 %v2829, %v1216
    %v2894 = vmul.bf16 %v2830, %v1217
    %v2895 = vmul.bf16 %v2831, %v1218
    %v2896 = vmul.bf16 %v2832, %v1219
    %v2897 = vmul.bf16 %v2833, %v1220
    %v2898 = vmul.bf16 %v2834, %v1221
    %v2899 = vmul.bf16 %v2835, %v1222
    %v2900 = vmul.bf16 %v2836, %v1223
    %v2901 = vmul.bf16 %v2837, %v1224
    %v2902 = vmul.bf16 %v2838, %v1225
    %v2903 = vmul.bf16 %v2839, %v1226
    %v2904 = vmul.bf16 %v2840, %v1227
    %v2905 = vmul.bf16 %v2841, %v1228
    %v2906 = vmul.bf16 %v2842, %v1229
    %v2907 = vmul.bf16 %v2843, %v1230
    %v2908 = vmul.bf16 %v2844, %v1231
    %v2909 = vmul.bf16 %v2845, %v1232
    %v2910 = vmul.bf16 %v2846, %v1233
    %v2911 = vmul.bf16 %v2847, %v1234
    %v2912 = vmul.bf16 %v2848, %v1235
    %v2913 = vmul.bf16 %v2849, %v1236
    %v2914 = vmul.bf16 %v2850, %v1237
    %v2915 = vmul.bf16 %v2851, %v1238
    %v2916 = vmul.bf16 %v2852, %v1239
    %v2917 = vmul.bf16 %v2853, %v1240
    %v2918 = vmul.bf16 %v2854, %v1241
    %v2919 = vmul.bf16 %v2855, %v1242
    %v2920 = vmul.bf16 %v2856, %v1243
    %v2921 = vmul.bf16 %v2857, %v1244
    %v2923 = vlaneseq
    %v2924 = vshrl.u32 %v2923, 7
    %v2925 = vsub.s32 0, %v2924
    %v2926 = vrot.slane %v151, %v2925
    %v2944 = vunpack.c.l.b16 %v134
    %v2945 = vunpack.c.l.b16 %v135
    %v2946 = vunpack.c.l.b16 %v136
    %v2947 = vunpack.c.l.b16 %v137
    %v2948 = vunpack.c.l.b16 %v138
    %v2949 = vunpack.c.l.b16 %v139
    %v2950 = vunpack.c.l.b16 %v140
    %v2951 = vunpack.c.l.b16 %v141
    %v2952 = vunpack.c.l.b16 %v142
    %v2953 = vunpack.c.l.b16 %v143
    %v2954 = vunpack.c.l.b16 %v144
    %v2955 = vunpack.c.l.b16 %v145
    %v2956 = vunpack.c.l.b16 %v146
    %v2957 = vunpack.c.l.b16 %v147
    %v2958 = vunpack.c.l.b16 %v148
    %v2959 = vunpack.c.l.b16 %v149
    %v2960 = vpack.c.b16 %v2945, %v2944
    %v2961 = vpack.c.b16 %v2947, %v2946
    %v2962 = vpack.c.b16 %v2949, %v2948
    %v2963 = vpack.c.b16 %v2951, %v2950
    %v2964 = vpack.c.b16 %v2953, %v2952
    %v2965 = vpack.c.b16 %v2955, %v2954
    %v2966 = vpack.c.b16 %v2957, %v2956
    %v2967 = vpack.c.b16 %v2959, %v2958
    %2976 = vmatprep.subr.bf16.mxu0 0
    %2977 = vmatpush1.bf16.msra.mxu0 %v2967
    %2978 = vmatprep.subr.bf16.mxu0 0
    %2979 = vmatpush1.bf16.msra.mxu0 %v2966
    %2980 = vmatprep.subr.bf16.mxu0 0
    %2981 = vmatpush1.bf16.msra.mxu0 %v2965
    %2982 = vmatprep.subr.bf16.mxu0 0
    %2983 = vmatpush1.bf16.msra.mxu0 %v2964
    %2984 = vmatprep.subr.bf16.mxu0 0
    %2985 = vmatpush1.bf16.msra.mxu0 %v2963
    %2986 = vmatprep.subr.bf16.mxu0 0
    %2987 = vmatpush1.bf16.msra.mxu0 %v2962
    %2988 = vmatprep.subr.bf16.mxu0 0
    %2989 = vmatpush1.bf16.msra.mxu0 %v2961
    %2990 = vmatprep.subr.bf16.mxu0 0
    %2991 = vmatpush1.bf16.msra.mxu0 %v2960
    %2992 = vmatprep.subr.bf16.mxu0 0
    %2993 = vmatpush2.bf16.msra.mxu0 0
    %2994 = vmatprep.subr.bf16.mxu0 0
    %2995 = vmatpush2.bf16.msra.mxu0 0
    %2996 = vmatprep.subr.bf16.mxu0 0
    %2997 = vmatpush2.bf16.msra.mxu0 0
    %2998 = vmatprep.subr.bf16.mxu0 0
    %2999 = vmatpush2.bf16.msra.mxu0 0
    %3000 = vmatprep.subr.bf16.mxu0 0
    %3001 = vmatpush2.bf16.msra.mxu0 0
    %3002 = vmatprep.subr.bf16.mxu0 0
    %3003 = vmatpush2.bf16.msra.mxu0 0
    %3004 = vmatprep.subr.bf16.mxu0 0
    %3005 = vmatpush2.bf16.msra.mxu0 0
    %3006 = vmatprep.subr.bf16.mxu0 0
    %3007 = vmatpush2.bf16.msra.mxu0 0
    %3008 = vmatprep.mubr.bf16.mxu0 0
    %3009 = vmatmul.mubr.bf16.gmra.mxu0 %v2858
    %v3010 = vpop.f32.mrf.mxu0
    %v3011 = vadd.f32 %v2926, %v3010
    %v3012 = vpop.f32.mrf.mxu0
    %v3013 = vpop.f32.mrf.mxu0
    %v3014 = vadd.f32 %v2926, %v3013
    %v3015 = vpop.f32.mrf.mxu0
    %3016 = vmatprep.mubr.bf16.mxu0 0
    %3017 = vmatmul.mubr.bf16.gmra.mxu0 %v2859
    %v3018 = vpop.f32.mrf.mxu0
    %v3019 = vadd.f32 %v2926, %v3018
    %v3020 = vpop.f32.mrf.mxu0
    %v3021 = vpop.f32.mrf.mxu0
    %v3022 = vadd.f32 %v2926, %v3021
    %v3023 = vpop.f32.mrf.mxu0
    %3024 = vmatprep.mubr.bf16.mxu0 0
    %3025 = vmatmul.mubr.bf16.gmra.mxu0 %v2860
    %v3026 = vpop.f32.mrf.mxu0
    %v3027 = vadd.f32 %v2926, %v3026
    %v3028 = vpop.f32.mrf.mxu0
    %v3029 = vpop.f32.mrf.mxu0
    %v3030 = vadd.f32 %v2926, %v3029
    %v3031 = vpop.f32.mrf.mxu0
    %3032 = vmatprep.mubr.bf16.mxu0 0
    %3033 = vmatmul.mubr.bf16.gmra.mxu0 %v2861
    %v3034 = vpop.f32.mrf.mxu0
    %v3035 = vadd.f32 %v2926, %v3034
    %v3036 = vpop.f32.mrf.mxu0
    %v3037 = vpop.f32.mrf.mxu0
    %v3038 = vadd.f32 %v2926, %v3037
    %v3039 = vpop.f32.mrf.mxu0
    %3040 = vmatprep.mubr.bf16.mxu0 0
    %3041 = vmatmul.mubr.bf16.gmra.mxu0 %v2862
    %v3042 = vpop.f32.mrf.mxu0
    %v3043 = vadd.f32 %v2926, %v3042
    %v3044 = vpop.f32.mrf.mxu0
    %v3045 = vpop.f32.mrf.mxu0
    %v3046 = vadd.f32 %v2926, %v3045
    %v3047 = vpop.f32.mrf.mxu0
    %3048 = vmatprep.mubr.bf16.mxu0 0
    %3049 = vmatmul.mubr.bf16.gmra.mxu0 %v2863
    %v3050 = vpop.f32.mrf.mxu0
    %v3051 = vadd.f32 %v2926, %v3050
    %v3052 = vpop.f32.mrf.mxu0
    %v3053 = vpop.f32.mrf.mxu0
    %v3054 = vadd.f32 %v2926, %v3053
    %v3055 = vpop.f32.mrf.mxu0
    %3056 = vmatprep.mubr.bf16.mxu0 0
    %3057 = vmatmul.mubr.bf16.gmra.mxu0 %v2864
    %v3058 = vpop.f32.mrf.mxu0
    %v3059 = vadd.f32 %v2926, %v3058
    %v3060 = vpop.f32.mrf.mxu0
    %v3061 = vpop.f32.mrf.mxu0
    %v3062 = vadd.f32 %v2926, %v3061
    %v3063 = vpop.f32.mrf.mxu0
    %3064 = vmatprep.mubr.bf16.mxu0 0
    %3065 = vmatmul.mubr.bf16.gmra.mxu0 %v2865
    %v3066 = vpop.f32.mrf.mxu0
    %v3067 = vadd.f32 %v2926, %v3066
    %v3068 = vpop.f32.mrf.mxu0
    %v3069 = vpop.f32.mrf.mxu0
    %v3070 = vadd.f32 %v2926, %v3069
    %v3071 = vpop.f32.mrf.mxu0
    %3072 = vmatprep.mubr.bf16.mxu0 0
    %3073 = vmatmul.mubr.bf16.gmra.mxu0 %v2866
    %v3074 = vpop.f32.mrf.mxu0
    %v3075 = vadd.f32 %v2926, %v3074
    %v3076 = vpop.f32.mrf.mxu0
    %v3077 = vpop.f32.mrf.mxu0
    %v3078 = vadd.f32 %v2926, %v3077
    %v3079 = vpop.f32.mrf.mxu0
    %3080 = vmatprep.mubr.bf16.mxu0 0
    %3081 = vmatmul.mubr.bf16.gmra.mxu0 %v2867
    %v3082 = vpop.f32.mrf.mxu0
    %v3083 = vadd.f32 %v2926, %v3082
    %v3084 = vpop.f32.mrf.mxu0
    %v3085 = vpop.f32.mrf.mxu0
    %v3086 = vadd.f32 %v2926, %v3085
    %v3087 = vpop.f32.mrf.mxu0
    %3088 = vmatprep.mubr.bf16.mxu0 0
    %3089 = vmatmul.mubr.bf16.gmra.mxu0 %v2868
    %v3090 = vpop.f32.mrf.mxu0
    %v3091 = vadd.f32 %v2926, %v3090
    %v3092 = vpop.f32.mrf.mxu0
    %v3093 = vpop.f32.mrf.mxu0
    %v3094 = vadd.f32 %v2926, %v3093
    %v3095 = vpop.f32.mrf.mxu0
    %3096 = vmatprep.mubr.bf16.mxu0 0
    %3097 = vmatmul.mubr.bf16.gmra.mxu0 %v2869
    %v3098 = vpop.f32.mrf.mxu0
    %v3099 = vadd.f32 %v2926, %v3098
    %v3100 = vpop.f32.mrf.mxu0
    %v3101 = vpop.f32.mrf.mxu0
    %v3102 = vadd.f32 %v2926, %v3101
    %v3103 = vpop.f32.mrf.mxu0
    %3104 = vmatprep.mubr.bf16.mxu0 0
    %3105 = vmatmul.mubr.bf16.gmra.mxu0 %v2870
    %v3106 = vpop.f32.mrf.mxu0
    %v3107 = vadd.f32 %v2926, %v3106
    %v3108 = vpop.f32.mrf.mxu0
    %v3109 = vpop.f32.mrf.mxu0
    %v3110 = vadd.f32 %v2926, %v3109
    %v3111 = vpop.f32.mrf.mxu0
    %3112 = vmatprep.mubr.bf16.mxu0 0
    %3113 = vmatmul.mubr.bf16.gmra.mxu0 %v2871
    %v3114 = vpop.f32.mrf.mxu0
    %v3115 = vadd.f32 %v2926, %v3114
    %v3116 = vpop.f32.mrf.mxu0
    %v3117 = vpop.f32.mrf.mxu0
    %v3118 = vadd.f32 %v2926, %v3117
    %v3119 = vpop.f32.mrf.mxu0
    %3120 = vmatprep.mubr.bf16.mxu0 0
    %3121 = vmatmul.mubr.bf16.gmra.mxu0 %v2872
    %v3122 = vpop.f32.mrf.mxu0
    %v3123 = vadd.f32 %v2926, %v3122
    %v3124 = vpop.f32.mrf.mxu0
    %v3125 = vpop.f32.mrf.mxu0
    %v3126 = vadd.f32 %v2926, %v3125
    %v3127 = vpop.f32.mrf.mxu0
    %3128 = vmatprep.mubr.bf16.mxu0 0
    %3129 = vmatmul.mubr.bf16.gmra.mxu0 %v2873
    %v3130 = vpop.f32.mrf.mxu0
    %v3131 = vadd.f32 %v2926, %v3130
    %v3132 = vpop.f32.mrf.mxu0
    %v3133 = vpop.f32.mrf.mxu0
    %v3134 = vadd.f32 %v2926, %v3133
    %v3135 = vpop.f32.mrf.mxu0
    %3136 = vmatprep.mubr.bf16.mxu0 0
    %3137 = vmatmul.mubr.bf16.gmra.mxu0 %v2874
    %v3138 = vpop.f32.mrf.mxu0
    %v3139 = vadd.f32 %v2926, %v3138
    %v3140 = vpop.f32.mrf.mxu0
    %v3141 = vpop.f32.mrf.mxu0
    %v3142 = vadd.f32 %v2926, %v3141
    %v3143 = vpop.f32.mrf.mxu0
    %3144 = vmatprep.mubr.bf16.mxu0 0
    %3145 = vmatmul.mubr.bf16.gmra.mxu0 %v2875
    %v3146 = vpop.f32.mrf.mxu0
    %v3147 = vadd.f32 %v2926, %v3146
    %v3148 = vpop.f32.mrf.mxu0
    %v3149 = vpop.f32.mrf.mxu0
    %v3150 = vadd.f32 %v2926, %v3149
    %v3151 = vpop.f32.mrf.mxu0
    %3152 = vmatprep.mubr.bf16.mxu0 0
    %3153 = vmatmul.mubr.bf16.gmra.mxu0 %v2876
    %v3154 = vpop.f32.mrf.mxu0
    %v3155 = vadd.f32 %v2926, %v3154
    %v3156 = vpop.f32.mrf.mxu0
    %v3157 = vpop.f32.mrf.mxu0
    %v3158 = vadd.f32 %v2926, %v3157
    %v3159 = vpop.f32.mrf.mxu0
    %3160 = vmatprep.mubr.bf16.mxu0 0
    %3161 = vmatmul.mubr.bf16.gmra.mxu0 %v2877
    %v3162 = vpop.f32.mrf.mxu0
    %v3163 = vadd.f32 %v2926, %v3162
    %v3164 = vpop.f32.mrf.mxu0
    %v3165 = vpop.f32.mrf.mxu0
    %v3166 = vadd.f32 %v2926, %v3165
    %v3167 = vpop.f32.mrf.mxu0
    %3168 = vmatprep.mubr.bf16.mxu0 0
    %3169 = vmatmul.mubr.bf16.gmra.mxu0 %v2878
    %v3170 = vpop.f32.mrf.mxu0
    %v3171 = vadd.f32 %v2926, %v3170
    %v3172 = vpop.f32.mrf.mxu0
    %v3173 = vpop.f32.mrf.mxu0
    %v3174 = vadd.f32 %v2926, %v3173
    %v3175 = vpop.f32.mrf.mxu0
    %3176 = vmatprep.mubr.bf16.mxu0 0
    %3177 = vmatmul.mubr.bf16.gmra.mxu0 %v2879
    %v3178 = vpop.f32.mrf.mxu0
    %v3179 = vadd.f32 %v2926, %v3178
    %v3180 = vpop.f32.mrf.mxu0
    %v3181 = vpop.f32.mrf.mxu0
    %v3182 = vadd.f32 %v2926, %v3181
    %v3183 = vpop.f32.mrf.mxu0
    %3184 = vmatprep.mubr.bf16.mxu0 0
    %3185 = vmatmul.mubr.bf16.gmra.mxu0 %v2880
    %v3186 = vpop.f32.mrf.mxu0
    %v3187 = vadd.f32 %v2926, %v3186
    %v3188 = vpop.f32.mrf.mxu0
    %v3189 = vpop.f32.mrf.mxu0
    %v3190 = vadd.f32 %v2926, %v3189
    %v3191 = vpop.f32.mrf.mxu0
    %3192 = vmatprep.mubr.bf16.mxu0 0
    %3193 = vmatmul.mubr.bf16.gmra.mxu0 %v2881
    %v3194 = vpop.f32.mrf.mxu0
    %v3195 = vadd.f32 %v2926, %v3194
    %v3196 = vpop.f32.mrf.mxu0
    %v3197 = vpop.f32.mrf.mxu0
    %v3198 = vadd.f32 %v2926, %v3197
    %v3199 = vpop.f32.mrf.mxu0
    %3200 = vmatprep.mubr.bf16.mxu0 0
    %3201 = vmatmul.mubr.bf16.gmra.mxu0 %v2882
    %v3202 = vpop.f32.mrf.mxu0
    %v3203 = vadd.f32 %v2926, %v3202
    %v3204 = vpop.f32.mrf.mxu0
    %v3205 = vpop.f32.mrf.mxu0
    %v3206 = vadd.f32 %v2926, %v3205
    %v3207 = vpop.f32.mrf.mxu0
    %3208 = vmatprep.mubr.bf16.mxu0 0
    %3209 = vmatmul.mubr.bf16.gmra.mxu0 %v2883
    %v3210 = vpop.f32.mrf.mxu0
    %v3211 = vadd.f32 %v2926, %v3210
    %v3212 = vpop.f32.mrf.mxu0
    %v3213 = vpop.f32.mrf.mxu0
    %v3214 = vadd.f32 %v2926, %v3213
    %v3215 = vpop.f32.mrf.mxu0
    %3216 = vmatprep.mubr.bf16.mxu0 0
    %3217 = vmatmul.mubr.bf16.gmra.mxu0 %v2884
    %v3218 = vpop.f32.mrf.mxu0
    %v3219 = vadd.f32 %v2926, %v3218
    %v3220 = vpop.f32.mrf.mxu0
    %v3221 = vpop.f32.mrf.mxu0
    %v3222 = vadd.f32 %v2926, %v3221
    %v3223 = vpop.f32.mrf.mxu0
    %3224 = vmatprep.mubr.bf16.mxu0 0
    %3225 = vmatmul.mubr.bf16.gmra.mxu0 %v2885
    %v3226 = vpop.f32.mrf.mxu0
    %v3227 = vadd.f32 %v2926, %v3226
    %v3228 = vpop.f32.mrf.mxu0
    %v3229 = vpop.f32.mrf.mxu0
    %v3230 = vadd.f32 %v2926, %v3229
    %v3231 = vpop.f32.mrf.mxu0
    %3232 = vmatprep.mubr.bf16.mxu0 0
    %3233 = vmatmul.mubr.bf16.gmra.mxu0 %v2886
    %v3234 = vpop.f32.mrf.mxu0
    %v3235 = vadd.f32 %v2926, %v3234
    %v3236 = vpop.f32.mrf.mxu0
    %v3237 = vpop.f32.mrf.mxu0
    %v3238 = vadd.f32 %v2926, %v3237
    %v3239 = vpop.f32.mrf.mxu0
    %3240 = vmatprep.mubr.bf16.mxu0 0
    %3241 = vmatmul.mubr.bf16.gmra.mxu0 %v2887
    %v3242 = vpop.f32.mrf.mxu0
    %v3243 = vadd.f32 %v2926, %v3242
    %v3244 = vpop.f32.mrf.mxu0
    %v3245 = vpop.f32.mrf.mxu0
    %v3246 = vadd.f32 %v2926, %v3245
    %v3247 = vpop.f32.mrf.mxu0
    %3248 = vmatprep.mubr.bf16.mxu0 0
    %3249 = vmatmul.mubr.bf16.gmra.mxu0 %v2888
    %v3250 = vpop.f32.mrf.mxu0
    %v3251 = vadd.f32 %v2926, %v3250
    %v3252 = vpop.f32.mrf.mxu0
    %v3253 = vpop.f32.mrf.mxu0
    %v3254 = vadd.f32 %v2926, %v3253
    %v3255 = vpop.f32.mrf.mxu0
    %3256 = vmatprep.mubr.bf16.mxu0 0
    %3257 = vmatmul.mubr.bf16.gmra.mxu0 %v2889
    %v3258 = vpop.f32.mrf.mxu0
    %v3259 = vadd.f32 %v2926, %v3258
    %v3260 = vpop.f32.mrf.mxu0
    %v3261 = vpop.f32.mrf.mxu0
    %v3262 = vpop.f32.mrf.mxu0
    %3263 = vmatprep.mubr.bf16.mxu0 0
    %3264 = vmatmul.mubr.bf16.gmra.mxu0 %v2890
    %v3265 = vpop.f32.mrf.mxu0
    %v3266 = vadd.f32 %v2926, %v3265
    %v3267 = vpop.f32.mrf.mxu0
    %v3268 = vpop.f32.mrf.mxu0
    %v3269 = vadd.f32 %v2926, %v3268
    %v3270 = vpop.f32.mrf.mxu0
    %3271 = vmatprep.mubr.bf16.mxu0 0
    %3272 = vmatmul.mubr.bf16.gmra.mxu0 %v2891
    %v3273 = vpop.f32.mrf.mxu0
    %v3274 = vadd.f32 %v2926, %v3273
    %v3275 = vpop.f32.mrf.mxu0
    %v3276 = vpop.f32.mrf.mxu0
    %v3277 = vadd.f32 %v2926, %v3276
    %v3278 = vpop.f32.mrf.mxu0
    %3279 = vmatprep.mubr.bf16.mxu0 0
    %3280 = vmatmul.mubr.bf16.gmra.mxu0 %v2892
    %v3281 = vpop.f32.mrf.mxu0
    %v3282 = vadd.f32 %v2926, %v3281
    %v3283 = vpop.f32.mrf.mxu0
    %v3284 = vpop.f32.mrf.mxu0
    %v3285 = vadd.f32 %v2926, %v3284
    %v3286 = vpop.f32.mrf.mxu0
    %3287 = vmatprep.mubr.bf16.mxu0 0
    %3288 = vmatmul.mubr.bf16.gmra.mxu0 %v2893
    %v3289 = vpop.f32.mrf.mxu0
    %v3290 = vadd.f32 %v2926, %v3289
    %v3291 = vpop.f32.mrf.mxu0
    %v3292 = vpop.f32.mrf.mxu0
    %v3293 = vadd.f32 %v2926, %v3292
    %v3294 = vpop.f32.mrf.mxu0
    %3295 = vmatprep.mubr.bf16.mxu0 0
    %3296 = vmatmul.mubr.bf16.gmra.mxu0 %v2894
    %v3297 = vpop.f32.mrf.mxu0
    %v3298 = vadd.f32 %v2926, %v3297
    %v3299 = vpop.f32.mrf.mxu0
    %v3300 = vpop.f32.mrf.mxu0
    %v3301 = vadd.f32 %v2926, %v3300
    %v3302 = vpop.f32.mrf.mxu0
    %3303 = vmatprep.mubr.bf16.mxu0 0
    %3304 = vmatmul.mubr.bf16.gmra.mxu0 %v2895
    %v3305 = vpop.f32.mrf.mxu0
    %v3306 = vadd.f32 %v2926, %v3305
    %v3307 = vpop.f32.mrf.mxu0
    %v3308 = vpop.f32.mrf.mxu0
    %v3309 = vadd.f32 %v2926, %v3308
    %v3310 = vpop.f32.mrf.mxu0
    %3311 = vmatprep.mubr.bf16.mxu0 0
    %3312 = vmatmul.mubr.bf16.gmra.mxu0 %v2896
    %v3313 = vpop.f32.mrf.mxu0
    %v3314 = vadd.f32 %v2926, %v3313
    %v3315 = vpop.f32.mrf.mxu0
    %v3316 = vpop.f32.mrf.mxu0
    %v3317 = vadd.f32 %v2926, %v3316
    %v3318 = vpop.f32.mrf.mxu0
    %3319 = vmatprep.mubr.bf16.mxu0 0
    %3320 = vmatmul.mubr.bf16.gmra.mxu0 %v2897
    %v3321 = vpop.f32.mrf.mxu0
    %v3322 = vadd.f32 %v2926, %v3321
    %v3323 = vpop.f32.mrf.mxu0
    %v3324 = vpop.f32.mrf.mxu0
    %v3325 = vadd.f32 %v2926, %v3324
    %v3326 = vpop.f32.mrf.mxu0
    %3327 = vmatprep.mubr.bf16.mxu0 0
    %3328 = vmatmul.mubr.bf16.gmra.mxu0 %v2898
    %v3329 = vpop.f32.mrf.mxu0
    %v3330 = vadd.f32 %v2926, %v3329
    %v3331 = vpop.f32.mrf.mxu0
    %v3332 = vpop.f32.mrf.mxu0
    %v3333 = vadd.f32 %v2926, %v3332
    %v3334 = vpop.f32.mrf.mxu0
    %3335 = vmatprep.mubr.bf16.mxu0 0
    %3336 = vmatmul.mubr.bf16.gmra.mxu0 %v2899
    %v3337 = vpop.f32.mrf.mxu0
    %v3338 = vadd.f32 %v2926, %v3337
    %v3339 = vpop.f32.mrf.mxu0
    %v3340 = vpop.f32.mrf.mxu0
    %v3341 = vadd.f32 %v2926, %v3340
    %v3342 = vpop.f32.mrf.mxu0
    %3343 = vmatprep.mubr.bf16.mxu0 0
    %3344 = vmatmul.mubr.bf16.gmra.mxu0 %v2900
    %v3345 = vpop.f32.mrf.mxu0
    %v3346 = vadd.f32 %v2926, %v3345
    %v3347 = vpop.f32.mrf.mxu0
    %v3348 = vpop.f32.mrf.mxu0
    %v3349 = vadd.f32 %v2926, %v3348
    %v3350 = vpop.f32.mrf.mxu0
    %3351 = vmatprep.mubr.bf16.mxu0 0
    %3352 = vmatmul.mubr.bf16.gmra.mxu0 %v2901
    %v3353 = vpop.f32.mrf.mxu0
    %v3354 = vadd.f32 %v2926, %v3353
    %v3355 = vpop.f32.mrf.mxu0
    %v3356 = vpop.f32.mrf.mxu0
    %v3357 = vadd.f32 %v2926, %v3356
    %v3358 = vpop.f32.mrf.mxu0
    %3359 = vmatprep.mubr.bf16.mxu0 0
    %3360 = vmatmul.mubr.bf16.gmra.mxu0 %v2902
    %v3361 = vpop.f32.mrf.mxu0
    %v3362 = vadd.f32 %v2926, %v3361
    %v3363 = vpop.f32.mrf.mxu0
    %v3364 = vpop.f32.mrf.mxu0
    %v3365 = vadd.f32 %v2926, %v3364
    %v3366 = vpop.f32.mrf.mxu0
    %3367 = vmatprep.mubr.bf16.mxu0 0
    %3368 = vmatmul.mubr.bf16.gmra.mxu0 %v2903
    %v3369 = vpop.f32.mrf.mxu0
    %v3370 = vadd.f32 %v2926, %v3369
    %v3371 = vpop.f32.mrf.mxu0
    %v3372 = vpop.f32.mrf.mxu0
    %v3373 = vadd.f32 %v2926, %v3372
    %v3374 = vpop.f32.mrf.mxu0
    %3375 = vmatprep.mubr.bf16.mxu0 0
    %3376 = vmatmul.mubr.bf16.gmra.mxu0 %v2904
    %v3377 = vpop.f32.mrf.mxu0
    %v3378 = vadd.f32 %v2926, %v3377
    %v3379 = vpop.f32.mrf.mxu0
    %v3380 = vpop.f32.mrf.mxu0
    %v3381 = vadd.f32 %v2926, %v3380
    %v3382 = vpop.f32.mrf.mxu0
    %3383 = vmatprep.mubr.bf16.mxu0 0
    %3384 = vmatmul.mubr.bf16.gmra.mxu0 %v2905
    %v3385 = vpop.f32.mrf.mxu0
    %v3386 = vadd.f32 %v2926, %v3385
    %v3387 = vpop.f32.mrf.mxu0
    %v3388 = vpop.f32.mrf.mxu0
    %v3389 = vadd.f32 %v2926, %v3388
    %v3390 = vpop.f32.mrf.mxu0
    %3391 = vmatprep.mubr.bf16.mxu0 0
    %3392 = vmatmul.mubr.bf16.gmra.mxu0 %v2906
    %v3393 = vpop.f32.mrf.mxu0
    %v3394 = vadd.f32 %v2926, %v3393
    %v3395 = vpop.f32.mrf.mxu0
    %v3396 = vpop.f32.mrf.mxu0
    %v3397 = vadd.f32 %v2926, %v3396
    %v3398 = vpop.f32.mrf.mxu0
    %3399 = vmatprep.mubr.bf16.mxu0 0
    %3400 = vmatmul.mubr.bf16.gmra.mxu0 %v2907
    %v3401 = vpop.f32.mrf.mxu0
    %v3402 = vadd.f32 %v2926, %v3401
    %v3403 = vpop.f32.mrf.mxu0
    %v3404 = vpop.f32.mrf.mxu0
    %v3405 = vadd.f32 %v2926, %v3404
    %v3406 = vpop.f32.mrf.mxu0
    %3407 = vmatprep.mubr.bf16.mxu0 0
    %3408 = vmatmul.mubr.bf16.gmra.mxu0 %v2908
    %v3409 = vpop.f32.mrf.mxu0
    %v3410 = vadd.f32 %v2926, %v3409
    %v3411 = vpop.f32.mrf.mxu0
    %v3412 = vpop.f32.mrf.mxu0
    %v3413 = vadd.f32 %v2926, %v3412
    %v3414 = vpop.f32.mrf.mxu0
    %3415 = vmatprep.mubr.bf16.mxu0 0
    %3416 = vmatmul.mubr.bf16.gmra.mxu0 %v2909
    %v3417 = vpop.f32.mrf.mxu0
    %v3418 = vadd.f32 %v2926, %v3417
    %v3419 = vpop.f32.mrf.mxu0
    %v3420 = vpop.f32.mrf.mxu0
    %v3421 = vadd.f32 %v2926, %v3420
    %v3422 = vpop.f32.mrf.mxu0
    %3423 = vmatprep.mubr.bf16.mxu0 0
    %3424 = vmatmul.mubr.bf16.gmra.mxu0 %v2910
    %v3425 = vpop.f32.mrf.mxu0
    %v3426 = vadd.f32 %v2926, %v3425
    %v3427 = vpop.f32.mrf.mxu0
    %v3428 = vpop.f32.mrf.mxu0
    %v3429 = vadd.f32 %v2926, %v3428
    %v3430 = vpop.f32.mrf.mxu0
    %3431 = vmatprep.mubr.bf16.mxu0 0
    %3432 = vmatmul.mubr.bf16.gmra.mxu0 %v2911
    %v3433 = vpop.f32.mrf.mxu0
    %v3434 = vadd.f32 %v2926, %v3433
    %v3435 = vpop.f32.mrf.mxu0
    %v3436 = vpop.f32.mrf.mxu0
    %v3437 = vadd.f32 %v2926, %v3436
    %v3438 = vpop.f32.mrf.mxu0
    %3439 = vmatprep.mubr.bf16.mxu0 0
    %3440 = vmatmul.mubr.bf16.gmra.mxu0 %v2912
    %v3441 = vpop.f32.mrf.mxu0
    %v3442 = vadd.f32 %v2926, %v3441
    %v3443 = vpop.f32.mrf.mxu0
    %v3444 = vpop.f32.mrf.mxu0
    %v3445 = vadd.f32 %v2926, %v3444
    %v3446 = vpop.f32.mrf.mxu0
    %3447 = vmatprep.mubr.bf16.mxu0 0
    %3448 = vmatmul.mubr.bf16.gmra.mxu0 %v2913
    %v3449 = vpop.f32.mrf.mxu0
    %v3450 = vadd.f32 %v2926, %v3449
    %v3451 = vpop.f32.mrf.mxu0
    %v3452 = vpop.f32.mrf.mxu0
    %v3453 = vadd.f32 %v2926, %v3452
    %v3454 = vpop.f32.mrf.mxu0
    %3455 = vmatprep.mubr.bf16.mxu0 0
    %3456 = vmatmul.mubr.bf16.gmra.mxu0 %v2914
    %v3457 = vpop.f32.mrf.mxu0
    %v3458 = vadd.f32 %v2926, %v3457
    %v3459 = vpop.f32.mrf.mxu0
    %v3460 = vpop.f32.mrf.mxu0
    %v3461 = vadd.f32 %v2926, %v3460
    %v3462 = vpop.f32.mrf.mxu0
    %3463 = vmatprep.mubr.bf16.mxu0 0
    %3464 = vmatmul.mubr.bf16.gmra.mxu0 %v2915
    %v3465 = vpop.f32.mrf.mxu0
    %v3466 = vadd.f32 %v2926, %v3465
    %v3467 = vpop.f32.mrf.mxu0
    %v3468 = vpop.f32.mrf.mxu0
    %v3469 = vadd.f32 %v2926, %v3468
    %v3470 = vpop.f32.mrf.mxu0
    %3471 = vmatprep.mubr.bf16.mxu0 0
    %3472 = vmatmul.mubr.bf16.gmra.mxu0 %v2916
    %v3473 = vpop.f32.mrf.mxu0
    %v3474 = vadd.f32 %v2926, %v3473
    %v3475 = vpop.f32.mrf.mxu0
    %v3476 = vpop.f32.mrf.mxu0
    %v3477 = vadd.f32 %v2926, %v3476
    %v3478 = vpop.f32.mrf.mxu0
    %3479 = vmatprep.mubr.bf16.mxu0 0
    %3480 = vmatmul.mubr.bf16.gmra.mxu0 %v2917
    %v3481 = vpop.f32.mrf.mxu0
    %v3482 = vadd.f32 %v2926, %v3481
    %v3483 = vpop.f32.mrf.mxu0
    %v3484 = vpop.f32.mrf.mxu0
    %v3485 = vadd.f32 %v2926, %v3484
    %v3486 = vpop.f32.mrf.mxu0
    %3487 = vmatprep.mubr.bf16.mxu0 0
    %3488 = vmatmul.mubr.bf16.gmra.mxu0 %v2918
    %v3489 = vpop.f32.mrf.mxu0
    %v3490 = vadd.f32 %v2926, %v3489
    %v3491 = vpop.f32.mrf.mxu0
    %v3492 = vpop.f32.mrf.mxu0
    %v3493 = vadd.f32 %v2926, %v3492
    %v3494 = vpop.f32.mrf.mxu0
    %3495 = vmatprep.mubr.bf16.mxu0 0
    %3496 = vmatmul.mubr.bf16.gmra.mxu0 %v2919
    %v3497 = vpop.f32.mrf.mxu0
    %v3498 = vadd.f32 %v2926, %v3497
    %v3499 = vpop.f32.mrf.mxu0
    %v3500 = vpop.f32.mrf.mxu0
    %v3501 = vadd.f32 %v2926, %v3500
    %v3502 = vpop.f32.mrf.mxu0
    %3503 = vmatprep.mubr.bf16.mxu0 0
    %3504 = vmatmul.mubr.bf16.gmra.mxu0 %v2920
    %v3505 = vpop.f32.mrf.mxu0
    %v3506 = vadd.f32 %v2926, %v3505
    %v3507 = vpop.f32.mrf.mxu0
    %v3508 = vpop.f32.mrf.mxu0
    %v3509 = vadd.f32 %v2926, %v3508
    %v3510 = vpop.f32.mrf.mxu0
    %3511 = vmatprep.mubr.bf16.mxu0 0
    %3512 = vmatmul.mubr.bf16.gmra.mxu0 %v2921
    %v3513 = vpop.f32.mrf.mxu0
    %v3514 = vadd.f32 %v2926, %v3513
    %v3515 = vpop.f32.mrf.mxu0
    %v3516 = vpop.f32.mrf.mxu0
    %v3517 = vpop.f32.mrf.mxu0
    %3518 = vdwg.mxu0
    %v3519 = vmax.f32 %v3011, 0.0
    %v3520 = vmax.f32 %v3014, 0.0
    %v3521 = vmax.f32 %v3019, 0.0
    %v3522 = vmax.f32 %v3022, 0.0
    %v3523 = vmax.f32 %v3027, 0.0
    %v3524 = vmax.f32 %v3030, 0.0
    %v3525 = vmax.f32 %v3035, 0.0
    %v3526 = vmax.f32 %v3038, 0.0
    %v3527 = vmax.f32 %v3043, 0.0
    %v3528 = vmax.f32 %v3046, 0.0
    %v3529 = vmax.f32 %v3051, 0.0
    %v3530 = vmax.f32 %v3054, 0.0
    %v3531 = vmax.f32 %v3059, 0.0
    %v3532 = vmax.f32 %v3062, 0.0
    %v3533 = vmax.f32 %v3067, 0.0
    %v3534 = vmax.f32 %v3070, 0.0
    %v3535 = vmax.f32 %v3075, 0.0
    %v3536 = vmax.f32 %v3078, 0.0
    %v3537 = vmax.f32 %v3083, 0.0
    %v3538 = vmax.f32 %v3086, 0.0
    %v3539 = vmax.f32 %v3091, 0.0
    %v3540 = vmax.f32 %v3094, 0.0
    %v3541 = vmax.f32 %v3099, 0.0
    %v3542 = vmax.f32 %v3102, 0.0
    %v3543 = vmax.f32 %v3107, 0.0
    %v3544 = vmax.f32 %v3110, 0.0
    %v3545 = vmax.f32 %v3115, 0.0
    %v3546 = vmax.f32 %v3118, 0.0
    %v3547 = vmax.f32 %v3123, 0.0
    %v3548 = vmax.f32 %v3126, 0.0
    %v3549 = vmax.f32 %v3131, 0.0
    %v3550 = vmax.f32 %v3134, 0.0
    %v3551 = vmax.f32 %v3139, 0.0
    %v3552 = vmax.f32 %v3142, 0.0
    %v3553 = vmax.f32 %v3147, 0.0
    %v3554 = vmax.f32 %v3150, 0.0
    %v3555 = vmax.f32 %v3155, 0.0
    %v3556 = vmax.f32 %v3158, 0.0
    %v3557 = vmax.f32 %v3163, 0.0
    %v3558 = vmax.f32 %v3166, 0.0
    %v3559 = vmax.f32 %v3171, 0.0
    %v3560 = vmax.f32 %v3174, 0.0
    %v3561 = vmax.f32 %v3179, 0.0
    %v3562 = vmax.f32 %v3182, 0.0
    %v3563 = vmax.f32 %v3187, 0.0
    %v3564 = vmax.f32 %v3190, 0.0
    %v3565 = vmax.f32 %v3195, 0.0
    %v3566 = vmax.f32 %v3198, 0.0
    %v3567 = vmax.f32 %v3203, 0.0
    %v3568 = vmax.f32 %v3206, 0.0
    %v3569 = vmax.f32 %v3211, 0.0
    %v3570 = vmax.f32 %v3214, 0.0
    %v3571 = vmax.f32 %v3219, 0.0
    %v3572 = vmax.f32 %v3222, 0.0
    %v3573 = vmax.f32 %v3227, 0.0
    %v3574 = vmax.f32 %v3230, 0.0
    %v3575 = vmax.f32 %v3235, 0.0
    %v3576 = vmax.f32 %v3238, 0.0
    %v3577 = vmax.f32 %v3243, 0.0
    %v3578 = vmax.f32 %v3246, 0.0
    %v3579 = vmax.f32 %v3251, 0.0
    %v3580 = vmax.f32 %v3254, 0.0
    %v3581 = vmax.f32 %v3259, 0.0
    %v3582 = vmax.f32 %v3266, 0.0
    %v3583 = vmax.f32 %v3269, 0.0
    %v3584 = vmax.f32 %v3274, 0.0
    %v3585 = vmax.f32 %v3277, 0.0
    %v3586 = vmax.f32 %v3282, 0.0
    %v3587 = vmax.f32 %v3285, 0.0
    %v3588 = vmax.f32 %v3290, 0.0
    %v3589 = vmax.f32 %v3293, 0.0
    %v3590 = vmax.f32 %v3298, 0.0
    %v3591 = vmax.f32 %v3301, 0.0
    %v3592 = vmax.f32 %v3306, 0.0
    %v3593 = vmax.f32 %v3309, 0.0
    %v3594 = vmax.f32 %v3314, 0.0
    %v3595 = vmax.f32 %v3317, 0.0
    %v3596 = vmax.f32 %v3322, 0.0
    %v3597 = vmax.f32 %v3325, 0.0
    %v3598 = vmax.f32 %v3330, 0.0
    %v3599 = vmax.f32 %v3333, 0.0
    %v3600 = vmax.f32 %v3338, 0.0
    %v3601 = vmax.f32 %v3341, 0.0
    %v3602 = vmax.f32 %v3346, 0.0
    %v3603 = vmax.f32 %v3349, 0.0
    %v3604 = vmax.f32 %v3354, 0.0
    %v3605 = vmax.f32 %v3357, 0.0
    %v3606 = vmax.f32 %v3362, 0.0
    %v3607 = vmax.f32 %v3365, 0.0
    %v3608 = vmax.f32 %v3370, 0.0
    %v3609 = vmax.f32 %v3373, 0.0
    %v3610 = vmax.f32 %v3378, 0.0
    %v3611 = vmax.f32 %v3381, 0.0
    %v3612 = vmax.f32 %v3386, 0.0
    %v3613 = vmax.f32 %v3389, 0.0
    %v3614 = vmax.f32 %v3394, 0.0
    %v3615 = vmax.f32 %v3397, 0.0
    %v3616 = vmax.f32 %v3402, 0.0
    %v3617 = vmax.f32 %v3405, 0.0
    %v3618 = vmax.f32 %v3410, 0.0
    %v3619 = vmax.f32 %v3413, 0.0
    %v3620 = vmax.f32 %v3418, 0.0
    %v3621 = vmax.f32 %v3421, 0.0
    %v3622 = vmax.f32 %v3426, 0.0
    %v3623 = vmax.f32 %v3429, 0.0
    %v3624 = vmax.f32 %v3434, 0.0
    %v3625 = vmax.f32 %v3437, 0.0
    %v3626 = vmax.f32 %v3442, 0.0
    %v3627 = vmax.f32 %v3445, 0.0
    %v3628 = vmax.f32 %v3450, 0.0
    %v3629 = vmax.f32 %v3453, 0.0
    %v3630 = vmax.f32 %v3458, 0.0
    %v3631 = vmax.f32 %v3461, 0.0
    %v3632 = vmax.f32 %v3466, 0.0
    %v3633 = vmax.f32 %v3469, 0.0
    %v3634 = vmax.f32 %v3474, 0.0
    %v3635 = vmax.f32 %v3477, 0.0
    %v3636 = vmax.f32 %v3482, 0.0
    %v3637 = vmax.f32 %v3485, 0.0
    %v3638 = vmax.f32 %v3490, 0.0
    %v3639 = vmax.f32 %v3493, 0.0
    %v3640 = vmax.f32 %v3498, 0.0
    %v3641 = vmax.f32 %v3501, 0.0
    %v3642 = vmax.f32 %v3506, 0.0
    %v3643 = vmax.f32 %v3509, 0.0
    %v3644 = vmax.f32 %v3514, 0.0
    %v3645 = vmax.f32 %v3519, %v3523
    %v3646 = vmax.f32 %v3520, %v3524
    %vm3647 = vcmask 1041408
    %v3648 = vsel %vm3647, %v3525, -inf
    %v3649 = vmax.f32 %v3521, %v3648
    %v3650 = vmax.f32 %v3645, %v3646
    %v3651 = vmax.f32 %v3649, %v3522
    %v3652 = vmax.f32 %v3650, %v3651
    %v3653 = vrot.slane %v3652, 4
    %v3654 = vmax.f32 %v3652, %v3653
    %v3655 = vrot.slane %v3654, 2
    %v3656 = vmax.f32 %v3654, %v3655
    %v3657 = vrot.slane %v3656, 1
    %v3658 = vmax.f32 %v3656, %v3657
    %3660 = vrot.lane.b32.xlu0 %v3658, 64
    %v3661 = vpop.permute.xlu0 %3660
    %v3663 = vmax.f32 %v3658, %v3661
    %vm3664 = vcmask 516096
    %3665 = vst.msk [vmem:[#allocation2] sm:$0x1] %vm3664, %v3663
    %vm3666 = vcmask 1047554
    %v3667 = vsel %vm3666, %v3525, -inf
    %v3668 = vmax.f32 %v3667, %v3529
    %v3669 = vmax.f32 %v3526, %v3530
    %vm3670 = vcmask 1043456
    %v3671 = vsel %vm3670, %v3531, -inf
    %v3672 = vmax.f32 %v3527, %v3671
    %v3673 = vmax.f32 %v3668, %v3669
    %v3674 = vmax.f32 %v3672, %v3528
    %v3675 = vmax.f32 %v3673, %v3674
    %v3676 = vrot.slane %v3675, 4
    %v3677 = vmax.f32 %v3675, %v3676
    %v3678 = vrot.slane %v3677, 2
    %v3679 = vmax.f32 %v3677, %v3678
    %v3680 = vrot.slane %v3679, 1
    %v3681 = vmax.f32 %v3679, %v3680
    %3683 = vrot.lane.b32.xlu0 %v3681, 64
    %v3684 = vpop.permute.xlu0 %3683
    %v3686 = vmax.f32 %v3681, %v3684
    %3688 = vrot.lane.b32.xlu0 %v3686, 64
    %v3689 = vpop.permute.xlu0 %3688
    %vm3691 = vcmask 1040896
    %3692 = vst.msk [vmem:[#allocation2] sm:$0x1] %vm3691, %v3689
    %vm3693 = vcmask 1047556
    %v3694 = vsel %vm3693, %v3531, -inf
    %v3695 = vmax.f32 %v3694, %v3535
    %v3696 = vmax.f32 %v3532, %v3536
    %vm3697 = vcmask 1045504
    %v3698 = vsel %vm3697, %v3537, -inf
    %v3699 = vmax.f32 %v3533, %v3698
    %v3700 = vmax.f32 %v3695, %v3696
    %v3701 = vmax.f32 %v3699, %v3534
    %v3702 = vmax.f32 %v3700, %v3701
    %v3703 = vrot.slane %v3702, 4
    %v3704 = vmax.f32 %v3702, %v3703
    %v3705 = vrot.slane %v3704, 2
    %v3706 = vmax.f32 %v3704, %v3705
    %v3707 = vrot.slane %v3706, 1
    %v3708 = vmax.f32 %v3706, %v3707
    %3710 = vrot.lane.b32.xlu0 %v3708, 64
    %v3711 = vpop.permute.xlu0 %3710
    %v3713 = vmax.f32 %v3708, %v3711
    %3714 = vst.msk [vmem:[#allocation2 + $0x8] sm:$0x1] %vm3664, %v3713
    %vm3715 = vcmask 1047558
    %v3716 = vsel %vm3715, %v3537, -inf
    %v3717 = vmax.f32 %v3716, %v3541
    %v3718 = vmax.f32 %v3538, %v3542
    %v3719 = vmax.f32 %v3539, %v3543
    %v3720 = vmax.f32 %v3717, %v3718
    %v3721 = vmax.f32 %v3719, %v3540
    %v3722 = vmax.f32 %v3720, %v3721
    %v3723 = vrot.slane %v3722, 4
    %v3724 = vmax.f32 %v3722, %v3723
    %v3725 = vrot.slane %v3724, 2
    %v3726 = vmax.f32 %v3724, %v3725
    %v3727 = vrot.slane %v3726, 1
    %v3728 = vmax.f32 %v3726, %v3727
    %3730 = vrot.lane.b32.xlu0 %v3728, 64
    %v3731 = vpop.permute.xlu0 %3730
    %v3733 = vmax.f32 %v3728, %v3731
    %3735 = vrot.lane.b32.xlu0 %v3733, 64
    %v3736 = vpop.permute.xlu0 %3735
    %3738 = vst.msk [vmem:[#allocation2 + $0x8] sm:$0x1] %vm3691, %v3736
    %v3739 = vmax.f32 %v3544, %v3548
    %v3740 = vmax.f32 %v3545, %v3549
    %v3741 = vsel %vm3647, %v3550, -inf
    %v3742 = vmax.f32 %v3546, %v3741
    %v3743 = vmax.f32 %v3739, %v3740
    %v3744 = vmax.f32 %v3742, %v3547
    %v3745 = vmax.f32 %v3743, %v3744
    %v3746 = vrot.slane %v3745, 4
    %v3747 = vmax.f32 %v3745, %v3746
    %v3748 = vrot.slane %v3747, 2
    %v3749 = vmax.f32 %v3747, %v3748
    %v3750 = vrot.slane %v3749, 1
    %v3751 = vmax.f32 %v3749, %v3750
    %3753 = vrot.lane.b32.xlu0 %v3751, 64
    %v3754 = vpop.permute.xlu0 %3753
    %v3756 = vmax.f32 %v3751, %v3754
    %3757 = vst.msk [vmem:[#allocation2 + $0x10] sm:$0x1] %vm3664, %v3756
    %v3758 = vsel %vm3666, %v3550, -inf
    %v3759 = vmax.f32 %v3758, %v3554
    %v3760 = vmax.f32 %v3551, %v3555
    %v3761 = vsel %vm3670, %v3556, -inf
    %v3762 = vmax.f32 %v3552, %v3761
    %v3763 = vmax.f32 %v3759, %v3760
    %v3764 = vmax.f32 %v3762, %v3553
    %v3765 = vmax.f32 %v3763, %v3764
    %v3766 = vrot.slane %v3765, 4
    %v3767 = vmax.f32 %v3765, %v3766
    %v3768 = vrot.slane %v3767, 2
    %v3769 = vmax.f32 %v3767, %v3768
    %v3770 = vrot.slane %v3769, 1
    %v3771 = vmax.f32 %v3769, %v3770
    %3773 = vrot.lane.b32.xlu0 %v3771, 64
    %v3774 = vpop.permute.xlu0 %3773
    %v3776 = vmax.f32 %v3771, %v3774
    %3778 = vrot.lane.b32.xlu0 %v3776, 64
    %v3779 = vpop.permute.xlu0 %3778
    %3781 = vst.msk [vmem:[#allocation2 + $0x10] sm:$0x1] %vm3691, %v3779
    %v3782 = vsel %vm3693, %v3556, -inf
    %v3783 = vmax.f32 %v3782, %v3560
    %v3784 = vmax.f32 %v3557, %v3561
    %v3785 = vsel %vm3697, %v3562, -inf
    %v3786 = vmax.f32 %v3558, %v3785
    %v3787 = vmax.f32 %v3783, %v3784
    %v3788 = vmax.f32 %v3786, %v3559
    %v3789 = vmax.f32 %v3787, %v3788
    %v3790 = vrot.slane %v3789, 4
    %v3791 = vmax.f32 %v3789, %v3790
    %v3792 = vrot.slane %v3791, 2
    %v3793 = vmax.f32 %v3791, %v3792
    %v3794 = vrot.slane %v3793, 1
    %v3795 = vmax.f32 %v3793, %v3794
    %3797 = vrot.lane.b32.xlu0 %v3795, 64
    %v3798 = vpop.permute.xlu0 %3797
    %v3800 = vmax.f32 %v3795, %v3798
    %3801 = vst.msk [vmem:[#allocation2 + $0x18] sm:$0x1] %vm3664, %v3800
    %v3802 = vsel %vm3715, %v3562, -inf
    %v3803 = vmax.f32 %v3802, %v3566
    %v3804 = vmax.f32 %v3563, %v3567
    %v3805 = vmax.f32 %v3564, %v3568
    %v3806 = vmax.f32 %v3803, %v3804
    %v3807 = vmax.f32 %v3805, %v3565
    %v3808 = vmax.f32 %v3806, %v3807
    %v3809 = vrot.slane %v3808, 4
    %v3810 = vmax.f32 %v3808, %v3809
    %v3811 = vrot.slane %v3810, 2
    %v3812 = vmax.f32 %v3810, %v3811
    %v3813 = vrot.slane %v3812, 1
    %v3814 = vmax.f32 %v3812, %v3813
    %3816 = vrot.lane.b32.xlu0 %v3814, 64
    %v3817 = vpop.permute.xlu0 %3816
    %v3819 = vmax.f32 %v3814, %v3817
    %3821 = vrot.lane.b32.xlu0 %v3819, 64
    %v3822 = vpop.permute.xlu0 %3821
    %3824 = vst.msk [vmem:[#allocation2 + $0x18] sm:$0x1] %vm3691, %v3822
    %v3825 = vmax.f32 %v3569, %v3573
    %v3826 = vmax.f32 %v3570, %v3574
    %v3827 = vsel %vm3647, %v3575, -inf
    %v3828 = vmax.f32 %v3571, %v3827
    %v3829 = vmax.f32 %v3825, %v3826
    %v3830 = vmax.f32 %v3828, %v3572
    %v3831 = vmax.f32 %v3829, %v3830
    %v3832 = vrot.slane %v3831, 4
    %v3833 = vmax.f32 %v3831, %v3832
    %v3834 = vrot.slane %v3833, 2
    %v3835 = vmax.f32 %v3833, %v3834
    %v3836 = vrot.slane %v3835, 1
    %v3837 = vmax.f32 %v3835, %v3836
    %3839 = vrot.lane.b32.xlu0 %v3837, 64
    %v3840 = vpop.permute.xlu0 %3839
    %v3842 = vmax.f32 %v3837, %v3840
    %3843 = vst.msk [vmem:[#allocation2 + $0x20] sm:$0x1] %vm3664, %v3842
    %v3844 = vsel %vm3666, %v3575, -inf
    %v3845 = vmax.f32 %v3844, %v3579
    %v3846 = vmax.f32 %v3576, %v3580
    %v3847 = vsel %vm3670, %v3581, -inf
    %v3848 = vmax.f32 %v3577, %v3847
    %v3849 = vmax.f32 %v3845, %v3846
    %v3850 = vmax.f32 %v3848, %v3578
    %v3851 = vmax.f32 %v3849, %v3850
    %v3852 = vrot.slane %v3851, 4
    %v3853 = vmax.f32 %v3851, %v3852
    %v3854 = vrot.slane %v3853, 2
    %v3855 = vmax.f32 %v3853, %v3854
    %v3856 = vrot.slane %v3855, 1
    %v3857 = vmax.f32 %v3855, %v3856
    %3859 = vrot.lane.b32.xlu0 %v3857, 64
    %v3860 = vpop.permute.xlu0 %3859
    %v3862 = vmax.f32 %v3857, %v3860
    %3864 = vrot.lane.b32.xlu0 %v3862, 64
    %v3865 = vpop.permute.xlu0 %3864
    %3867 = vst.msk [vmem:[#allocation2 + $0x20] sm:$0x1] %vm3691, %v3865
    %v3868 = vmax.f32 %v3582, %v3586
    %v3869 = vmax.f32 %v3583, %v3587
    %v3870 = vsel %vm3647, %v3588, -inf
    %v3871 = vmax.f32 %v3584, %v3870
    %v3872 = vmax.f32 %v3868, %v3869
    %v3873 = vmax.f32 %v3871, %v3585
    %v3874 = vmax.f32 %v3872, %v3873
    %v3875 = vrot.slane %v3874, 4
    %v3876 = vmax.f32 %v3874, %v3875
    %v3877 = vrot.slane %v3876, 2
    %v3878 = vmax.f32 %v3876, %v3877
    %v3879 = vrot.slane %v3878, 1
    %v3880 = vmax.f32 %v3878, %v3879
    %3882 = vrot.lane.b32.xlu0 %v3880, 64
    %v3883 = vpop.permute.xlu0 %3882
    %v3885 = vmax.f32 %v3880, %v3883
    %3886 = vst.msk [vmem:[#allocation2 + $0x1] sm:$0x1] %vm3664, %v3885
    %v3887 = vsel %vm3666, %v3588, -inf
    %v3888 = vmax.f32 %v3887, %v3592
    %v3889 = vmax.f32 %v3589, %v3593
    %v3890 = vsel %vm3670, %v3594, -inf
    %v3891 = vmax.f32 %v3590, %v3890
    %v3892 = vmax.f32 %v3888, %v3889
    %v3893 = vmax.f32 %v3891, %v3591
    %v3894 = vmax.f32 %v3892, %v3893
    %v3895 = vrot.slane %v3894, 4
    %v3896 = vmax.f32 %v3894, %v3895
    %v3897 = vrot.slane %v3896, 2
    %v3898 = vmax.f32 %v3896, %v3897
    %v3899 = vrot.slane %v3898, 1
    %v3900 = vmax.f32 %v3898, %v3899
    %3902 = vrot.lane.b32.xlu0 %v3900, 64
    %v3903 = vpop.permute.xlu0 %3902
    %v3905 = vmax.f32 %v3900, %v3903
    %3907 = vrot.lane.b32.xlu0 %v3905, 64
    %v3908 = vpop.permute.xlu0 %3907
    %3910 = vst.msk [vmem:[#allocation2 + $0x1] sm:$0x1] %vm3691, %v3908
    %v3911 = vsel %vm3693, %v3594, -inf
    %v3912 = vmax.f32 %v3911, %v3598
    %v3913 = vmax.f32 %v3595, %v3599
    %v3914 = vsel %vm3697, %v3600, -inf
    %v3915 = vmax.f32 %v3596, %v3914
    %v3916 = vmax.f32 %v3912, %v3913
    %v3917 = vmax.f32 %v3915, %v3597
    %v3918 = vmax.f32 %v3916, %v3917
    %v3919 = vrot.slane %v3918, 4
    %v3920 = vmax.f32 %v3918, %v3919
    %v3921 = vrot.slane %v3920, 2
    %v3922 = vmax.f32 %v3920, %v3921
    %v3923 = vrot.slane %v3922, 1
    %v3924 = vmax.f32 %v3922, %v3923
    %3926 = vrot.lane.b32.xlu0 %v3924, 64
    %v3927 = vpop.permute.xlu0 %3926
    %v3929 = vmax.f32 %v3924, %v3927
    %3930 = vst.msk [vmem:[#allocation2 + $0x9] sm:$0x1] %vm3664, %v3929
    %v3931 = vsel %vm3715, %v3600, -inf
    %v3932 = vmax.f32 %v3931, %v3604
    %v3933 = vmax.f32 %v3601, %v3605
    %v3934 = vmax.f32 %v3602, %v3606
    %v3935 = vmax.f32 %v3932, %v3933
    %v3936 = vmax.f32 %v3934, %v3603
    %v3937 = vmax.f32 %v3935, %v3936
    %v3938 = vrot.slane %v3937, 4
    %v3939 = vmax.f32 %v3937, %v3938
    %v3940 = vrot.slane %v3939, 2
    %v3941 = vmax.f32 %v3939, %v3940
    %v3942 = vrot.slane %v3941, 1
    %v3943 = vmax.f32 %v3941, %v3942
    %3945 = vrot.lane.b32.xlu0 %v3943, 64
    %v3946 = vpop.permute.xlu0 %3945
    %v3948 = vmax.f32 %v3943, %v3946
    %3950 = vrot.lane.b32.xlu0 %v3948, 64
    %v3951 = vpop.permute.xlu0 %3950
    %3953 = vst.msk [vmem:[#allocation2 + $0x9] sm:$0x1] %vm3691, %v3951
    %v3954 = vmax.f32 %v3607, %v3611
    %v3955 = vmax.f32 %v3608, %v3612
    %v3956 = vsel %vm3647, %v3613, -inf
    %v3957 = vmax.f32 %v3609, %v3956
    %v3958 = vmax.f32 %v3954, %v3955
    %v3959 = vmax.f32 %v3957, %v3610
    %v3960 = vmax.f32 %v3958, %v3959
    %v3961 = vrot.slane %v3960, 4
    %v3962 = vmax.f32 %v3960, %v3961
    %v3963 = vrot.slane %v3962, 2
    %v3964 = vmax.f32 %v3962, %v3963
    %v3965 = vrot.slane %v3964, 1
    %v3966 = vmax.f32 %v3964, %v3965
    %3968 = vrot.lane.b32.xlu0 %v3966, 64
    %v3969 = vpop.permute.xlu0 %3968
    %v3971 = vmax.f32 %v3966, %v3969
    %3972 = vst.msk [vmem:[#allocation2 + $0x11] sm:$0x1] %vm3664, %v3971
    %v3973 = vsel %vm3666, %v3613, -inf
    %v3974 = vmax.f32 %v3973, %v3617
    %v3975 = vmax.f32 %v3614, %v3618
    %v3976 = vsel %vm3670, %v3619, -inf
    %v3977 = vmax.f32 %v3615, %v3976
    %v3978 = vmax.f32 %v3974, %v3975
    %v3979 = vmax.f32 %v3977, %v3616
    %v3980 = vmax.f32 %v3978, %v3979
    %v3981 = vrot.slane %v3980, 4
    %v3982 = vmax.f32 %v3980, %v3981
    %v3983 = vrot.slane %v3982, 2
    %v3984 = vmax.f32 %v3982, %v3983
    %v3985 = vrot.slane %v3984, 1
    %v3986 = vmax.f32 %v3984, %v3985
    %3988 = vrot.lane.b32.xlu0 %v3986, 64
    %v3989 = vpop.permute.xlu0 %3988
    %v3991 = vmax.f32 %v3986, %v3989
    %3993 = vrot.lane.b32.xlu0 %v3991, 64
    %v3994 = vpop.permute.xlu0 %3993
    %3996 = vst.msk [vmem:[#allocation2 + $0x11] sm:$0x1] %vm3691, %v3994
    %v3997 = vsel %vm3693, %v3619, -inf
    %v3998 = vmax.f32 %v3997, %v3623
    %v3999 = vmax.f32 %v3620, %v3624
    %v4000 = vsel %vm3697, %v3625, -inf
    %v4001 = vmax.f32 %v3621, %v4000
    %v4002 = vmax.f32 %v3998, %v3999
    %v4003 = vmax.f32 %v4001, %v3622
    %v4004 = vmax.f32 %v4002, %v4003
    %v4005 = vrot.slane %v4004, 4
    %v4006 = vmax.f32 %v4004, %v4005
    %v4007 = vrot.slane %v4006, 2
    %v4008 = vmax.f32 %v4006, %v4007
    %v4009 = vrot.slane %v4008, 1
    %v4010 = vmax.f32 %v4008, %v4009
    %4012 = vrot.lane.b32.xlu0 %v4010, 64
    %v4013 = vpop.permute.xlu0 %4012
    %v4015 = vmax.f32 %v4010, %v4013
    %4016 = vst.msk [vmem:[#allocation2 + $0x19] sm:$0x1] %vm3664, %v4015
    %v4017 = vsel %vm3715, %v3625, -inf
    %v4018 = vmax.f32 %v4017, %v3629
    %v4019 = vmax.f32 %v3626, %v3630
    %v4020 = vmax.f32 %v3627, %v3631
    %v4021 = vmax.f32 %v4018, %v4019
    %v4022 = vmax.f32 %v4020, %v3628
    %v4023 = vmax.f32 %v4021, %v4022
    %v4024 = vrot.slane %v4023, 4
    %v4025 = vmax.f32 %v4023, %v4024
    %v4026 = vrot.slane %v4025, 2
    %v4027 = vmax.f32 %v4025, %v4026
    %v4028 = vrot.slane %v4027, 1
    %v4029 = vmax.f32 %v4027, %v4028
    %4031 = vrot.lane.b32.xlu0 %v4029, 64
    %v4032 = vpop.permute.xlu0 %4031
    %v4034 = vmax.f32 %v4029, %v4032
    %4036 = vrot.lane.b32.xlu0 %v4034, 64
    %v4037 = vpop.permute.xlu0 %4036
    %4039 = vst.msk [vmem:[#allocation2 + $0x19] sm:$0x1] %vm3691, %v4037
    %v4040 = vmax.f32 %v3632, %v3636
    %v4041 = vmax.f32 %v3633, %v3637
    %v4042 = vsel %vm3647, %v3638, -inf
    %v4043 = vmax.f32 %v3634, %v4042
    %v4044 = vmax.f32 %v4040, %v4041
    %v4045 = vmax.f32 %v4043, %v3635
    %v4046 = vmax.f32 %v4044, %v4045
    %v4047 = vrot.slane %v4046, 4
    %v4048 = vmax.f32 %v4046, %v4047
    %v4049 = vrot.slane %v4048, 2
    %v4050 = vmax.f32 %v4048, %v4049
    %v4051 = vrot.slane %v4050, 1
    %v4052 = vmax.f32 %v4050, %v4051
    %4054 = vrot.lane.b32.xlu0 %v4052, 64
    %v4055 = vpop.permute.xlu0 %4054
    %v4057 = vmax.f32 %v4052, %v4055
    %4058 = vst.msk [vmem:[#allocation2 + $0x21] sm:$0x1] %vm3664, %v4057
    %v4059 = vsel %vm3666, %v3638, -inf
    %v4060 = vmax.f32 %v4059, %v3642
    %v4061 = vmax.f32 %v3639, %v3643
    %v4062 = vsel %vm3670, %v3644, -inf
    %v4063 = vmax.f32 %v3640, %v4062
    %v4064 = vmax.f32 %v4060, %v4061
    %v4065 = vmax.f32 %v4063, %v3641
    %v4066 = vmax.f32 %v4064, %v4065
    %v4067 = vrot.slane %v4066, 4
    %v4068 = vmax.f32 %v4066, %v4067
    %v4069 = vrot.slane %v4068, 2
    %v4070 = vmax.f32 %v4068, %v4069
    %v4071 = vrot.slane %v4070, 1
    %v4072 = vmax.f32 %v4070, %v4071
    %4074 = vrot.lane.b32.xlu0 %v4072, 64
    %v4075 = vpop.permute.xlu0 %4074
    %v4077 = vmax.f32 %v4072, %v4075
    %4079 = vrot.lane.b32.xlu0 %v4077, 64
    %v4080 = vpop.permute.xlu0 %4079
    %4082 = vst.msk [vmem:[#allocation2 + $0x21] sm:$0x1] %vm3691, %v4080
    %v4083 = vld [vmem:[#allocation2] sm:$0xff]
    %v4084 = vld [vmem:[#allocation2 + $0x8] sm:$0xff]
    %v4085 = vld [vmem:[#allocation2 + $0x10] sm:$0xff]
    %v4086 = vld [vmem:[#allocation2 + $0x18] sm:$0xff]
    %v4087 = vld [vmem:[#allocation2 + $0x20] sm:$0xff]
    %v4088 = vpack.c.bf16 %v4083, %v4083
    %v4089 = vpack.c.bf16 %v4084, %v4084
    %v4090 = vpack.c.bf16 %v4085, %v4085
    %v4091 = vpack.c.bf16 %v4086, %v4086
    %v4092 = vpack.c.bf16 %v4087, %v4087
    %v4093 = vld [vmem:[#allocation9] sm:$0xf]
    %v4094 = vld [vmem:[#allocation9 + $0x4] sm:$0xf]
    %v4095 = vld [vmem:[#allocation9 + $0x8] sm:$0xf]
    %v4096 = vld [vmem:[#allocation9 + $0xc] sm:$0xf]
    %v4097 = vld [vmem:[#allocation9 + $0x10] sm:$0xf]
    %v4098 = vld [vmem:[#allocation9 + $0x14] sm:$0xf]
    %v4099 = vld [vmem:[#allocation9 + $0x18] sm:$0xf]
    %v4100 = vld [vmem:[#allocation9 + $0x1c] sm:$0xf]
    %v4101 = vld [vmem:[#allocation9 + $0x20] sm:$0xf]
    %v4102 = vld [vmem:[#allocation9 + $0x24] sm:$0xf]
    %v4103 = vld [vmem:[#allocation9 + $0x28] sm:$0xf]
    %v4104 = vld [vmem:[#allocation9 + $0x2c] sm:$0xf]
    %v4105 = vld [vmem:[#allocation9 + $0x30] sm:$0xf]
    %v4106 = vld [vmem:[#allocation9 + $0x34] sm:$0xf]
    %v4107 = vld [vmem:[#allocation9 + $0x38] sm:$0xf]
    %v4108 = vld [vmem:[#allocation9 + $0x3c] sm:$0xf]
    %v4109 = vld [vmem:[#allocation9 + $0x40] sm:$0xf]
    %v4110 = vld [vmem:[#allocation9 + $0x44] sm:$0xf]
    %v4111 = vld [vmem:[#allocation9 + $0x48] sm:$0xf]
    %v4112 = vld [vmem:[#allocation9 + $0x4c] sm:$0xf]
    %v4113 = vld [vmem:[#allocation9 + $0x50] sm:$0xf]
    %v4114 = vld [vmem:[#allocation9 + $0x54] sm:$0xf]
    %v4115 = vld [vmem:[#allocation9 + $0x58] sm:$0xf]
    %v4116 = vld [vmem:[#allocation9 + $0x5c] sm:$0xf]
    %v4117 = vld [vmem:[#allocation9 + $0x60] sm:$0xf]
    %v4118 = vld [vmem:[#allocation9 + $0x64] sm:$0xf]
    %v4119 = vld [vmem:[#allocation9 + $0x68] sm:$0xf]
    %v4120 = vld [vmem:[#allocation9 + $0x6c] sm:$0xf]
    %v4121 = vld [vmem:[#allocation9 + $0x70] sm:$0xf]
    %v4122 = vld [vmem:[#allocation9 + $0x74] sm:$0xf]
    %v4123 = vld [vmem:[#allocation9 + $0x78] sm:$0xf]
    %v4124 = vld [vmem:[#allocation9 + $0x7c] sm:$0xf]
    %v4125 = vld [vmem:[#allocation9 + $0x80] sm:$0xf]
    %v4126 = vld [vmem:[#allocation9 + $0x84] sm:$0xf]
    %v4127 = vld [vmem:[#allocation9 + $0x88] sm:$0xf]
    %v4128 = vld [vmem:[#allocation9 + $0x8c] sm:$0xf]
    %v4129 = vld [vmem:[#allocation9 + $0x90] sm:$0xf]
    %v4130 = vld [vmem:[#allocation9 + $0x94] sm:$0xf]
    %v4131 = vld [vmem:[#allocation9 + $0x98] sm:$0xf]
    %v4132 = vld [vmem:[#allocation9 + $0x9c] sm:$0xf]
    %v4133 = vld [vmem:[#allocation9 + $0xa0] sm:$0xf]
    %v4134 = vld [vmem:[#allocation9 + $0xa4] sm:$0xf]
    %v4135 = vld [vmem:[#allocation9 + $0xa8] sm:$0xf]
    %v4136 = vld [vmem:[#allocation9 + $0xac] sm:$0xf]
    %v4137 = vld [vmem:[#allocation9 + $0xb0] sm:$0xf]
    %v4138 = vld [vmem:[#allocation9 + $0xb4] sm:$0xf]
    %v4139 = vld [vmem:[#allocation9 + $0xb8] sm:$0xf]
    %v4140 = vld [vmem:[#allocation9 + $0xbc] sm:$0xf]
    %v4141 = vld [vmem:[#allocation9 + $0xc0] sm:$0xf]
    %v4142 = vld [vmem:[#allocation9 + $0xc4] sm:$0xf]
    %v4143 = vld [vmem:[#allocation9 + $0xc8] sm:$0xf]
    %v4144 = vld [vmem:[#allocation9 + $0xcc] sm:$0xf]
    %v4145 = vld [vmem:[#allocation9 + $0xd0] sm:$0xf]
    %v4146 = vld [vmem:[#allocation9 + $0xd4] sm:$0xf]
    %v4147 = vld [vmem:[#allocation9 + $0xd8] sm:$0xf]
    %v4148 = vld [vmem:[#allocation9 + $0xdc] sm:$0xf]
    %v4149 = vld [vmem:[#allocation9 + $0xe0] sm:$0xf]
    %v4150 = vld [vmem:[#allocation9 + $0xe4] sm:$0xf]
    %v4151 = vld [vmem:[#allocation9 + $0xe8] sm:$0xf]
    %v4152 = vld [vmem:[#allocation9 + $0xec] sm:$0xf]
    %v4153 = vld [vmem:[#allocation9 + $0xf0] sm:$0xf]
    %v4154 = vld [vmem:[#allocation9 + $0xf4] sm:$0xf]
    %v4155 = vld [vmem:[#allocation9 + $0xf8] sm:$0xf]
    %v4156 = vld [vmem:[#allocation9 + $0xfc] sm:$0xf]
    %v4157 = vld [vmem:[#allocation9 + $0x100] sm:$0xf]
    %v4158 = vld [vmem:[#allocation9 + $0x104] sm:$0xf]
    %v4159 = vld [vmem:[#allocation9 + $0x108] sm:$0xf]
    %v4160 = vld [vmem:[#allocation9 + $0x10c] sm:$0xf]
    %v4161 = vld [vmem:[#allocation9 + $0x110] sm:$0xf]
    %v4162 = vld [vmem:[#allocation9 + $0x114] sm:$0xf]
    %v4163 = vld [vmem:[#allocation9 + $0x118] sm:$0xf]
    %v4164 = vld [vmem:[#allocation9 + $0x11c] sm:$0xf]
    %v4165 = vld [vmem:[#allocation9 + $0x120] sm:$0xf]
    %v4166 = vld [vmem:[#allocation9 + $0x124] sm:$0xf]
    %v4167 = vld [vmem:[#allocation9 + $0x128] sm:$0xf]
    %v4168 = vld [vmem:[#allocation9 + $0x12c] sm:$0xf]
    %v4169 = vld [vmem:[#allocation9 + $0x130] sm:$0xf]
    %v4170 = vld [vmem:[#allocation9 + $0x134] sm:$0xf]
    %v4171 = vld [vmem:[#allocation9 + $0x138] sm:$0xf]
    %v4172 = vld [vmem:[#allocation9 + $0x13c] sm:$0xf]
    %v4173 = vld [vmem:[%s6] sm:$0x1]
    %v4175 = vlaneseq
    %v4176 = vshrl.u32 %v4175, 7
    %v4177 = vsub.s32 0, %v4176
    %v4178 = vrot.slane %v4173, %v4177
    %v4260 = vunpack.c.l.b16 %v4093
    %v4261 = vunpack.c.l.b16 %v4094
    %v4262 = vunpack.c.l.b16 %v4095
    %v4263 = vunpack.c.l.b16 %v4096
    %v4264 = vunpack.c.l.b16 %v4097
    %v4265 = vunpack.c.l.b16 %v4098
    %v4266 = vunpack.c.l.b16 %v4099
    %v4267 = vunpack.c.l.b16 %v4100
    %v4268 = vunpack.c.l.b16 %v4101
    %v4269 = vunpack.c.l.b16 %v4102
    %v4270 = vunpack.c.l.b16 %v4103
    %v4271 = vunpack.c.l.b16 %v4104
    %v4272 = vunpack.c.l.b16 %v4105
    %v4273 = vunpack.c.l.b16 %v4106
    %v4274 = vunpack.c.l.b16 %v4107
    %v4275 = vunpack.c.l.b16 %v4108
    %v4276 = vunpack.c.l.b16 %v4109
    %v4277 = vunpack.c.l.b16 %v4110
    %v4278 = vunpack.c.l.b16 %v4111
    %v4279 = vunpack.c.l.b16 %v4112
    %v4280 = vunpack.c.l.b16 %v4113
    %v4281 = vunpack.c.l.b16 %v4114
    %v4282 = vunpack.c.l.b16 %v4115
    %v4283 = vunpack.c.l.b16 %v4116
    %v4284 = vunpack.c.l.b16 %v4117
    %v4285 = vunpack.c.l.b16 %v4118
    %v4286 = vunpack.c.l.b16 %v4119
    %v4287 = vunpack.c.l.b16 %v4120
    %v4288 = vunpack.c.l.b16 %v4121
    %v4289 = vunpack.c.l.b16 %v4122
    %v4290 = vunpack.c.l.b16 %v4123
    %v4291 = vunpack.c.l.b16 %v4124
    %v4292 = vunpack.c.l.b16 %v4125
    %v4293 = vunpack.c.l.b16 %v4126
    %v4294 = vunpack.c.l.b16 %v4127
    %v4295 = vunpack.c.l.b16 %v4128
    %v4296 = vunpack.c.l.b16 %v4129
    %v4297 = vunpack.c.l.b16 %v4130
    %v4298 = vunpack.c.l.b16 %v4131
    %v4299 = vunpack.c.l.b16 %v4132
    %v4300 = vunpack.c.l.b16 %v4133
    %v4301 = vunpack.c.l.b16 %v4134
    %v4302 = vunpack.c.l.b16 %v4135
    %v4303 = vunpack.c.l.b16 %v4136
    %v4304 = vunpack.c.l.b16 %v4137
    %v4305 = vunpack.c.l.b16 %v4138
    %v4306 = vunpack.c.l.b16 %v4139
    %v4307 = vunpack.c.l.b16 %v4140
    %v4308 = vunpack.c.l.b16 %v4141
    %v4309 = vunpack.c.l.b16 %v4142
    %v4310 = vunpack.c.l.b16 %v4143
    %v4311 = vunpack.c.l.b16 %v4144
    %v4312 = vunpack.c.l.b16 %v4145
    %v4313 = vunpack.c.l.b16 %v4146
    %v4314 = vunpack.c.l.b16 %v4147
    %v4315 = vunpack.c.l.b16 %v4148
    %v4316 = vunpack.c.l.b16 %v4149
    %v4317 = vunpack.c.l.b16 %v4150
    %v4318 = vunpack.c.l.b16 %v4151
    %v4319 = vunpack.c.l.b16 %v4152
    %v4320 = vunpack.c.l.b16 %v4153
    %v4321 = vunpack.c.l.b16 %v4154
    %v4322 = vunpack.c.l.b16 %v4155
    %v4323 = vunpack.c.l.b16 %v4156
    %v4324 = vunpack.c.l.b16 %v4157
    %v4325 = vunpack.c.l.b16 %v4158
    %v4326 = vunpack.c.l.b16 %v4159
    %v4327 = vunpack.c.l.b16 %v4160
    %v4328 = vunpack.c.l.b16 %v4161
    %v4329 = vunpack.c.l.b16 %v4162
    %v4330 = vunpack.c.l.b16 %v4163
    %v4331 = vunpack.c.l.b16 %v4164
    %v4332 = vunpack.c.l.b16 %v4165
    %v4333 = vunpack.c.l.b16 %v4166
    %v4334 = vunpack.c.l.b16 %v4167
    %v4335 = vunpack.c.l.b16 %v4168
    %v4336 = vunpack.c.l.b16 %v4169
    %v4337 = vunpack.c.l.b16 %v4170
    %v4338 = vunpack.c.l.b16 %v4171
    %v4339 = vunpack.c.l.b16 %v4172
    %v4340 = vpack.c.b16 %v4261, %v4260
    %v4341 = vpack.c.b16 %v4263, %v4262
    %v4342 = vpack.c.b16 %v4265, %v4264
    %v4343 = vpack.c.b16 %v4267, %v4266
    %v4344 = vpack.c.b16 %v4269, %v4268
    %v4345 = vpack.c.b16 %v4271, %v4270
    %v4346 = vpack.c.b16 %v4273, %v4272
    %v4347 = vpack.c.b16 %v4275, %v4274
    %v4348 = vpack.c.b16 %v4277, %v4276
    %v4349 = vpack.c.b16 %v4279, %v4278
    %v4350 = vpack.c.b16 %v4281, %v4280
    %v4351 = vpack.c.b16 %v4283, %v4282
    %v4352 = vpack.c.b16 %v4285, %v4284
    %v4353 = vpack.c.b16 %v4287, %v4286
    %v4354 = vpack.c.b16 %v4289, %v4288
    %v4355 = vpack.c.b16 %v4291, %v4290
    %v4356 = vpack.c.b16 %v4293, %v4292
    %v4357 = vpack.c.b16 %v4295, %v4294
    %v4358 = vpack.c.b16 %v4297, %v4296
    %v4359 = vpack.c.b16 %v4299, %v4298
    %v4360 = vpack.c.b16 %v4301, %v4300
    %v4361 = vpack.c.b16 %v4303, %v4302
    %v4362 = vpack.c.b16 %v4305, %v4304
    %v4363 = vpack.c.b16 %v4307, %v4306
    %v4364 = vpack.c.b16 %v4309, %v4308
    %v4365 = vpack.c.b16 %v4311, %v4310
    %v4366 = vpack.c.b16 %v4313, %v4312
    %v4367 = vpack.c.b16 %v4315, %v4314
    %v4368 = vpack.c.b16 %v4317, %v4316
    %v4369 = vpack.c.b16 %v4319, %v4318
    %v4370 = vpack.c.b16 %v4321, %v4320
    %v4371 = vpack.c.b16 %v4323, %v4322
    %v4372 = vpack.c.b16 %v4325, %v4324
    %v4373 = vpack.c.b16 %v4327, %v4326
    %v4374 = vpack.c.b16 %v4329, %v4328
    %v4375 = vpack.c.b16 %v4331, %v4330
    %v4376 = vpack.c.b16 %v4333, %v4332
    %v4377 = vpack.c.b16 %v4335, %v4334
    %v4378 = vpack.c.b16 %v4337, %v4336
    %v4379 = vpack.c.b16 %v4339, %v4338
    %4420 = vmatprep.subr.bf16.mxu0 0
    %4421 = vmatpush1.bf16.msra.mxu0 %v4347
    %4422 = vmatprep.subr.bf16.mxu0 0
    %4423 = vmatpush1.bf16.msra.mxu0 %v4346
    %4424 = vmatprep.subr.bf16.mxu0 0
    %4425 = vmatpush1.bf16.msra.mxu0 %v4345
    %4426 = vmatprep.subr.bf16.mxu0 0
    %4427 = vmatpush1.bf16.msra.mxu0 %v4344
    %4428 = vmatprep.subr.bf16.mxu0 0
    %4429 = vmatpush1.bf16.msra.mxu0 %v4343
    %4430 = vmatprep.subr.bf16.mxu0 0
    %4431 = vmatpush1.bf16.msra.mxu0 %v4342
    %4432 = vmatprep.subr.bf16.mxu0 0
    %4433 = vmatpush1.bf16.msra.mxu0 %v4341
    %4434 = vmatprep.subr.bf16.mxu0 0
    %4435 = vmatpush1.bf16.msra.mxu0 %v4340
    %4436 = vmatprep.subr.bf16.mxu0 0
    %4437 = vmatpush2.bf16.msra.mxu0 %v4355
    %4438 = vmatprep.subr.bf16.mxu0 0
    %4439 = vmatpush2.bf16.msra.mxu0 %v4354
    %4440 = vmatprep.subr.bf16.mxu0 0
    %4441 = vmatpush2.bf16.msra.mxu0 %v4353
    %4442 = vmatprep.subr.bf16.mxu0 0
    %4443 = vmatpush2.bf16.msra.mxu0 %v4352
    %4444 = vmatprep.subr.bf16.mxu0 0
    %4445 = vmatpush2.bf16.msra.mxu0 %v4351
    %4446 = vmatprep.subr.bf16.mxu0 0
    %4447 = vmatpush2.bf16.msra.mxu0 %v4350
    %4448 = vmatprep.subr.bf16.mxu0 0
    %4449 = vmatpush2.bf16.msra.mxu0 %v4349
    %4450 = vmatprep.subr.bf16.mxu0 0
    %4451 = vmatpush2.bf16.msra.mxu0 %v4348
    %4452 = vmatprep.mubr.bf16.mxu0 %v4089
    %4453 = vmatmul.mubr.bf16.gmra.mxu0 %v4088
    %v4454 = vpop.f32.mrf.mxu0
    %v4455 = vadd.f32 %v4178, %v4454
    %v4456 = vpop.f32.mrf.mxu0
    %v4457 = vpop.f32.mrf.mxu0
    %v4458 = vpop.f32.mrf.mxu0
    %4459 = vdwg.mxu0
    %4460 = vmatprep.subr.bf16.mxu0 0
    %4461 = vmatpush1.bf16.msra.mxu0 %v4363
    %4462 = vmatprep.subr.bf16.mxu0 0
    %4463 = vmatpush1.bf16.msra.mxu0 %v4362
    %4464 = vmatprep.subr.bf16.mxu0 0
    %4465 = vmatpush1.bf16.msra.mxu0 %v4361
    %4466 = vmatprep.subr.bf16.mxu0 0
    %4467 = vmatpush1.bf16.msra.mxu0 %v4360
    %4468 = vmatprep.subr.bf16.mxu0 0
    %4469 = vmatpush1.bf16.msra.mxu0 %v4359
    %4470 = vmatprep.subr.bf16.mxu0 0
    %4471 = vmatpush1.bf16.msra.mxu0 %v4358
    %4472 = vmatprep.subr.bf16.mxu0 0
    %4473 = vmatpush1.bf16.msra.mxu0 %v4357
    %4474 = vmatprep.subr.bf16.mxu0 0
    %4475 = vmatpush1.bf16.msra.mxu0 %v4356
    %4476 = vmatprep.subr.bf16.mxu0 0
    %4477 = vmatpush2.bf16.msra.mxu0 %v4371
    %4478 = vmatprep.subr.bf16.mxu0 0
    %4479 = vmatpush2.bf16.msra.mxu0 %v4370
    %4480 = vmatprep.subr.bf16.mxu0 0
    %4481 = vmatpush2.bf16.msra.mxu0 %v4369
    %4482 = vmatprep.subr.bf16.mxu0 0
    %4483 = vmatpush2.bf16.msra.mxu0 %v4368
    %4484 = vmatprep.subr.bf16.mxu0 0
    %4485 = vmatpush2.bf16.msra.mxu0 %v4367
    %4486 = vmatprep.subr.bf16.mxu0 0
    %4487 = vmatpush2.bf16.msra.mxu0 %v4366
    %4488 = vmatprep.subr.bf16.mxu0 0
    %4489 = vmatpush2.bf16.msra.mxu0 %v4365
    %4490 = vmatprep.subr.bf16.mxu0 0
    %4491 = vmatpush2.bf16.msra.mxu0 %v4364
    %4492 = vmatprep.mubr.bf16.mxu0 %v4091
    %4493 = vmatmul.mubr.bf16.gmra.mxu0 %v4090
    %v4494 = vpop.f32.mrf.mxu0
    %v4495 = vadd.f32 %v4455, %v4494
    %v4496 = vpop.f32.mrf.mxu0
    %v4497 = vpop.f32.mrf.mxu0
    %v4498 = vpop.f32.mrf.mxu0
    %4499 = vdwg.mxu0
    %4500 = vmatprep.subr.bf16.mxu0 0
    %4501 = vmatpush1.bf16.msra.mxu0 %v4379
    %4502 = vmatprep.subr.bf16.mxu0 0
    %4503 = vmatpush1.bf16.msra.mxu0 %v4378
    %4504 = vmatprep.subr.bf16.mxu0 0
    %4505 = vmatpush1.bf16.msra.mxu0 %v4377
    %4506 = vmatprep.subr.bf16.mxu0 0
    %4507 = vmatpush1.bf16.msra.mxu0 %v4376
    %4508 = vmatprep.subr.bf16.mxu0 0
    %4509 = vmatpush1.bf16.msra.mxu0 %v4375
    %4510 = vmatprep.subr.bf16.mxu0 0
    %4511 = vmatpush1.bf16.msra.mxu0 %v4374
    %4512 = vmatprep.subr.bf16.mxu0 0
    %4513 = vmatpush1.bf16.msra.mxu0 %v4373
    %4514 = vmatprep.subr.bf16.mxu0 0
    %4515 = vmatpush1.bf16.msra.mxu0 %v4372
    %4516 = vmatprep.subr.bf16.mxu0 0
    %4517 = vmatpush2.bf16.msra.mxu0 0
    %4518 = vmatprep.subr.bf16.mxu0 0
    %4519 = vmatpush2.bf16.msra.mxu0 0
    %4520 = vmatprep.subr.bf16.mxu0 0
    %4521 = vmatpush2.bf16.msra.mxu0 0
    %4522 = vmatprep.subr.bf16.mxu0 0
    %4523 = vmatpush2.bf16.msra.mxu0 0
    %4524 = vmatprep.subr.bf16.mxu0 0
    %4525 = vmatpush2.bf16.msra.mxu0 0
    %4526 = vmatprep.subr.bf16.mxu0 0
    %4527 = vmatpush2.bf16.msra.mxu0 0
    %4528 = vmatprep.subr.bf16.mxu0 0
    %4529 = vmatpush2.bf16.msra.mxu0 0
    %4530 = vmatprep.subr.bf16.mxu0 0
    %4531 = vmatpush2.bf16.msra.mxu0 0
    %4532 = vmatprep.mubr.bf16.mxu0 0
    %4533 = vmatmul.mubr.bf16.gmra.mxu0 %v4092
    %v4534 = vpop.f32.mrf.mxu0
    %v4535 = vadd.f32 %v4495, %v4534
    %v4536 = vpop.f32.mrf.mxu0
    %v4537 = vpop.f32.mrf.mxu0
    %v4538 = vpop.f32.mrf.mxu0
    %4539 = vdwg.mxu0
    %v4540 = vpack.c.bf16 %v4535, %v4535
    %v4541 = vld [vmem:[#allocation11] sm:$0xf]
    %v4542 = vld [vmem:[#allocation11 + $0x4] sm:$0xf]
    %v4543 = vld [vmem:[#allocation11 + $0x8] sm:$0xf]
    %v4544 = vld [vmem:[#allocation11 + $0xc] sm:$0xf]
    %v4545 = vld [vmem:[#allocation11 + $0x10] sm:$0xf]
    %v4546 = vld [vmem:[#allocation11 + $0x14] sm:$0xf]
    %v4547 = vld [vmem:[#allocation11 + $0x18] sm:$0xf]
    %v4548 = vld [vmem:[#allocation11 + $0x1c] sm:$0xf]
    %v4549 = vld [vmem:[#allocation11 + $0x20] sm:$0xf]
    %v4550 = vld [vmem:[#allocation11 + $0x24] sm:$0xf]
    %v4551 = vld [vmem:[#allocation11 + $0x28] sm:$0xf]
    %v4552 = vld [vmem:[#allocation11 + $0x2c] sm:$0xf]
    %v4553 = vld [vmem:[#allocation11 + $0x30] sm:$0xf]
    %v4554 = vld [vmem:[#allocation11 + $0x34] sm:$0xf]
    %v4555 = vld [vmem:[#allocation11 + $0x38] sm:$0xf]
    %v4556 = vld [vmem:[#allocation11 + $0x3c] sm:$0xf]
    %v4557 = vld [vmem:[%s8] sm:$0x1]
    %v4559 = vlaneseq
    %v4560 = vshrl.u32 %v4559, 7
    %v4561 = vsub.s32 0, %v4560
    %v4562 = vrot.slane %v4557, %v4561
    %v4580 = vunpack.c.l.b16 %v4541
    %v4581 = vunpack.c.l.b16 %v4542
    %v4582 = vunpack.c.l.b16 %v4543
    %v4583 = vunpack.c.l.b16 %v4544
    %v4584 = vunpack.c.l.b16 %v4545
    %v4585 = vunpack.c.l.b16 %v4546
    %v4586 = vunpack.c.l.b16 %v4547
    %v4587 = vunpack.c.l.b16 %v4548
    %v4588 = vunpack.c.l.b16 %v4549
    %v4589 = vunpack.c.l.b16 %v4550
    %v4590 = vunpack.c.l.b16 %v4551
    %v4591 = vunpack.c.l.b16 %v4552
    %v4592 = vunpack.c.l.b16 %v4553
    %v4593 = vunpack.c.l.b16 %v4554
    %v4594 = vunpack.c.l.b16 %v4555
    %v4595 = vunpack.c.l.b16 %v4556
    %v4596 = vpack.c.b16 %v4581, %v4580
    %v4597 = vpack.c.b16 %v4583, %v4582
    %v4598 = vpack.c.b16 %v4585, %v4584
    %v4599 = vpack.c.b16 %v4587, %v4586
    %v4600 = vpack.c.b16 %v4589, %v4588
    %v4601 = vpack.c.b16 %v4591, %v4590
    %v4602 = vpack.c.b16 %v4593, %v4592
    %v4603 = vpack.c.b16 %v4595, %v4594
    %4612 = vmatprep.subr.bf16.mxu0 0
    %4613 = vmatpush1.bf16.msra.mxu0 %v4603
    %4614 = vmatprep.subr.bf16.mxu0 0
    %4615 = vmatpush1.bf16.msra.mxu0 %v4602
    %4616 = vmatprep.subr.bf16.mxu0 0
    %4617 = vmatpush1.bf16.msra.mxu0 %v4601
    %4618 = vmatprep.subr.bf16.mxu0 0
    %4619 = vmatpush1.bf16.msra.mxu0 %v4600
    %4620 = vmatprep.subr.bf16.mxu0 0
    %4621 = vmatpush1.bf16.msra.mxu0 %v4599
    %4622 = vmatprep.subr.bf16.mxu0 0
    %4623 = vmatpush1.bf16.msra.mxu0 %v4598
    %4624 = vmatprep.subr.bf16.mxu0 0
    %4625 = vmatpush1.bf16.msra.mxu0 %v4597
    %4626 = vmatprep.subr.bf16.mxu0 0
    %4627 = vmatpush1.bf16.msra.mxu0 %v4596
    %4628 = vmatprep.subr.bf16.mxu0 0
    %4629 = vmatpush2.bf16.msra.mxu0 0
    %4630 = vmatprep.subr.bf16.mxu0 0
    %4631 = vmatpush2.bf16.msra.mxu0 0
    %4632 = vmatprep.subr.bf16.mxu0 0
    %4633 = vmatpush2.bf16.msra.mxu0 0
    %4634 = vmatprep.subr.bf16.mxu0 0
    %4635 = vmatpush2.bf16.msra.mxu0 0
    %4636 = vmatprep.subr.bf16.mxu0 0
    %4637 = vmatpush2.bf16.msra.mxu0 0
    %4638 = vmatprep.subr.bf16.mxu0 0
    %4639 = vmatpush2.bf16.msra.mxu0 0
    %4640 = vmatprep.subr.bf16.mxu0 0
    %4641 = vmatpush2.bf16.msra.mxu0 0
    %4642 = vmatprep.subr.bf16.mxu0 0
    %4643 = vmatpush2.bf16.msra.mxu0 0
    %4644 = vmatprep.mubr.bf16.mxu0 0
    %4645 = vmatmul.mubr.bf16.gmra.mxu0 %v4540
    %v4646 = vpop.f32.mrf.mxu0
    %v4647 = vadd.f32 %v4562, %v4646
    %v4648 = vpop.f32.mrf.mxu0
    %v4649 = vpop.f32.mrf.mxu0
    %v4650 = vpop.f32.mrf.mxu0
    %4651 = vdwg.mxu0
    %4652 = vst [vmem:[#allocation12] sm:$0xff] %v4647
    // Predicated region
    $region58: #{tpu_custom_call.1} parent=1 // pred_check
      _
    $region59: #{tpu_custom_call.1} parent=1 // pred_check_branch
      %4654 = sbr.rel (0) target = $region61
    $region60: #{tpu_custom_call.1} parent=1 // pred_region
      %s4656 = ssub.s32 128, 128
      %4657 = vsyncadd [#allocation5], %s4656
      %s4659 = sshll.u32 [#allocation12], 4
      %s4660 = int_to_ptr.vmem [resolvable:$true] %s4659
      %4662 = dma.vmem_to_hbm [thread:$0]  %s4660, 128, %s9, [#allocation5]
    $region61: #{tpu_custom_call.1} parent=1 // pred_fallthru
      _
    // Predicated region
    $region62: #{tpu_custom_call.1} parent=1 // pred_check
      _
    $region63: #{tpu_custom_call.1} parent=1 // pred_check_branch
      %4664 = sbr.rel (0) target = $region65
    $region64: #{tpu_custom_call.1} parent=1 // pred_region
      %4665 = dma.done [#allocation5], 128
    $region65: #{tpu_custom_call.1} parent=1 // pred_fallthru
      _
    %4666 = vsyncpa [#allocation4], 1
    %4667 = vsyncpa [#allocation7], 1
    %4668 = vsyncpa [#allocation10], 1
    %4669 = vsyncpa [#allocation5], 1

</llo_original>
